<compile_context>
chip_gen: v6e
topology: v6e:2x2x1
jax: 0.10.0
libtpu: 0.0.40
codegen_flags: <defaults>
</compile_context>

<pallas_src>
import functools
import math

import jax
import jax.numpy as jnp
from jax import lax
from jax.experimental import pallas as pl
from jax.experimental.pallas import tpu as pltpu


def _pma_kernel(x_ref, q_ref, seed_ref,
                w0_ref, wkv_ref, wo_ref, w2_ref, vec_ref,
                o_ref, attn_in_ref,
                *, heads, head_dim, batch_tile, eps=1e-5):
    f32, bf16 = jnp.float32, jnp.bfloat16
    TB = batch_tile
    N = x_ref.shape[1]
    S = q_ref.shape[0]
    C = heads * head_dim

    vecs = vec_ref[...]                               # (9, C) f32, packed vectors
    b0 = vecs[0:1];  bk = vecs[1:2];  bv = vecs[2:3]
    bo = vecs[3:4];  b2 = vecs[4:5]
    g1 = vecs[5:6];  be1 = vecs[6:7]
    g2 = vecs[7:8];  be2 = vecs[8:9]

    # ---- shared projections on the flattened batch tile (MXU M = TB*N rows) ----
    x = x_ref[...].reshape(TB * N, C).astype(bf16)    # f32 in HBM, cast in-kernel
    xp = jnp.dot(x, w0_ref[...], preferred_element_type=f32) + b0
    xp = jnp.maximum(xp, 0.0).astype(bf16)            # relu(Linear(x))

    kv = jnp.dot(xp, wkv_ref[...], preferred_element_type=f32)   # (TB*N, 2C) = K|V
    k3 = (kv[:, :C] + bk).astype(bf16).reshape(TB, N, C)
    v3 = (kv[:, C:] + bv).astype(bf16).reshape(TB, N, C)

    q = q_ref[...]                                    # (S, C) bf16, pre-scaled

    # ---- multihead attention, batched over the whole tile per head ----------
    for h in range(heads):          # small static unroll; each head's result is
        lo = h * head_dim           # stored immediately (bounded live ranges)
        qh = jnp.broadcast_to(q[:, lo:lo + head_dim][None], (TB, S, head_dim))
        kh = k3[:, :, lo:lo + head_dim]               # (TB, N, Dh)
        vh = v3[:, :, lo:lo + head_dim]               # (TB, N, Dh)

        sc = jnp.einsum("bsd,bnd->bsn", qh, kh,
                        preferred_element_type=f32)   # (TB, S, N) f32
        sc = sc - jnp.max(sc, axis=-1, keepdims=True)
        p = jnp.exp(sc)
        p = p / jnp.sum(p, axis=-1, keepdims=True)    # exact (parity w/ PyTorch)
        ah = jnp.einsum("bsn,bnd->bsd", p.astype(bf16), vh,
                        preferred_element_type=f32)   # (TB, S, Dh)

        # scatter this head's output into the lane-dense attention buffer
        attn_in_ref[:, lo:lo + head_dim] = ah.reshape(TB * S, head_dim).astype(bf16)

    # ---- attention output projection: ONE K=C matmul against the full Wo ----
    attn = jnp.dot(attn_in_ref[...], wo_ref[...], preferred_element_type=f32) + bo

    # ---- batched epilogue over the whole tile: residual+LN1, FF, residual+LN2
    seed_b = jnp.broadcast_to(seed_ref[...][None], (TB, S, C)).reshape(TB * S, C)
    h1 = attn + seed_b                                            # (TB*S, C) f32
    d1 = h1 - jnp.mean(h1, axis=-1, keepdims=True)
    h1 = d1 * lax.rsqrt(jnp.mean(d1 * d1, axis=-1, keepdims=True) + eps) * g1 + be1

    ff = jnp.dot(h1.astype(bf16), w2_ref[...], preferred_element_type=f32) + b2
    h2 = h1 + jnp.maximum(ff, 0.0)
    d2 = h2 - jnp.mean(h2, axis=-1, keepdims=True)
    out = d2 * lax.rsqrt(jnp.mean(d2 * d2, axis=-1, keepdims=True) + eps) * g2 + be2

    o_ref[...] = out.reshape(TB, S, C).astype(o_ref.dtype)        # single store


def _pick_batch_tile(B, N, target_rows=256, max_rows=1024):
    """Largest-enough batch tile: fill MXU rows (TB*N) but keep grid >= 2."""
    divisors = [t for t in range(1, B + 1) if B % t == 0]
    cand = [t for t in divisors if B // t >= 2] or divisors    # grid>=2 (v7x megacore)
    sized = [t for t in cand if t * N <= max_rows] or [min(cand)]
    full = [t for t in sized if t * N >= target_rows]
    return min(full) if full else max(sized)


def _pick_vmem_limit():
    """~75% of physical VMEM: ~96 MiB on v5e/v6e, ~48 MiB on v7x (64 MiB phys)."""
    try:
        cap = getattr(pltpu.get_tpu_info(), "vmem_capacity_bytes", None)
        if cap:
            return int(min(cap * 3 // 4, 112 * 1024 * 1024))
    except Exception:
        pass
    return 48 * 1024 * 1024


def pma_forward(x, params, heads, batch_tile=None):
    """Pallas PMA forward. x: (B, N, C) float32. Returns (B, S, C) float32."""
    B, N, C = x.shape
    assert C % heads == 0 and C % 128 == 0, "keep channels lane-dense"
    Dh = C // heads
    seed = params["seed"].astype(jnp.float32)                    # (S, C)
    S = seed.shape[0]
    if batch_tile is None:
        batch_tile = _pick_batch_tile(B, N)
    assert B % batch_tile == 0
    bf16 = jnp.bfloat16

    # Batch-invariant query projection hoisted out of the kernel, 1/sqrt(Dh)
    # folded in, kept lane-dense as (S, C).
    q = ((seed @ params["wq"] + params["bq"]) * (1.0 / math.sqrt(Dh))).astype(bf16)

    # Fused K|V projection weight -> single lane-dense (C, 2C) matmul in-kernel.
    wkv = jnp.concatenate([params["wk"], params["wv"]], axis=1).astype(bf16)

    # All (1, C) bias / LayerNorm vectors packed into one (9, C) array.
    vecs = jnp.concatenate(
        [params["b0"], params["bk"], params["bv"], params["bo"], params["b2"],
         params["g1"], params["be1"], params["g2"], params["be2"]],
        axis=0).astype(jnp.float32)

    ordered = [q, seed,
               params["w0"].astype(bf16), wkv,
               params["wo"].astype(bf16), params["w2"].astype(bf16),
               vecs]

    def const_spec(a):
        nd = a.ndim
        # TODO(synk): pipeline_mode=pl.Buffered(1) would drop the constants'
        # second VMEM buffer; left at the default for portability.
        return pl.BlockSpec(a.shape, lambda b, _nd=nd: (0,) * _nd)

    kernel = functools.partial(_pma_kernel, heads=heads, head_dim=Dh,
                               batch_tile=batch_tile)

    return pl.pallas_call(
        kernel,
        out_shape=jax.ShapeDtypeStruct((B, S, C), x.dtype),
        grid_spec=pltpu.PrefetchScalarGridSpec(
            num_scalar_prefetch=0,
            grid=(B // batch_tile,),
            in_specs=[pl.BlockSpec((batch_tile, N, C), lambda b: (b, 0, 0))]
                     + [const_spec(a) for a in ordered],
            out_specs=pl.BlockSpec((batch_tile, S, C), lambda b: (b, 0, 0)),
            scratch_shapes=[pltpu.VMEM((batch_tile * S, C), bf16)],
        ),
        compiler_params=pltpu.CompilerParams(
            dimension_semantics=("parallel",),        # independent batch tiles
            vmem_limit_bytes=_pick_vmem_limit(),
        ),
    )(x, *ordered)


def init_params(key, C, S):
    """Deterministic xavier-style init mirroring the module __init__ shapes."""
    ks = jax.random.split(key, 16)

    def xavier(k, shape):
        fan_in, fan_out = shape[0], shape[-1]
        lim = math.sqrt(6.0 / (fan_in + fan_out))
        return jax.random.uniform(k, shape, jnp.float32, -lim, lim)

    def bias(k, n):
        lim = 1.0 / math.sqrt(C)
        return jax.random.uniform(k, (1, n), jnp.float32, -lim, lim)

    return dict(
        seed=xavier(ks[0], (S, C)),                      # PMA seed points
        w0=xavier(ks[1], (C, C)), b0=bias(ks[2], C),     # PMA lin
        wq=xavier(ks[3], (C, C)), bq=bias(ks[4], C),     # in_proj (query)
        wk=xavier(ks[5], (C, C)), bk=bias(ks[6], C),     # in_proj (key)
        wv=xavier(ks[7], (C, C)), bv=bias(ks[8], C),     # in_proj (value)
        wo=xavier(ks[9], (C, C)), bo=bias(ks[10], C),    # attn out_proj
        w2=xavier(ks[11], (C, C)), b2=bias(ks[12], C),   # MAB lin
        g1=jnp.ones((1, C), jnp.float32), be1=jnp.zeros((1, C), jnp.float32),
        g2=jnp.ones((1, C), jnp.float32), be2=jnp.zeros((1, C), jnp.float32),
    )


def pma_ref(x, params, heads):
    """Pure-JAX f32 reference of the same forward pass (for sanity check)."""
    B, N, C = x.shape
    Dh = C // heads
    seed = params["seed"]
    S = seed.shape[0]
    xp = jax.nn.relu(x @ params["w0"] + params["b0"])
    s = jnp.broadcast_to(seed[None], (B, S, C))
    q = s @ params["wq"] + params["bq"]
    k = xp @ params["wk"] + params["bk"]
    v = xp @ params["wv"] + params["bv"]
    qh = q.reshape(B, S, heads, Dh).transpose(0, 2, 1, 3)
    kh = k.reshape(B, N, heads, Dh).transpose(0, 2, 1, 3)
    vh = v.reshape(B, N, heads, Dh).transpose(0, 2, 1, 3)
    sc = jnp.einsum("bhsd,bhnd->bhsn", qh, kh) / math.sqrt(Dh)
    p = jax.nn.softmax(sc, axis=-1)
    attn = jnp.einsum("bhsn,bhnd->bhsd", p, vh).transpose(0, 2, 1, 3).reshape(B, S, C)
    attn = attn @ params["wo"] + params["bo"]

    def ln(z, g, b, eps=1e-5):
        mu = z.mean(-1, keepdims=True)
        var = ((z - mu) ** 2).mean(-1, keepdims=True)
        return (z - mu) / jnp.sqrt(var + eps) * g + b

    h1 = ln(attn + s, params["g1"], params["be1"])
    h2 = h1 + jax.nn.relu(h1 @ params["w2"] + params["b2"])
    return ln(h2, params["g2"], params["be2"])


if __name__ == "__main__":
    # Small, lane-aligned demo: 16 sets of 16 nodes, 128 channels, 8 seeds, 4 heads.
    # batch_tile auto-picks 8 -> flattened MXU rows TB*N = 128, grid length 2.
    B, N, C, S, H = 16, 16, 128, 8, 4
    key = jax.random.PRNGKey(0)
    kx, kp = jax.random.split(key)
    x = jax.random.normal(kx, (B, N, C), dtype=jnp.float32)
    params = init_params(kp, C, S)

    out = jax.block_until_ready(pma_forward(x, params, heads=H))
    ref = pma_ref(x, params, heads=H)

    assert out.shape == (B, S, C)
    assert bool(jnp.all(jnp.isfinite(out)))
    # bf16 MXU matmuls (f32 accumulation) vs pure-f32 reference -> relaxed tol.
    assert bool(jnp.allclose(out, ref, atol=5e-2, rtol=5e-2)), \
        float(jnp.max(jnp.abs(out - ref)))
    print("KERNEL_OK")
</pallas_src>

<mosaic_0001>
module attributes {stable_mosaic.version = 11 : i64} {
  func.func @_pma_kernel(%arg0: i32, %arg1: memref<8x16x128xf32, #tpu.memory_space<vmem>>, %arg2: memref<8x128xbf16, #tpu.memory_space<vmem>>, %arg3: memref<8x128xf32, #tpu.memory_space<vmem>>, %arg4: memref<128x128xbf16, #tpu.memory_space<vmem>>, %arg5: memref<128x256xbf16, #tpu.memory_space<vmem>>, %arg6: memref<128x128xbf16, #tpu.memory_space<vmem>>, %arg7: memref<128x128xbf16, #tpu.memory_space<vmem>>, %arg8: memref<9x128xf32, #tpu.memory_space<vmem>>, %arg9: memref<8x8x128xf32, #tpu.memory_space<vmem>>, %arg10: memref<64x128xbf16, #tpu.memory_space<vmem>>) attributes {dimension_semantics = [#tpu.dimension_semantics<parallel>], iteration_bounds = array<i64: 2>, scalar_prefetch = 0 : i64, scratch_operands = 1 : i64, tpu.core_type = #tpu.core_type<tc>, window_params = [{transform_indices = @transform_0, window_bounds = array<i64: 8, 16, 128>}, {pipeline_mode = #tpu.pipeline_mode<synchronous>, transform_indices = @transform_1, window_bounds = array<i64: 8, 128>}, {pipeline_mode = #tpu.pipeline_mode<synchronous>, transform_indices = @transform_2, window_bounds = array<i64: 8, 128>}, {pipeline_mode = #tpu.pipeline_mode<synchronous>, transform_indices = @transform_3, window_bounds = array<i64: 128, 128>}, {pipeline_mode = #tpu.pipeline_mode<synchronous>, transform_indices = @transform_4, window_bounds = array<i64: 128, 256>}, {pipeline_mode = #tpu.pipeline_mode<synchronous>, transform_indices = @transform_5, window_bounds = array<i64: 128, 128>}, {pipeline_mode = #tpu.pipeline_mode<synchronous>, transform_indices = @transform_6, window_bounds = array<i64: 128, 128>}, {pipeline_mode = #tpu.pipeline_mode<synchronous>, transform_indices = @transform_7, window_bounds = array<i64: 9, 128>}, {transform_indices = @transform_8, window_bounds = array<i64: 8, 8, 128>}]} {
    %c0 = arith.constant 0 : index
    %c0_0 = arith.constant 0 : index
    %0 = vector.load %arg8[%c0, %c0_0] : memref<9x128xf32, #tpu.memory_space<vmem>>, vector<9x128xf32>
    %1 = vector.extract_strided_slice %0 {offsets = [0, 0], sizes = [1, 128], strides = [1, 1]} : vector<9x128xf32> to vector<1x128xf32>
    %2 = vector.extract_strided_slice %0 {offsets = [1, 0], sizes = [1, 128], strides = [1, 1]} : vector<9x128xf32> to vector<1x128xf32>
    %3 = vector.extract_strided_slice %0 {offsets = [2, 0], sizes = [1, 128], strides = [1, 1]} : vector<9x128xf32> to vector<1x128xf32>
    %4 = vector.extract_strided_slice %0 {offsets = [3, 0], sizes = [1, 128], strides = [1, 1]} : vector<9x128xf32> to vector<1x128xf32>
    %5 = vector.extract_strided_slice %0 {offsets = [4, 0], sizes = [1, 128], strides = [1, 1]} : vector<9x128xf32> to vector<1x128xf32>
    %6 = vector.extract_strided_slice %0 {offsets = [5, 0], sizes = [1, 128], strides = [1, 1]} : vector<9x128xf32> to vector<1x128xf32>
    %7 = vector.extract_strided_slice %0 {offsets = [6, 0], sizes = [1, 128], strides = [1, 1]} : vector<9x128xf32> to vector<1x128xf32>
    %8 = vector.extract_strided_slice %0 {offsets = [7, 0], sizes = [1, 128], strides = [1, 1]} : vector<9x128xf32> to vector<1x128xf32>
    %9 = vector.extract_strided_slice %0 {offsets = [8, 0], sizes = [1, 128], strides = [1, 1]} : vector<9x128xf32> to vector<1x128xf32>
    %c0_1 = arith.constant 0 : index
    %c0_2 = arith.constant 0 : index
    %c0_3 = arith.constant 0 : index
    %10 = vector.load %arg1[%c0_1, %c0_2, %c0_3] : memref<8x16x128xf32, #tpu.memory_space<vmem>>, vector<8x16x128xf32>
    %11 = vector.shape_cast %10 : vector<8x16x128xf32> to vector<128x128xf32>
    %12 = arith.truncf %11 : vector<128x128xf32> to vector<128x128xbf16>
    %c0_4 = arith.constant 0 : index
    %c0_5 = arith.constant 0 : index
    %13 = vector.load %arg4[%c0_4, %c0_5] : memref<128x128xbf16, #tpu.memory_space<vmem>>, vector<128x128xbf16>
    %cst = arith.constant dense<0.000000e+00> : vector<128x128xf32>
    %14 = tpu.matmul %12, %13, %cst {dimension_numbers = #tpu.dot_dimension_numbers<[1], [0], [0], [1], [0, 0, 1, 1], [], []>} : vector<128x128xbf16>, vector<128x128xbf16>, vector<128x128xf32> -> vector<128x128xf32>
    %15 = vector.broadcast %1 : vector<1x128xf32> to vector<128x128xf32>
    %16 = arith.addf %14, %15 : vector<128x128xf32>
    %cst_6 = arith.constant 0.000000e+00 : f32
    %17 = vector.broadcast %cst_6 : f32 to vector<128x128xf32>
    %18 = arith.maximumf %16, %17 : vector<128x128xf32>
    %19 = arith.truncf %18 : vector<128x128xf32> to vector<128x128xbf16>
    %c0_7 = arith.constant 0 : index
    %c0_8 = arith.constant 0 : index
    %20 = vector.load %arg5[%c0_7, %c0_8] : memref<128x256xbf16, #tpu.memory_space<vmem>>, vector<128x256xbf16>
    %cst_9 = arith.constant dense<0.000000e+00> : vector<128x256xf32>
    %21 = tpu.matmul %19, %20, %cst_9 {dimension_numbers = #tpu.dot_dimension_numbers<[1], [0], [0], [1], [0, 0, 1, 1], [], []>} : vector<128x128xbf16>, vector<128x256xbf16>, vector<128x256xf32> -> vector<128x256xf32>
    %22 = vector.extract_strided_slice %21 {offsets = [0, 0], sizes = [128, 128], strides = [1, 1]} : vector<128x256xf32> to vector<128x128xf32>
    %23 = vector.broadcast %2 : vector<1x128xf32> to vector<128x128xf32>
    %24 = arith.addf %22, %23 : vector<128x128xf32>
    %25 = arith.truncf %24 : vector<128x128xf32> to vector<128x128xbf16>
    %26 = vector.shape_cast %25 : vector<128x128xbf16> to vector<8x16x128xbf16>
    %27 = vector.extract_strided_slice %21 {offsets = [0, 128], sizes = [128, 128], strides = [1, 1]} : vector<128x256xf32> to vector<128x128xf32>
    %28 = vector.broadcast %3 : vector<1x128xf32> to vector<128x128xf32>
    %29 = arith.addf %27, %28 : vector<128x128xf32>
    %30 = arith.truncf %29 : vector<128x128xf32> to vector<128x128xbf16>
    %31 = vector.shape_cast %30 : vector<128x128xbf16> to vector<8x16x128xbf16>
    %c0_10 = arith.constant 0 : index
    %c0_11 = arith.constant 0 : index
    %32 = vector.load %arg2[%c0_10, %c0_11] : memref<8x128xbf16, #tpu.memory_space<vmem>>, vector<8x128xbf16>
    %33 = vector.extract_strided_slice %32 {offsets = [0, 0], sizes = [8, 32], strides = [1, 1]} : vector<8x128xbf16> to vector<8x32xbf16>
    %34 = vector.shape_cast %33 : vector<8x32xbf16> to vector<1x8x32xbf16>
    %35 = vector.shape_cast %34 : vector<1x8x32xbf16> to vector<1x8x32xbf16>
    %36 = vector.broadcast %35 : vector<1x8x32xbf16> to vector<8x8x32xbf16>
    %37 = vector.extract_strided_slice %26 {offsets = [0, 0, 0], sizes = [8, 16, 32], strides = [1, 1, 1]} : vector<8x16x128xbf16> to vector<8x16x32xbf16>
    %38 = vector.extract_strided_slice %31 {offsets = [0, 0, 0], sizes = [8, 16, 32], strides = [1, 1, 1]} : vector<8x16x128xbf16> to vector<8x16x32xbf16>
    "tpu.trace_start"() <{level = 10 : i32, message = "bsd,bnd->bsn"}> : () -> ()
    %cst_12 = arith.constant dense<0.000000e+00> : vector<8x8x16xf32>
    %39 = tpu.matmul %36, %37, %cst_12 {dimension_numbers = #tpu.dot_dimension_numbers<[2], [2], [1], [1], [0, 0, 0, 1, 1, 1], [0], [0]>} : vector<8x8x32xbf16>, vector<8x16x32xbf16>, vector<8x8x16xf32> -> vector<8x8x16xf32>
    "tpu.trace_stop"() : () -> ()
    %cst_13 = arith.constant dense<0xFF800000> : vector<8x8xf32>
    %40 = vector.multi_reduction <maximumf>, %39, %cst_13 [2] : vector<8x8x16xf32> to vector<8x8xf32>
    %41 = vector.shape_cast %40 : vector<8x8xf32> to vector<8x8x1xf32>
    %42 = vector.broadcast %41 : vector<8x8x1xf32> to vector<8x8x16xf32>
    %43 = arith.subf %39, %42 : vector<8x8x16xf32>
    %44 = math.exp %43 : vector<8x8x16xf32>
    %cst_14 = arith.constant dense<0.000000e+00> : vector<8x8xf32>
    %45 = vector.multi_reduction <add>, %44, %cst_14 [2] : vector<8x8x16xf32> to vector<8x8xf32>
    %46 = vector.shape_cast %45 : vector<8x8xf32> to vector<8x8x1xf32>
    %47 = vector.broadcast %46 : vector<8x8x1xf32> to vector<8x8x16xf32>
    %48 = arith.divf %44, %47 : vector<8x8x16xf32>
    %49 = arith.truncf %48 : vector<8x8x16xf32> to vector<8x8x16xbf16>
    "tpu.trace_start"() <{level = 10 : i32, message = "bsn,bnd->bsd"}> : () -> ()
    %cst_15 = arith.constant dense<0.000000e+00> : vector<8x8x32xf32>
    %50 = tpu.matmul %49, %38, %cst_15 {dimension_numbers = #tpu.dot_dimension_numbers<[2], [1], [1], [2], [0, 0, 0, 1, 1, 2], [0], [0]>} : vector<8x8x16xbf16>, vector<8x16x32xbf16>, vector<8x8x32xf32> -> vector<8x8x32xf32>
    "tpu.trace_stop"() : () -> ()
    %51 = vector.shape_cast %50 : vector<8x8x32xf32> to vector<64x32xf32>
    %52 = arith.truncf %51 : vector<64x32xf32> to vector<64x32xbf16>
    %c0_16 = arith.constant 0 : index
    %c0_17 = arith.constant 0 : index
    %53 = vector.load %arg10[%c0_16, %c0_17] : memref<64x128xbf16, #tpu.memory_space<vmem>>, vector<64x32xbf16>
    tpu.vector_store %arg10[%c0_16, %c0_17], %52 {strides = array<i32>} : memref<64x128xbf16, #tpu.memory_space<vmem>>, vector<64x32xbf16>,
    %54 = vector.extract_strided_slice %32 {offsets = [0, 32], sizes = [8, 32], strides = [1, 1]} : vector<8x128xbf16> to vector<8x32xbf16>
    %55 = vector.shape_cast %54 : vector<8x32xbf16> to vector<1x8x32xbf16>
    %56 = vector.shape_cast %55 : vector<1x8x32xbf16> to vector<1x8x32xbf16>
    %57 = vector.broadcast %56 : vector<1x8x32xbf16> to vector<8x8x32xbf16>
    %58 = vector.extract_strided_slice %26 {offsets = [0, 0, 32], sizes = [8, 16, 32], strides = [1, 1, 1]} : vector<8x16x128xbf16> to vector<8x16x32xbf16>
    %59 = vector.extract_strided_slice %31 {offsets = [0, 0, 32], sizes = [8, 16, 32], strides = [1, 1, 1]} : vector<8x16x128xbf16> to vector<8x16x32xbf16>
    "tpu.trace_start"() <{level = 10 : i32, message = "bsd,bnd->bsn"}> : () -> ()
    %cst_18 = arith.constant dense<0.000000e+00> : vector<8x8x16xf32>
    %60 = tpu.matmul %57, %58, %cst_18 {dimension_numbers = #tpu.dot_dimension_numbers<[2], [2], [1], [1], [0, 0, 0, 1, 1, 1], [0], [0]>} : vector<8x8x32xbf16>, vector<8x16x32xbf16>, vector<8x8x16xf32> -> vector<8x8x16xf32>
    "tpu.trace_stop"() : () -> ()
    %cst_19 = arith.constant dense<0xFF800000> : vector<8x8xf32>
    %61 = vector.multi_reduction <maximumf>, %60, %cst_19 [2] : vector<8x8x16xf32> to vector<8x8xf32>
    %62 = vector.shape_cast %61 : vector<8x8xf32> to vector<8x8x1xf32>
    %63 = vector.broadcast %62 : vector<8x8x1xf32> to vector<8x8x16xf32>
    %64 = arith.subf %60, %63 : vector<8x8x16xf32>
    %65 = math.exp %64 : vector<8x8x16xf32>
    %cst_20 = arith.constant dense<0.000000e+00> : vector<8x8xf32>
    %66 = vector.multi_reduction <add>, %65, %cst_20 [2] : vector<8x8x16xf32> to vector<8x8xf32>
    %67 = vector.shape_cast %66 : vector<8x8xf32> to vector<8x8x1xf32>
    %68 = vector.broadcast %67 : vector<8x8x1xf32> to vector<8x8x16xf32>
    %69 = arith.divf %65, %68 : vector<8x8x16xf32>
    %70 = arith.truncf %69 : vector<8x8x16xf32> to vector<8x8x16xbf16>
    "tpu.trace_start"() <{level = 10 : i32, message = "bsn,bnd->bsd"}> : () -> ()
    %cst_21 = arith.constant dense<0.000000e+00> : vector<8x8x32xf32>
    %71 = tpu.matmul %70, %59, %cst_21 {dimension_numbers = #tpu.dot_dimension_numbers<[2], [1], [1], [2], [0, 0, 0, 1, 1, 2], [0], [0]>} : vector<8x8x16xbf16>, vector<8x16x32xbf16>, vector<8x8x32xf32> -> vector<8x8x32xf32>
    "tpu.trace_stop"() : () -> ()
    %72 = vector.shape_cast %71 : vector<8x8x32xf32> to vector<64x32xf32>
    %73 = arith.truncf %72 : vector<64x32xf32> to vector<64x32xbf16>
    %c0_22 = arith.constant 0 : index
    %c32 = arith.constant 32 : index
    %74 = vector.load %arg10[%c0_22, %c32] : memref<64x128xbf16, #tpu.memory_space<vmem>>, vector<64x32xbf16>
    tpu.vector_store %arg10[%c0_22, %c32], %73 {strides = array<i32>} : memref<64x128xbf16, #tpu.memory_space<vmem>>, vector<64x32xbf16>,
    %75 = vector.extract_strided_slice %32 {offsets = [0, 64], sizes = [8, 32], strides = [1, 1]} : vector<8x128xbf16> to vector<8x32xbf16>
    %76 = vector.shape_cast %75 : vector<8x32xbf16> to vector<1x8x32xbf16>
    %77 = vector.shape_cast %76 : vector<1x8x32xbf16> to vector<1x8x32xbf16>
    %78 = vector.broadcast %77 : vector<1x8x32xbf16> to vector<8x8x32xbf16>
    %79 = vector.extract_strided_slice %26 {offsets = [0, 0, 64], sizes = [8, 16, 32], strides = [1, 1, 1]} : vector<8x16x128xbf16> to vector<8x16x32xbf16>
    %80 = vector.extract_strided_slice %31 {offsets = [0, 0, 64], sizes = [8, 16, 32], strides = [1, 1, 1]} : vector<8x16x128xbf16> to vector<8x16x32xbf16>
    "tpu.trace_start"() <{level = 10 : i32, message = "bsd,bnd->bsn"}> : () -> ()
    %cst_23 = arith.constant dense<0.000000e+00> : vector<8x8x16xf32>
    %81 = tpu.matmul %78, %79, %cst_23 {dimension_numbers = #tpu.dot_dimension_numbers<[2], [2], [1], [1], [0, 0, 0, 1, 1, 1], [0], [0]>} : vector<8x8x32xbf16>, vector<8x16x32xbf16>, vector<8x8x16xf32> -> vector<8x8x16xf32>
    "tpu.trace_stop"() : () -> ()
    %cst_24 = arith.constant dense<0xFF800000> : vector<8x8xf32>
    %82 = vector.multi_reduction <maximumf>, %81, %cst_24 [2] : vector<8x8x16xf32> to vector<8x8xf32>
    %83 = vector.shape_cast %82 : vector<8x8xf32> to vector<8x8x1xf32>
    %84 = vector.broadcast %83 : vector<8x8x1xf32> to vector<8x8x16xf32>
    %85 = arith.subf %81, %84 : vector<8x8x16xf32>
    %86 = math.exp %85 : vector<8x8x16xf32>
    %cst_25 = arith.constant dense<0.000000e+00> : vector<8x8xf32>
    %87 = vector.multi_reduction <add>, %86, %cst_25 [2] : vector<8x8x16xf32> to vector<8x8xf32>
    %88 = vector.shape_cast %87 : vector<8x8xf32> to vector<8x8x1xf32>
    %89 = vector.broadcast %88 : vector<8x8x1xf32> to vector<8x8x16xf32>
    %90 = arith.divf %86, %89 : vector<8x8x16xf32>
    %91 = arith.truncf %90 : vector<8x8x16xf32> to vector<8x8x16xbf16>
    "tpu.trace_start"() <{level = 10 : i32, message = "bsn,bnd->bsd"}> : () -> ()
    %cst_26 = arith.constant dense<0.000000e+00> : vector<8x8x32xf32>
    %92 = tpu.matmul %91, %80, %cst_26 {dimension_numbers = #tpu.dot_dimension_numbers<[2], [1], [1], [2], [0, 0, 0, 1, 1, 2], [0], [0]>} : vector<8x8x16xbf16>, vector<8x16x32xbf16>, vector<8x8x32xf32> -> vector<8x8x32xf32>
    "tpu.trace_stop"() : () -> ()
    %93 = vector.shape_cast %92 : vector<8x8x32xf32> to vector<64x32xf32>
    %94 = arith.truncf %93 : vector<64x32xf32> to vector<64x32xbf16>
    %c0_27 = arith.constant 0 : index
    %c64 = arith.constant 64 : index
    %95 = vector.load %arg10[%c0_27, %c64] : memref<64x128xbf16, #tpu.memory_space<vmem>>, vector<64x32xbf16>
    tpu.vector_store %arg10[%c0_27, %c64], %94 {strides = array<i32>} : memref<64x128xbf16, #tpu.memory_space<vmem>>, vector<64x32xbf16>,
    %96 = vector.extract_strided_slice %32 {offsets = [0, 96], sizes = [8, 32], strides = [1, 1]} : vector<8x128xbf16> to vector<8x32xbf16>
    %97 = vector.shape_cast %96 : vector<8x32xbf16> to vector<1x8x32xbf16>
    %98 = vector.shape_cast %97 : vector<1x8x32xbf16> to vector<1x8x32xbf16>
    %99 = vector.broadcast %98 : vector<1x8x32xbf16> to vector<8x8x32xbf16>
    %100 = vector.extract_strided_slice %26 {offsets = [0, 0, 96], sizes = [8, 16, 32], strides = [1, 1, 1]} : vector<8x16x128xbf16> to vector<8x16x32xbf16>
    %101 = vector.extract_strided_slice %31 {offsets = [0, 0, 96], sizes = [8, 16, 32], strides = [1, 1, 1]} : vector<8x16x128xbf16> to vector<8x16x32xbf16>
    "tpu.trace_start"() <{level = 10 : i32, message = "bsd,bnd->bsn"}> : () -> ()
    %cst_28 = arith.constant dense<0.000000e+00> : vector<8x8x16xf32>
    %102 = tpu.matmul %99, %100, %cst_28 {dimension_numbers = #tpu.dot_dimension_numbers<[2], [2], [1], [1], [0, 0, 0, 1, 1, 1], [0], [0]>} : vector<8x8x32xbf16>, vector<8x16x32xbf16>, vector<8x8x16xf32> -> vector<8x8x16xf32>
    "tpu.trace_stop"() : () -> ()
    %cst_29 = arith.constant dense<0xFF800000> : vector<8x8xf32>
    %103 = vector.multi_reduction <maximumf>, %102, %cst_29 [2] : vector<8x8x16xf32> to vector<8x8xf32>
    %104 = vector.shape_cast %103 : vector<8x8xf32> to vector<8x8x1xf32>
    %105 = vector.broadcast %104 : vector<8x8x1xf32> to vector<8x8x16xf32>
    %106 = arith.subf %102, %105 : vector<8x8x16xf32>
    %107 = math.exp %106 : vector<8x8x16xf32>
    %cst_30 = arith.constant dense<0.000000e+00> : vector<8x8xf32>
    %108 = vector.multi_reduction <add>, %107, %cst_30 [2] : vector<8x8x16xf32> to vector<8x8xf32>
    %109 = vector.shape_cast %108 : vector<8x8xf32> to vector<8x8x1xf32>
    %110 = vector.broadcast %109 : vector<8x8x1xf32> to vector<8x8x16xf32>
    %111 = arith.divf %107, %110 : vector<8x8x16xf32>
    %112 = arith.truncf %111 : vector<8x8x16xf32> to vector<8x8x16xbf16>
    "tpu.trace_start"() <{level = 10 : i32, message = "bsn,bnd->bsd"}> : () -> ()
    %cst_31 = arith.constant dense<0.000000e+00> : vector<8x8x32xf32>
    %113 = tpu.matmul %112, %101, %cst_31 {dimension_numbers = #tpu.dot_dimension_numbers<[2], [1], [1], [2], [0, 0, 0, 1, 1, 2], [0], [0]>} : vector<8x8x16xbf16>, vector<8x16x32xbf16>, vector<8x8x32xf32> -> vector<8x8x32xf32>
    "tpu.trace_stop"() : () -> ()
    %114 = vector.shape_cast %113 : vector<8x8x32xf32> to vector<64x32xf32>
    %115 = arith.truncf %114 : vector<64x32xf32> to vector<64x32xbf16>
    %c0_32 = arith.constant 0 : index
    %c96 = arith.constant 96 : index
    %116 = vector.load %arg10[%c0_32, %c96] : memref<64x128xbf16, #tpu.memory_space<vmem>>, vector<64x32xbf16>
    tpu.vector_store %arg10[%c0_32, %c96], %115 {strides = array<i32>} : memref<64x128xbf16, #tpu.memory_space<vmem>>, vector<64x32xbf16>,
    %c0_33 = arith.constant 0 : index
    %c0_34 = arith.constant 0 : index
    %117 = vector.load %arg10[%c0_33, %c0_34] : memref<64x128xbf16, #tpu.memory_space<vmem>>, vector<64x128xbf16>
    %c0_35 = arith.constant 0 : index
    %c0_36 = arith.constant 0 : index
    %118 = vector.load %arg6[%c0_35, %c0_36] : memref<128x128xbf16, #tpu.memory_space<vmem>>, vector<128x128xbf16>
    %cst_37 = arith.constant dense<0.000000e+00> : vector<64x128xf32>
    %119 = tpu.matmul %117, %118, %cst_37 {dimension_numbers = #tpu.dot_dimension_numbers<[1], [0], [0], [1], [0, 0, 1, 1], [], []>} : vector<64x128xbf16>, vector<128x128xbf16>, vector<64x128xf32> -> vector<64x128xf32>
    %120 = vector.broadcast %4 : vector<1x128xf32> to vector<64x128xf32>
    %121 = arith.addf %119, %120 : vector<64x128xf32>
    %c0_38 = arith.constant 0 : index
    %c0_39 = arith.constant 0 : index
    %122 = vector.load %arg3[%c0_38, %c0_39] : memref<8x128xf32, #tpu.memory_space<vmem>>, vector<8x128xf32>
    %123 = vector.shape_cast %122 : vector<8x128xf32> to vector<1x8x128xf32>
    %124 = vector.shape_cast %123 : vector<1x8x128xf32> to vector<1x8x128xf32>
    %125 = vector.broadcast %124 : vector<1x8x128xf32> to vector<8x8x128xf32>
    %126 = vector.shape_cast %125 : vector<8x8x128xf32> to vector<64x128xf32>
    %127 = arith.addf %121, %126 : vector<64x128xf32>
    %cst_40 = arith.constant dense<0.000000e+00> : vector<64xf32>
    %128 = vector.multi_reduction <add>, %127, %cst_40 [1] : vector<64x128xf32> to vector<64xf32>
    %129 = vector.shape_cast %128 : vector<64xf32> to vector<64x1xf32>
    %cst_41 = arith.constant 1.280000e+02 : f32
    %130 = vector.broadcast %cst_41 : f32 to vector<64x1xf32>
    %131 = arith.divf %129, %130 : vector<64x1xf32>
    %132 = vector.broadcast %131 : vector<64x1xf32> to vector<64x128xf32>
    %133 = arith.subf %127, %132 : vector<64x128xf32>
    %134 = arith.mulf %133, %133 : vector<64x128xf32>
    %cst_42 = arith.constant dense<0.000000e+00> : vector<64xf32>
    %135 = vector.multi_reduction <add>, %134, %cst_42 [1] : vector<64x128xf32> to vector<64xf32>
    %136 = vector.shape_cast %135 : vector<64xf32> to vector<64x1xf32>
    %cst_43 = arith.constant 1.280000e+02 : f32
    %137 = vector.broadcast %cst_43 : f32 to vector<64x1xf32>
    %138 = arith.divf %136, %137 : vector<64x1xf32>
    %cst_44 = arith.constant 9.99999974E-6 : f32
    %139 = vector.broadcast %cst_44 : f32 to vector<64x1xf32>
    %140 = arith.addf %138, %139 : vector<64x1xf32>
    %141 = math.rsqrt %140 : vector<64x1xf32>
    %142 = vector.broadcast %141 : vector<64x1xf32> to vector<64x128xf32>
    %143 = arith.mulf %133, %142 : vector<64x128xf32>
    %144 = vector.broadcast %6 : vector<1x128xf32> to vector<64x128xf32>
    %145 = arith.mulf %143, %144 : vector<64x128xf32>
    %146 = vector.broadcast %7 : vector<1x128xf32> to vector<64x128xf32>
    %147 = arith.addf %145, %146 : vector<64x128xf32>
    %148 = arith.truncf %147 : vector<64x128xf32> to vector<64x128xbf16>
    %c0_45 = arith.constant 0 : index
    %c0_46 = arith.constant 0 : index
    %149 = vector.load %arg7[%c0_45, %c0_46] : memref<128x128xbf16, #tpu.memory_space<vmem>>, vector<128x128xbf16>
    %cst_47 = arith.constant dense<0.000000e+00> : vector<64x128xf32>
    %150 = tpu.matmul %148, %149, %cst_47 {dimension_numbers = #tpu.dot_dimension_numbers<[1], [0], [0], [1], [0, 0, 1, 1], [], []>} : vector<64x128xbf16>, vector<128x128xbf16>, vector<64x128xf32> -> vector<64x128xf32>
    %151 = vector.broadcast %5 : vector<1x128xf32> to vector<64x128xf32>
    %152 = arith.addf %150, %151 : vector<64x128xf32>
    %cst_48 = arith.constant 0.000000e+00 : f32
    %153 = vector.broadcast %cst_48 : f32 to vector<64x128xf32>
    %154 = arith.maximumf %152, %153 : vector<64x128xf32>
    %155 = arith.addf %147, %154 : vector<64x128xf32>
    %cst_49 = arith.constant dense<0.000000e+00> : vector<64xf32>
    %156 = vector.multi_reduction <add>, %155, %cst_49 [1] : vector<64x128xf32> to vector<64xf32>
    %157 = vector.shape_cast %156 : vector<64xf32> to vector<64x1xf32>
    %cst_50 = arith.constant 1.280000e+02 : f32
    %158 = vector.broadcast %cst_50 : f32 to vector<64x1xf32>
    %159 = arith.divf %157, %158 : vector<64x1xf32>
    %160 = vector.broadcast %159 : vector<64x1xf32> to vector<64x128xf32>
    %161 = arith.subf %155, %160 : vector<64x128xf32>
    %162 = arith.mulf %161, %161 : vector<64x128xf32>
    %cst_51 = arith.constant dense<0.000000e+00> : vector<64xf32>
    %163 = vector.multi_reduction <add>, %162, %cst_51 [1] : vector<64x128xf32> to vector<64xf32>
    %164 = vector.shape_cast %163 : vector<64xf32> to vector<64x1xf32>
    %cst_52 = arith.constant 1.280000e+02 : f32
    %165 = vector.broadcast %cst_52 : f32 to vector<64x1xf32>
    %166 = arith.divf %164, %165 : vector<64x1xf32>
    %cst_53 = arith.constant 9.99999974E-6 : f32
    %167 = vector.broadcast %cst_53 : f32 to vector<64x1xf32>
    %168 = arith.addf %166, %167 : vector<64x1xf32>
    %169 = math.rsqrt %168 : vector<64x1xf32>
    %170 = vector.broadcast %169 : vector<64x1xf32> to vector<64x128xf32>
    %171 = arith.mulf %161, %170 : vector<64x128xf32>
    %172 = vector.broadcast %8 : vector<1x128xf32> to vector<64x128xf32>
    %173 = arith.mulf %171, %172 : vector<64x128xf32>
    %174 = vector.broadcast %9 : vector<1x128xf32> to vector<64x128xf32>
    %175 = arith.addf %173, %174 : vector<64x128xf32>
    %176 = vector.shape_cast %175 : vector<64x128xf32> to vector<8x8x128xf32>
    %c0_54 = arith.constant 0 : index
    %c0_55 = arith.constant 0 : index
    %c0_56 = arith.constant 0 : index
    %177 = vector.load %arg9[%c0_54, %c0_55, %c0_56] : memref<8x8x128xf32, #tpu.memory_space<vmem>>, vector<8x8x128xf32>
    tpu.vector_store %arg9[%c0_54, %c0_55, %c0_56], %176 {strides = array<i32>} : memref<8x8x128xf32, #tpu.memory_space<vmem>>, vector<8x8x128xf32>,
    return
  }
  func.func @transform_0(%arg0: i32) -> (i32, i32, i32) {
    %c0_i32 = arith.constant 0 : i32
    %c0_i32_0 = arith.constant 0 : i32
    %c0_i32_1 = arith.constant 0 : i32
    return %arg0, %c0_i32, %c0_i32_0 : i32, i32, i32
  }
  func.func @transform_1(%arg0: i32) -> (i32, i32) {
    %c0_i32 = arith.constant 0 : i32
    %c0_i32_0 = arith.constant 0 : i32
    %c0_i32_1 = arith.constant 0 : i32
    return %c0_i32, %c0_i32_0 : i32, i32
  }
  func.func @transform_2(%arg0: i32) -> (i32, i32) {
    %c0_i32 = arith.constant 0 : i32
    %c0_i32_0 = arith.constant 0 : i32
    %c0_i32_1 = arith.constant 0 : i32
    return %c0_i32, %c0_i32_0 : i32, i32
  }
  func.func @transform_3(%arg0: i32) -> (i32, i32) {
    %c0_i32 = arith.constant 0 : i32
    %c0_i32_0 = arith.constant 0 : i32
    %c0_i32_1 = arith.constant 0 : i32
    return %c0_i32, %c0_i32_0 : i32, i32
  }
  func.func @transform_4(%arg0: i32) -> (i32, i32) {
    %c0_i32 = arith.constant 0 : i32
    %c0_i32_0 = arith.constant 0 : i32
    %c0_i32_1 = arith.constant 0 : i32
    return %c0_i32, %c0_i32_0 : i32, i32
  }
  func.func @transform_5(%arg0: i32) -> (i32, i32) {
    %c0_i32 = arith.constant 0 : i32
    %c0_i32_0 = arith.constant 0 : i32
    %c0_i32_1 = arith.constant 0 : i32
    return %c0_i32, %c0_i32_0 : i32, i32
  }
  func.func @transform_6(%arg0: i32) -> (i32, i32) {
    %c0_i32 = arith.constant 0 : i32
    %c0_i32_0 = arith.constant 0 : i32
    %c0_i32_1 = arith.constant 0 : i32
    return %c0_i32, %c0_i32_0 : i32, i32
  }
  func.func @transform_7(%arg0: i32) -> (i32, i32) {
    %c0_i32 = arith.constant 0 : i32
    %c0_i32_0 = arith.constant 0 : i32
    %c0_i32_1 = arith.constant 0 : i32
    return %c0_i32, %c0_i32_0 : i32, i32
  }
  func.func @transform_8(%arg0: i32) -> (i32, i32, i32) {
    %c0_i32 = arith.constant 0 : i32
    %c0_i32_0 = arith.constant 0 : i32
    %c0_i32_1 = arith.constant 0 : i32
    return %arg0, %c0_i32, %c0_i32_0 : i32, i32, i32
  }
}

</mosaic_0001>

<llo_original>
// kernel: tpu_custom_call.1
$region0: #{tpu_custom_call.1}
  #allocation0 [shape = 'u32[]', space=smem, size = 0x4, offset = 0x4, fixed_abs, tag = 'smem constant byte address 0x4 - core index']
  #allocation1 [shape = 'u32[144,128]{1,0:T(1,128)}', space=vmem, size = 0x12000, scoped, tag = 'internal scratch']
  #allocation2 [shape = 'bf16[64,128]{1,0:T(8,128)(2,1)}', space=vmem, size = 0x4000, scoped, tag = 'scratch operand']
  %s0 = inlined_call_operand.hbm [shape: f32[16,16,128], index: 0, kind: input, shape index: {}]
  %s1 = inlined_call_operand.hbm [shape: bf16[8,128], index: 1, kind: input, shape index: {}]
  %s2 = inlined_call_operand.hbm [shape: f32[8,128], index: 2, kind: input, shape index: {}]
  %s3 = inlined_call_operand.hbm [shape: bf16[128,128], index: 3, kind: input, shape index: {}]
  %s4 = inlined_call_operand.hbm [shape: bf16[128,256], index: 4, kind: input, shape index: {}]
  %s5 = inlined_call_operand.hbm [shape: bf16[128,128], index: 5, kind: input, shape index: {}]
  %s6 = inlined_call_operand.hbm [shape: bf16[128,128], index: 6, kind: input, shape index: {}]
  %s7 = inlined_call_operand.hbm [shape: f32[9,128], index: 7, kind: input, shape index: {}]
  %s8 = inlined_call_operand.hbm [shape: f32[16,8,128], index: 8, kind: output, shape index: {}]
  %s9 = sld [smem:[#allocation0]]
  $region97: #{tpu_custom_call.1} parent=0
    _
  %s11 = ssub.s32 1, %s9
  %s12 = scalar_select 0, %s11, %s9
  $region1: #{tpu_custom_call.1} parent=0
    #allocation3 [shape = 'u8[131072]{0}', space=vmem, size = 0x20000, scoped, tag = 'input window, operand 0']
    #allocation4 [shape = 's32[2]{0}', space=sflag, size = 0x8, scoped, tag = 'scoped memory for tpu_custom_call.1']
    #allocation5 [shape = 's32[2]{0}', space=sflag, size = 0x8, scoped, tag = 'scoped memory for tpu_custom_call.1']
    #allocation6 [shape = 'u8[2048]{0}', space=vmem, size = 0x800, scoped, tag = 'input window, operand 1, single buffered']
    #allocation7 [shape = 's32[1]{0}', space=sflag, size = 0x4, scoped, tag = 'scoped memory for tpu_custom_call.1']
    #allocation8 [shape = 'u8[4096]{0}', space=vmem, size = 0x1000, scoped, tag = 'input window, operand 2, single buffered']
    #allocation9 [shape = 'u8[32768]{0}', space=vmem, size = 0x8000, scoped, tag = 'input window, operand 3, single buffered']
    #allocation10 [shape = 's32[1]{0}', space=sflag, size = 0x4, scoped, tag = 'scoped memory for tpu_custom_call.1']
    #allocation11 [shape = 'u8[65536]{0}', space=vmem, size = 0x10000, scoped, tag = 'input window, operand 4, single buffered']
    #allocation12 [shape = 'u8[32768]{0}', space=vmem, size = 0x8000, scoped, tag = 'input window, operand 5, single buffered']
    #allocation13 [shape = 's32[1]{0}', space=sflag, size = 0x4, scoped, tag = 'scoped memory for tpu_custom_call.1']
    #allocation14 [shape = 'u8[32768]{0}', space=vmem, size = 0x8000, scoped, tag = 'input window, operand 6, single buffered']
    #allocation15 [shape = 'u8[8192]{0}', space=vmem, size = 0x2000, scoped, tag = 'input window, operand 7, single buffered']
    #allocation16 [shape = 's32[1]{0}', space=sflag, size = 0x4, scoped, tag = 'scoped memory for tpu_custom_call.1']
    #allocation17 [shape = 'u8[65536]{0}', space=vmem, size = 0x10000, scoped, tag = 'output window, operand 0']
    %13 = vsyncpa [#allocation4], 0
    %s14 = scalar_lea.sflag [#allocation4], 1
    %15 = vsyncpa %s14, 0
    %16 = vsyncpa [#allocation7], 0
    %17 = vsyncpa [#allocation10], 0
    %18 = vsyncpa [#allocation13], 0
    %19 = vsyncpa [#allocation16], 0
    %20 = vsyncpa [#allocation5], 0
    %s21 = scalar_lea.sflag [#allocation5], 1
    %22 = vsyncpa %s21, 0
    loop: start=0, step=1, limit=4
    $region2: #{tpu_custom_call.1} parent=1 // loop_pre_header
      _
    $region3: #{tpu_custom_call.1} parent=1 // loop_header
      %s24 = sphi 0, %s28
      %p25 = scmp.ge.s32.totalorder %s24, 4
      %s34 = sphi 0, %s36
      %s37 = sphi 0, %s34
      %s38 = sphi 0, %s37
      %s54 = sphi 0, %s38
      %s58 = sphi 0, %s58
      %s60 = sphi 0, %s58
      %s61 = sphi 0, %s60
      %s75 = sphi 0, %s61
      %s79 = sphi 0, %s79
      %s81 = sphi 0, %s79
      %s82 = sphi 0, %s81
      %s96 = sphi 0, %s82
      %s100 = sphi 0, %s100
      %s102 = sphi 0, %s100
      %s103 = sphi 0, %s102
      %s117 = sphi 0, %s103
      %s121 = sphi 0, %s121
      %s123 = sphi 0, %s121
      %s124 = sphi 0, %s123
      %s138 = sphi 0, %s124
      %s142 = sphi 0, %s142
      %s144 = sphi 0, %s142
      %s145 = sphi 0, %s144
      %s159 = sphi 0, %s145
      %s163 = sphi 0, %s163
      %s165 = sphi 0, %s163
      %s166 = sphi 0, %s165
      %s180 = sphi 0, %s166
      %s184 = sphi 0, %s184
      %s186 = sphi 0, %s184
      %s187 = sphi 0, %s186
      %s201 = sphi 0, %s187
      %s207 = sphi 0, %s209
      %s210 = sphi 0, %s207
      %s211 = sphi 0, %s210
      %s227 = sphi 0, %s211
    $region4: #{tpu_custom_call.1} parent=1 // loop_header_branch
      %27 = sbr.rel (%p25) target = $region8
    $region5: #{tpu_custom_call.1} parent=1 // loop_body
      %s29 = ssub.s32 %s24, 1
      %s30 = ssub.s32 %s24, 2
      %s31 = sadd.s32 %s24, 1
      %s32 = ssub.s32 %s24, %s31
      %p33 = scmp.eq.s32.totalorder %s32, 0
      %s35 = sadd.s32 %s34, 1
      %s36 = scalar_select %p33, %s34, %s35
      %p39 = pneg %p33
      %p40 = scmp.eq.s32.totalorder %s24, 1
      %p41 = por %p39, %p40
      %p42 = scmp.ne.s32.totalorder %s34, %s37
      %p43 = scmp.eq.s32.totalorder %s24, 0
      %p44 = por %p42, %p43
      %p45 = scmp.ne.s32.totalorder %s34, %s37
      %p46 = scmp.eq.s32.totalorder %s29, 1
      %p47 = por %p45, %p46
      %p48 = scmp.ne.s32.totalorder %s37, %s38
      %p49 = scmp.eq.s32.totalorder %s29, 0
      %p50 = por %p48, %p49
      %p51 = scmp.ne.s32.totalorder %s37, %s38
      %p52 = scmp.eq.s32.totalorder %s30, 1
      %p53 = por %p51, %p52
      %p55 = scmp.ne.s32.totalorder %s38, %s54
      %p56 = scmp.eq.s32.totalorder %s30, 0
      %p57 = por %p55, %p56
      %s59 = sadd.s32 %s58, 1
      %p62 = scmp.eq.s32.totalorder %s24, 1
      %p63 = scmp.ne.s32.totalorder %s58, %s60
      %p64 = scmp.eq.s32.totalorder %s24, 0
      %p65 = por %p63, %p64
      %p66 = scmp.ne.s32.totalorder %s58, %s60
      %p67 = scmp.eq.s32.totalorder %s29, 1
      %p68 = por %p66, %p67
      %p69 = scmp.ne.s32.totalorder %s60, %s61
      %p70 = scmp.eq.s32.totalorder %s29, 0
      %p71 = por %p69, %p70
      %p72 = scmp.ne.s32.totalorder %s60, %s61
      %p73 = scmp.eq.s32.totalorder %s30, 1
      %p74 = por %p72, %p73
      %p76 = scmp.ne.s32.totalorder %s61, %s75
      %p77 = scmp.eq.s32.totalorder %s30, 0
      %p78 = por %p76, %p77
      %s80 = sadd.s32 %s79, 1
      %p83 = scmp.eq.s32.totalorder %s24, 1
      %p84 = scmp.ne.s32.totalorder %s79, %s81
      %p85 = scmp.eq.s32.totalorder %s24, 0
      %p86 = por %p84, %p85
      %p87 = scmp.ne.s32.totalorder %s79, %s81
      %p88 = scmp.eq.s32.totalorder %s29, 1
      %p89 = por %p87, %p88
      %p90 = scmp.ne.s32.totalorder %s81, %s82
      %p91 = scmp.eq.s32.totalorder %s29, 0
      %p92 = por %p90, %p91
      %p93 = scmp.ne.s32.totalorder %s81, %s82
      %p94 = scmp.eq.s32.totalorder %s30, 1
      %p95 = por %p93, %p94
      %p97 = scmp.ne.s32.totalorder %s82, %s96
      %p98 = scmp.eq.s32.totalorder %s30, 0
      %p99 = por %p97, %p98
      %s101 = sadd.s32 %s100, 1
      %p104 = scmp.eq.s32.totalorder %s24, 1
      %p105 = scmp.ne.s32.totalorder %s100, %s102
      %p106 = scmp.eq.s32.totalorder %s24, 0
      %p107 = por %p105, %p106
      %p108 = scmp.ne.s32.totalorder %s100, %s102
      %p109 = scmp.eq.s32.totalorder %s29, 1
      %p110 = por %p108, %p109
      %p111 = scmp.ne.s32.totalorder %s102, %s103
      %p112 = scmp.eq.s32.totalorder %s29, 0
      %p113 = por %p111, %p112
      %p114 = scmp.ne.s32.totalorder %s102, %s103
      %p115 = scmp.eq.s32.totalorder %s30, 1
      %p116 = por %p114, %p115
      %p118 = scmp.ne.s32.totalorder %s103, %s117
      %p119 = scmp.eq.s32.totalorder %s30, 0
      %p120 = por %p118, %p119
      %s122 = sadd.s32 %s121, 1
      %p125 = scmp.eq.s32.totalorder %s24, 1
      %p126 = scmp.ne.s32.totalorder %s121, %s123
      %p127 = scmp.eq.s32.totalorder %s24, 0
      %p128 = por %p126, %p127
      %p129 = scmp.ne.s32.totalorder %s121, %s123
      %p130 = scmp.eq.s32.totalorder %s29, 1
      %p131 = por %p129, %p130
      %p132 = scmp.ne.s32.totalorder %s123, %s124
      %p133 = scmp.eq.s32.totalorder %s29, 0
      %p134 = por %p132, %p133
      %p135 = scmp.ne.s32.totalorder %s123, %s124
      %p136 = scmp.eq.s32.totalorder %s30, 1
      %p137 = por %p135, %p136
      %p139 = scmp.ne.s32.totalorder %s124, %s138
      %p140 = scmp.eq.s32.totalorder %s30, 0
      %p141 = por %p139, %p140
      %s143 = sadd.s32 %s142, 1
      %p146 = scmp.eq.s32.totalorder %s24, 1
      %p147 = scmp.ne.s32.totalorder %s142, %s144
      %p148 = scmp.eq.s32.totalorder %s24, 0
      %p149 = por %p147, %p148
      %p150 = scmp.ne.s32.totalorder %s142, %s144
      %p151 = scmp.eq.s32.totalorder %s29, 1
      %p152 = por %p150, %p151
      %p153 = scmp.ne.s32.totalorder %s144, %s145
      %p154 = scmp.eq.s32.totalorder %s29, 0
      %p155 = por %p153, %p154
      %p156 = scmp.ne.s32.totalorder %s144, %s145
      %p157 = scmp.eq.s32.totalorder %s30, 1
      %p158 = por %p156, %p157
      %p160 = scmp.ne.s32.totalorder %s145, %s159
      %p161 = scmp.eq.s32.totalorder %s30, 0
      %p162 = por %p160, %p161
      %s164 = sadd.s32 %s163, 1
      %p167 = scmp.eq.s32.totalorder %s24, 1
      %p168 = scmp.ne.s32.totalorder %s163, %s165
      %p169 = scmp.eq.s32.totalorder %s24, 0
      %p170 = por %p168, %p169
      %p171 = scmp.ne.s32.totalorder %s163, %s165
      %p172 = scmp.eq.s32.totalorder %s29, 1
      %p173 = por %p171, %p172
      %p174 = scmp.ne.s32.totalorder %s165, %s166
      %p175 = scmp.eq.s32.totalorder %s29, 0
      %p176 = por %p174, %p175
      %p177 = scmp.ne.s32.totalorder %s165, %s166
      %p178 = scmp.eq.s32.totalorder %s30, 1
      %p179 = por %p177, %p178
      %p181 = scmp.ne.s32.totalorder %s166, %s180
      %p182 = scmp.eq.s32.totalorder %s30, 0
      %p183 = por %p181, %p182
      %s185 = sadd.s32 %s184, 1
      %p188 = scmp.eq.s32.totalorder %s24, 1
      %p189 = scmp.ne.s32.totalorder %s184, %s186
      %p190 = scmp.eq.s32.totalorder %s24, 0
      %p191 = por %p189, %p190
      %p192 = scmp.ne.s32.totalorder %s184, %s186
      %p193 = scmp.eq.s32.totalorder %s29, 1
      %p194 = por %p192, %p193
      %p195 = scmp.ne.s32.totalorder %s186, %s187
      %p196 = scmp.eq.s32.totalorder %s29, 0
      %p197 = por %p195, %p196
      %p198 = scmp.ne.s32.totalorder %s186, %s187
      %p199 = scmp.eq.s32.totalorder %s30, 1
      %p200 = por %p198, %p199
      %p202 = scmp.ne.s32.totalorder %s187, %s201
      %p203 = scmp.eq.s32.totalorder %s30, 0
      %p204 = por %p202, %p203
      %s205 = ssub.s32 %s24, %s31
      %p206 = scmp.eq.s32.totalorder %s205, 0
      %s208 = sadd.s32 %s207, 1
      %s209 = scalar_select %p206, %s207, %s208
      %p212 = pneg %p206
      %p213 = scmp.eq.s32.totalorder %s24, 1
      %p214 = por %p212, %p213
      %p215 = scmp.ne.s32.totalorder %s207, %s210
      %p216 = scmp.eq.s32.totalorder %s24, 0
      %p217 = por %p215, %p216
      %p218 = scmp.ne.s32.totalorder %s207, %s210
      %p219 = scmp.eq.s32.totalorder %s29, 1
      %p220 = por %p218, %p219
      %p221 = scmp.ne.s32.totalorder %s210, %s211
      %p222 = scmp.eq.s32.totalorder %s29, 0
      %p223 = por %p221, %p222
      %p224 = scmp.ne.s32.totalorder %s210, %s211
      %p225 = scmp.eq.s32.totalorder %s30, 1
      %p226 = por %p224, %p225
      %p228 = scmp.ne.s32.totalorder %s211, %s227
      %p229 = scmp.eq.s32.totalorder %s30, 0
      %p230 = por %p228, %p229
      %p231 = scmp.le.s32.totalorder 1, %s24
      %p232 = scmp.lt.s32.totalorder %s24, 3
      %p233 = pnand %p231, %p232
      %p234 = pneg %p233
      // Predicated region
      $region9: #{tpu_custom_call.1} parent=5 // pred_check
        _
      $region10: #{tpu_custom_call.1} parent=5 // pred_check_branch
        %236 = sbr.rel (%p233) target = $region12
      $region11: #{tpu_custom_call.1} parent=5 // pred_region
        %s237 = ssub.s32 %s24, 1
        // Predicated region
        $region13: #{tpu_custom_call.1} parent=11 // pred_check
          %p238 = pneg %p71
        $region14: #{tpu_custom_call.1} parent=11 // pred_check_branch
          %240 = sbr.rel (%p238) target = $region16
        $region15: #{tpu_custom_call.1} parent=11 // pred_region
          %s242 = ssub.s32 64, 64
          %243 = vsyncadd [#allocation7], %s242
          %s245 = sshll.u32 [#allocation6], 4
          %s246 = int_to_ptr.vmem [resolvable:$true] %s245
          %248 = dma.hbm_to_vmem [thread:$0]  %s1, 64, %s246, [#allocation7]
        $region16: #{tpu_custom_call.1} parent=11 // pred_fallthru
          _
        // Predicated region
        $region17: #{tpu_custom_call.1} parent=11 // pred_check
          %p249 = pneg %p92
        $region18: #{tpu_custom_call.1} parent=11 // pred_check_branch
          %251 = sbr.rel (%p249) target = $region20
        $region19: #{tpu_custom_call.1} parent=11 // pred_region
          %s253 = ssub.s32 128, 128
          %254 = vsyncadd [#allocation7], %s253
          %s256 = sshll.u32 [#allocation8], 4
          %s257 = int_to_ptr.vmem [resolvable:$true] %s256
          %259 = dma.hbm_to_vmem [thread:$0]  %s2, 128, %s257, [#allocation7]
        $region20: #{tpu_custom_call.1} parent=11 // pred_fallthru
          _
        // Predicated region
        $region21: #{tpu_custom_call.1} parent=11 // pred_check
          %p260 = pneg %p113
        $region22: #{tpu_custom_call.1} parent=11 // pred_check_branch
          %262 = sbr.rel (%p260) target = $region24
        $region23: #{tpu_custom_call.1} parent=11 // pred_region
          %s264 = ssub.s32 1024, 1024
          %265 = vsyncadd [#allocation10], %s264
          %s266 = sshll.u32 [#allocation9], 4
          %s267 = int_to_ptr.vmem [resolvable:$true] %s266
          %272 = dma.hbm_to_vmem [thread:$0]  %s3, 1024, %s267, [#allocation10], 64, 64, 4
        $region24: #{tpu_custom_call.1} parent=11 // pred_fallthru
          _
        // Predicated region
        $region25: #{tpu_custom_call.1} parent=11 // pred_check
          %p273 = pneg %p134
        $region26: #{tpu_custom_call.1} parent=11 // pred_check_branch
          %275 = sbr.rel (%p273) target = $region28
        $region27: #{tpu_custom_call.1} parent=11 // pred_region
          %s277 = ssub.s32 2048, 2048
          %278 = vsyncadd [#allocation10], %s277
          %s279 = sshll.u32 [#allocation11], 4
          %s280 = int_to_ptr.vmem [resolvable:$true] %s279
          %285 = dma.hbm_to_vmem [thread:$0]  %s4, 2048, %s280, [#allocation10], 128, 128, 8
        $region28: #{tpu_custom_call.1} parent=11 // pred_fallthru
          _
        // Predicated region
        $region29: #{tpu_custom_call.1} parent=11 // pred_check
          %p286 = pneg %p155
        $region30: #{tpu_custom_call.1} parent=11 // pred_check_branch
          %288 = sbr.rel (%p286) target = $region32
        $region31: #{tpu_custom_call.1} parent=11 // pred_region
          %s290 = ssub.s32 1024, 1024
          %291 = vsyncadd [#allocation13], %s290
          %s292 = sshll.u32 [#allocation12], 4
          %s293 = int_to_ptr.vmem [resolvable:$true] %s292
          %298 = dma.hbm_to_vmem [thread:$0]  %s5, 1024, %s293, [#allocation13], 64, 64, 4
        $region32: #{tpu_custom_call.1} parent=11 // pred_fallthru
          _
        // Predicated region
        $region33: #{tpu_custom_call.1} parent=11 // pred_check
          %p299 = pneg %p176
        $region34: #{tpu_custom_call.1} parent=11 // pred_check_branch
          %301 = sbr.rel (%p299) target = $region36
        $region35: #{tpu_custom_call.1} parent=11 // pred_region
          %s303 = ssub.s32 1024, 1024
          %304 = vsyncadd [#allocation13], %s303
          %s305 = sshll.u32 [#allocation14], 4
          %s306 = int_to_ptr.vmem [resolvable:$true] %s305
          %311 = dma.hbm_to_vmem [thread:$0]  %s6, 1024, %s306, [#allocation13], 64, 64, 4
        $region36: #{tpu_custom_call.1} parent=11 // pred_fallthru
          _
        // Predicated region
        $region37: #{tpu_custom_call.1} parent=11 // pred_check
          %p312 = pneg %p197
        $region38: #{tpu_custom_call.1} parent=11 // pred_check_branch
          %314 = sbr.rel (%p312) target = $region40
        $region39: #{tpu_custom_call.1} parent=11 // pred_region
          %s316 = ssub.s32 256, 256
          %317 = vsyncadd [#allocation16], %s316
          %s318 = sshll.u32 [#allocation15], 4
          %s319 = int_to_ptr.vmem [resolvable:$true] %s318
          %324 = dma.hbm_to_vmem [thread:$0]  %s7, 256, %s319, [#allocation16], 128, 128, 8
        $region40: #{tpu_custom_call.1} parent=11 // pred_fallthru
          _
      $region12: #{tpu_custom_call.1} parent=5 // pred_fallthru
        _
      %p325 = scmp.lt.s32.totalorder %s24, 2
      // Predicated region
      $region41: #{tpu_custom_call.1} parent=5 // pred_check
        %p326 = pneg %p325
      $region42: #{tpu_custom_call.1} parent=5 // pred_check_branch
        %328 = sbr.rel (%p326) target = $region44
      $region43: #{tpu_custom_call.1} parent=5 // pred_region
        // Predicated region
        $region45: #{tpu_custom_call.1} parent=43 // pred_check
          %p329 = pneg %p44
        $region46: #{tpu_custom_call.1} parent=43 // pred_check_branch
          %331 = sbr.rel (%p329) target = $region48
        $region47: #{tpu_custom_call.1} parent=43 // pred_region
          %s332 = sand.u32 %s34, 1
          %s333 = scalar_lea.sflag [#allocation4], %s332
          %s334 = sand.u32 %s34, 1
          %s335 = smul.addr %s334, 128
          %s336 = scalar_lea.vmem [#allocation3], %s335
          %s337 = smul.u32 8, %s24
          %s339 = ssub.s32 2048, 2048
          %340 = vsyncadd %s333, %s339
          %s341 = smul.addr %s337, 2
          %s342 = smul.addr %s341, 128
          %s343 = scalar_lea.hbm %s0, %s342
          %s344 = sshll.u32 %s336, 4
          %s345 = int_to_ptr.vmem [resolvable:$true] %s344
          %350 = dma.hbm_to_vmem [thread:$0]  %s343, 2048, %s345, %s333, 128, 128, 8
        $region48: #{tpu_custom_call.1} parent=43 // pred_fallthru
          _
      $region44: #{tpu_custom_call.1} parent=5 // pred_fallthru
        _
      %p351 = scmp.le.s32.totalorder 1, %s24
      %p352 = scmp.lt.s32.totalorder %s24, 3
      %p353 = pnand %p351, %p352
      %p354 = pneg %p353
      // Predicated region
      $region49: #{tpu_custom_call.1} parent=5 // pred_check
        _
      $region50: #{tpu_custom_call.1} parent=5 // pred_check_branch
        %356 = sbr.rel (%p353) target = $region52
      $region51: #{tpu_custom_call.1} parent=5 // pred_region
        %s357 = ssub.s32 %s24, 1
        %s358 = sand.u32 %s37, 1
        %s359 = scalar_lea.sflag [#allocation4], %s358
        %s360 = sand.u32 %s37, 1
        %s361 = smul.addr %s360, 128
        %s362 = scalar_lea.vmem [#allocation3], %s361
        // Predicated region
        $region53: #{tpu_custom_call.1} parent=51 // pred_check
          %p363 = pneg %p50
        $region54: #{tpu_custom_call.1} parent=51 // pred_check_branch
          %365 = sbr.rel (%p363) target = $region56
        $region55: #{tpu_custom_call.1} parent=51 // pred_region
          %366 = dma.done %s359, 2048
        $region56: #{tpu_custom_call.1} parent=51 // pred_fallthru
          _
        // Predicated region
        $region57: #{tpu_custom_call.1} parent=51 // pred_check
          %p367 = pneg %p71
        $region58: #{tpu_custom_call.1} parent=51 // pred_check_branch
          %369 = sbr.rel (%p367) target = $region60
        $region59: #{tpu_custom_call.1} parent=51 // pred_region
          %370 = dma.done [#allocation7], 64
        $region60: #{tpu_custom_call.1} parent=51 // pred_fallthru
          _
        // Predicated region
        $region61: #{tpu_custom_call.1} parent=51 // pred_check
          %p371 = pneg %p92
        $region62: #{tpu_custom_call.1} parent=51 // pred_check_branch
          %373 = sbr.rel (%p371) target = $region64
        $region63: #{tpu_custom_call.1} parent=51 // pred_region
          %374 = dma.done [#allocation7], 128
        $region64: #{tpu_custom_call.1} parent=51 // pred_fallthru
          _
        // Predicated region
        $region65: #{tpu_custom_call.1} parent=51 // pred_check
          %p375 = pneg %p113
        $region66: #{tpu_custom_call.1} parent=51 // pred_check_branch
          %377 = sbr.rel (%p375) target = $region68
        $region67: #{tpu_custom_call.1} parent=51 // pred_region
          %378 = dma.done [#allocation10], 1024
        $region68: #{tpu_custom_call.1} parent=51 // pred_fallthru
          _
        // Predicated region
        $region69: #{tpu_custom_call.1} parent=51 // pred_check
          %p379 = pneg %p134
        $region70: #{tpu_custom_call.1} parent=51 // pred_check_branch
          %381 = sbr.rel (%p379) target = $region72
        $region71: #{tpu_custom_call.1} parent=51 // pred_region
          %382 = dma.done [#allocation10], 2048
        $region72: #{tpu_custom_call.1} parent=51 // pred_fallthru
          _
        // Predicated region
        $region73: #{tpu_custom_call.1} parent=51 // pred_check
          %p383 = pneg %p155
        $region74: #{tpu_custom_call.1} parent=51 // pred_check_branch
          %385 = sbr.rel (%p383) target = $region76
        $region75: #{tpu_custom_call.1} parent=51 // pred_region
          %386 = dma.done [#allocation13], 1024
        $region76: #{tpu_custom_call.1} parent=51 // pred_fallthru
          _
        // Predicated region
        $region77: #{tpu_custom_call.1} parent=51 // pred_check
          %p387 = pneg %p176
        $region78: #{tpu_custom_call.1} parent=51 // pred_check_branch
          %389 = sbr.rel (%p387) target = $region80
        $region79: #{tpu_custom_call.1} parent=51 // pred_region
          %390 = dma.done [#allocation13], 1024
        $region80: #{tpu_custom_call.1} parent=51 // pred_fallthru
          _
        // Predicated region
        $region81: #{tpu_custom_call.1} parent=51 // pred_check
          %p391 = pneg %p197
        $region82: #{tpu_custom_call.1} parent=51 // pred_check_branch
          %393 = sbr.rel (%p391) target = $region84
        $region83: #{tpu_custom_call.1} parent=51 // pred_region
          %394 = dma.done [#allocation16], 256
        $region84: #{tpu_custom_call.1} parent=51 // pred_fallthru
          _
        %s395 = sand.u32 %s37, 1
        %s396 = scalar_lea.sflag [#allocation4], %s395
        %s397 = sand.u32 %s37, 1
        %s398 = smul.addr %s397, 128
        %s399 = scalar_lea.vmem [#allocation3], %s398
        %p400 = pneg %p50
        %p401 = pneg %p47
        %p402 = pneg %p71
        %p403 = pneg %p68
        %p404 = pneg %p92
        %p405 = pneg %p89
        %p406 = pneg %p113
        %p407 = pneg %p110
        %p408 = pneg %p134
        %p409 = pneg %p131
        %p410 = pneg %p155
        %p411 = pneg %p152
        %p412 = pneg %p176
        %p413 = pneg %p173
        %p414 = pneg %p197
        %p415 = pneg %p194
        %p416 = pneg %p223
        %p417 = pneg %p220
        %s418 = sand.u32 %s210, 1
        %s419 = scalar_lea.sflag [#allocation5], %s418
        %s420 = sand.u32 %s210, 1
        %s421 = smul.addr %s420, 64
        %s422 = scalar_lea.vmem [#allocation17], %s421
        %s423 = smul.u32 8, %s29
        %s424 = smul.u32 8, %s29
        %v426 = vld [vmem:[#allocation15] sm:$0xff]
        %v427 = vld [vmem:[#allocation15 + $0x8] sm:$0x1]
        %v428 = vld [vmem:[%s362] sm:$0xff]
        %v429 = vld [vmem:[%s362 + $0x8] sm:$0xff]
        %v430 = vld [vmem:[%s362 + $0x10] sm:$0xff]
        %v431 = vld [vmem:[%s362 + $0x18] sm:$0xff]
        %v432 = vld [vmem:[%s362 + $0x20] sm:$0xff]
        %v433 = vld [vmem:[%s362 + $0x28] sm:$0xff]
        %v434 = vld [vmem:[%s362 + $0x30] sm:$0xff]
        %v435 = vld [vmem:[%s362 + $0x38] sm:$0xff]
        %v436 = vld [vmem:[%s362 + $0x40] sm:$0xff]
        %v437 = vld [vmem:[%s362 + $0x48] sm:$0xff]
        %v438 = vld [vmem:[%s362 + $0x50] sm:$0xff]
        %v439 = vld [vmem:[%s362 + $0x58] sm:$0xff]
        %v440 = vld [vmem:[%s362 + $0x60] sm:$0xff]
        %v441 = vld [vmem:[%s362 + $0x68] sm:$0xff]
        %v442 = vld [vmem:[%s362 + $0x70] sm:$0xff]
        %v443 = vld [vmem:[%s362 + $0x78] sm:$0xff]
        %v444 = vpack.c.bf16 %v429, %v428
        %v445 = vpack.c.bf16 %v431, %v430
        %v446 = vpack.c.bf16 %v433, %v432
        %v447 = vpack.c.bf16 %v435, %v434
        %v448 = vpack.c.bf16 %v437, %v436
        %v449 = vpack.c.bf16 %v439, %v438
        %v450 = vpack.c.bf16 %v441, %v440
        %v451 = vpack.c.bf16 %v443, %v442
        %v452 = vld [vmem:[#allocation9] sm:$0xf]
        %v453 = vld [vmem:[#allocation9 + $0x4] sm:$0xf]
        %v454 = vld [vmem:[#allocation9 + $0x8] sm:$0xf]
        %v455 = vld [vmem:[#allocation9 + $0xc] sm:$0xf]
        %v456 = vld [vmem:[#allocation9 + $0x10] sm:$0xf]
        %v457 = vld [vmem:[#allocation9 + $0x14] sm:$0xf]
        %v458 = vld [vmem:[#allocation9 + $0x18] sm:$0xf]
        %v459 = vld [vmem:[#allocation9 + $0x1c] sm:$0xf]
        %v460 = vld [vmem:[#allocation9 + $0x20] sm:$0xf]
        %v461 = vld [vmem:[#allocation9 + $0x24] sm:$0xf]
        %v462 = vld [vmem:[#allocation9 + $0x28] sm:$0xf]
        %v463 = vld [vmem:[#allocation9 + $0x2c] sm:$0xf]
        %v464 = vld [vmem:[#allocation9 + $0x30] sm:$0xf]
        %v465 = vld [vmem:[#allocation9 + $0x34] sm:$0xf]
        %v466 = vld [vmem:[#allocation9 + $0x38] sm:$0xf]
        %v467 = vld [vmem:[#allocation9 + $0x3c] sm:$0xf]
        %v468 = vlaneseq
        %v469 = vshrl.u32 %v468, 7
        %v470 = vsub.s32 0, %v469
        %v471 = vrot.slane %v426, %v470
        %v488 = vunpack.c.l.b16 %v452
        %v489 = vunpack.c.l.b16 %v453
        %v490 = vunpack.c.l.b16 %v454
        %v491 = vunpack.c.l.b16 %v455
        %v492 = vunpack.c.l.b16 %v456
        %v493 = vunpack.c.l.b16 %v457
        %v494 = vunpack.c.l.b16 %v458
        %v495 = vunpack.c.l.b16 %v459
        %v496 = vunpack.c.l.b16 %v460
        %v497 = vunpack.c.l.b16 %v461
        %v498 = vunpack.c.l.b16 %v462
        %v499 = vunpack.c.l.b16 %v463
        %v500 = vunpack.c.l.b16 %v464
        %v501 = vunpack.c.l.b16 %v465
        %v502 = vunpack.c.l.b16 %v466
        %v503 = vunpack.c.l.b16 %v467
        %v504 = vpack.c.b16 %v489, %v488
        %v505 = vpack.c.b16 %v491, %v490
        %v506 = vpack.c.b16 %v493, %v492
        %v507 = vpack.c.b16 %v495, %v494
        %v508 = vpack.c.b16 %v497, %v496
        %v509 = vpack.c.b16 %v499, %v498
        %v510 = vpack.c.b16 %v501, %v500
        %v511 = vpack.c.b16 %v503, %v502
        %520 = vmatprep.subr.bf16.mxu0 0
        %521 = vmatpush1.bf16.msra.mxu0 %v511
        %522 = vmatprep.subr.bf16.mxu0 0
        %523 = vmatpush1.bf16.msra.mxu0 %v510
        %524 = vmatprep.subr.bf16.mxu0 0
        %525 = vmatpush1.bf16.msra.mxu0 %v509
        %526 = vmatprep.subr.bf16.mxu0 0
        %527 = vmatpush1.bf16.msra.mxu0 %v508
        %528 = vmatprep.subr.bf16.mxu0 0
        %529 = vmatpush1.bf16.msra.mxu0 %v507
        %530 = vmatprep.subr.bf16.mxu0 0
        %531 = vmatpush1.bf16.msra.mxu0 %v506
        %532 = vmatprep.subr.bf16.mxu0 0
        %533 = vmatpush1.bf16.msra.mxu0 %v505
        %534 = vmatprep.subr.bf16.mxu0 0
        %535 = vmatpush1.bf16.msra.mxu0 %v504
        %536 = vmatprep.subr.bf16.mxu0 0
        %537 = vmatpush2.bf16.msra.mxu0 0
        %538 = vmatprep.subr.bf16.mxu0 0
        %539 = vmatpush2.bf16.msra.mxu0 0
        %540 = vmatprep.subr.bf16.mxu0 0
        %541 = vmatpush2.bf16.msra.mxu0 0
        %542 = vmatprep.subr.bf16.mxu0 0
        %543 = vmatpush2.bf16.msra.mxu0 0
        %544 = vmatprep.subr.bf16.mxu0 0
        %545 = vmatpush2.bf16.msra.mxu0 0
        %546 = vmatprep.subr.bf16.mxu0 0
        %547 = vmatpush2.bf16.msra.mxu0 0
        %548 = vmatprep.subr.bf16.mxu0 0
        %549 = vmatpush2.bf16.msra.mxu0 0
        %550 = vmatprep.subr.bf16.mxu0 0
        %551 = vmatpush2.bf16.msra.mxu0 0
        %552 = vmatprep.mubr.bf16.mxu0 0
        %553 = vmatmul.mubr.bf16.gmra.mxu0 %v444
        %v554 = vpop.f32.mrf.mxu0
        %v555 = vadd.f32 %v471, %v554
        %v556 = vpop.f32.mrf.mxu0
        %v557 = vpop.f32.mrf.mxu0
        %v558 = vadd.f32 %v471, %v557
        %v559 = vpop.f32.mrf.mxu0
        %560 = vmatprep.mubr.bf16.mxu0 0
        %561 = vmatmul.mubr.bf16.gmra.mxu0 %v445
        %v562 = vpop.f32.mrf.mxu0
        %v563 = vadd.f32 %v471, %v562
        %v564 = vpop.f32.mrf.mxu0
        %v565 = vpop.f32.mrf.mxu0
        %v566 = vadd.f32 %v471, %v565
        %v567 = vpop.f32.mrf.mxu0
        %568 = vmatprep.mubr.bf16.mxu0 0
        %569 = vmatmul.mubr.bf16.gmra.mxu0 %v446
        %v570 = vpop.f32.mrf.mxu0
        %v571 = vadd.f32 %v471, %v570
        %v572 = vpop.f32.mrf.mxu0
        %v573 = vpop.f32.mrf.mxu0
        %v574 = vadd.f32 %v471, %v573
        %v575 = vpop.f32.mrf.mxu0
        %576 = vmatprep.mubr.bf16.mxu0 0
        %577 = vmatmul.mubr.bf16.gmra.mxu0 %v447
        %v578 = vpop.f32.mrf.mxu0
        %v579 = vadd.f32 %v471, %v578
        %v580 = vpop.f32.mrf.mxu0
        %v581 = vpop.f32.mrf.mxu0
        %v582 = vadd.f32 %v471, %v581
        %v583 = vpop.f32.mrf.mxu0
        %584 = vmatprep.mubr.bf16.mxu0 0
        %585 = vmatmul.mubr.bf16.gmra.mxu0 %v448
        %v586 = vpop.f32.mrf.mxu0
        %v587 = vadd.f32 %v471, %v586
        %v588 = vpop.f32.mrf.mxu0
        %v589 = vpop.f32.mrf.mxu0
        %v590 = vadd.f32 %v471, %v589
        %v591 = vpop.f32.mrf.mxu0
        %592 = vmatprep.mubr.bf16.mxu0 0
        %593 = vmatmul.mubr.bf16.gmra.mxu0 %v449
        %v594 = vpop.f32.mrf.mxu0
        %v595 = vadd.f32 %v471, %v594
        %v596 = vpop.f32.mrf.mxu0
        %v597 = vpop.f32.mrf.mxu0
        %v598 = vadd.f32 %v471, %v597
        %v599 = vpop.f32.mrf.mxu0
        %600 = vmatprep.mubr.bf16.mxu0 0
        %601 = vmatmul.mubr.bf16.gmra.mxu0 %v450
        %v602 = vpop.f32.mrf.mxu0
        %v603 = vadd.f32 %v471, %v602
        %v604 = vpop.f32.mrf.mxu0
        %v605 = vpop.f32.mrf.mxu0
        %v606 = vadd.f32 %v471, %v605
        %v607 = vpop.f32.mrf.mxu0
        %608 = vmatprep.mubr.bf16.mxu0 0
        %609 = vmatmul.mubr.bf16.gmra.mxu0 %v451
        %v610 = vpop.f32.mrf.mxu0
        %v611 = vadd.f32 %v471, %v610
        %v612 = vpop.f32.mrf.mxu0
        %v613 = vpop.f32.mrf.mxu0
        %v614 = vadd.f32 %v471, %v613
        %v615 = vpop.f32.mrf.mxu0
        %616 = vdwg.mxu0
        %v617 = vmax.f32 %v555, 0.0
        %v618 = vmax.f32 %v558, 0.0
        %v619 = vmax.f32 %v563, 0.0
        %v620 = vmax.f32 %v566, 0.0
        %v621 = vmax.f32 %v571, 0.0
        %v622 = vmax.f32 %v574, 0.0
        %v623 = vmax.f32 %v579, 0.0
        %v624 = vmax.f32 %v582, 0.0
        %v625 = vmax.f32 %v587, 0.0
        %v626 = vmax.f32 %v590, 0.0
        %v627 = vmax.f32 %v595, 0.0
        %v628 = vmax.f32 %v598, 0.0
        %v629 = vmax.f32 %v603, 0.0
        %v630 = vmax.f32 %v606, 0.0
        %v631 = vmax.f32 %v611, 0.0
        %v632 = vmax.f32 %v614, 0.0
        %v633 = vpack.c.bf16 %v618, %v617
        %v634 = vpack.c.bf16 %v620, %v619
        %v635 = vpack.c.bf16 %v622, %v621
        %v636 = vpack.c.bf16 %v624, %v623
        %v637 = vpack.c.bf16 %v626, %v625
        %v638 = vpack.c.bf16 %v628, %v627
        %v639 = vpack.c.bf16 %v630, %v629
        %v640 = vpack.c.bf16 %v632, %v631
        %v641 = vld [vmem:[#allocation11] sm:$0xff]
        %v642 = vld [vmem:[#allocation11 + $0x8] sm:$0xff]
        %v643 = vld [vmem:[#allocation11 + $0x10] sm:$0xff]
        %v644 = vld [vmem:[#allocation11 + $0x18] sm:$0xff]
        %v645 = vld [vmem:[#allocation11 + $0x20] sm:$0xff]
        %v646 = vld [vmem:[#allocation11 + $0x28] sm:$0xff]
        %v647 = vld [vmem:[#allocation11 + $0x30] sm:$0xff]
        %v648 = vld [vmem:[#allocation11 + $0x38] sm:$0xff]
        %v649 = vld [vmem:[#allocation11 + $0x40] sm:$0xff]
        %v650 = vld [vmem:[#allocation11 + $0x48] sm:$0xff]
        %v651 = vld [vmem:[#allocation11 + $0x50] sm:$0xff]
        %v652 = vld [vmem:[#allocation11 + $0x58] sm:$0xff]
        %v653 = vld [vmem:[#allocation11 + $0x60] sm:$0xff]
        %v654 = vld [vmem:[#allocation11 + $0x68] sm:$0xff]
        %v655 = vld [vmem:[#allocation11 + $0x70] sm:$0xff]
        %v656 = vld [vmem:[#allocation11 + $0x78] sm:$0xff]
        %v673 = vunpack.c.l.b16 %v641
        %v674 = vunpack.c.h.b16 %v641
        %v675 = vunpack.c.l.b16 %v642
        %v676 = vunpack.c.h.b16 %v642
        %v677 = vunpack.c.l.b16 %v643
        %v678 = vunpack.c.h.b16 %v643
        %v679 = vunpack.c.l.b16 %v644
        %v680 = vunpack.c.h.b16 %v644
        %v681 = vunpack.c.l.b16 %v645
        %v682 = vunpack.c.h.b16 %v645
        %v683 = vunpack.c.l.b16 %v646
        %v684 = vunpack.c.h.b16 %v646
        %v685 = vunpack.c.l.b16 %v647
        %v686 = vunpack.c.h.b16 %v647
        %v687 = vunpack.c.l.b16 %v648
        %v688 = vunpack.c.h.b16 %v648
        %v689 = vunpack.c.l.b16 %v649
        %v690 = vunpack.c.h.b16 %v649
        %v691 = vunpack.c.l.b16 %v650
        %v692 = vunpack.c.h.b16 %v650
        %v693 = vunpack.c.l.b16 %v651
        %v694 = vunpack.c.h.b16 %v651
        %v695 = vunpack.c.l.b16 %v652
        %v696 = vunpack.c.h.b16 %v652
        %v697 = vunpack.c.l.b16 %v653
        %v698 = vunpack.c.h.b16 %v653
        %v699 = vunpack.c.l.b16 %v654
        %v700 = vunpack.c.h.b16 %v654
        %v701 = vunpack.c.l.b16 %v655
        %v702 = vunpack.c.h.b16 %v655
        %v703 = vunpack.c.l.b16 %v656
        %v704 = vunpack.c.h.b16 %v656
        %v705 = vpack.c.b16 %v675, %v673
        %v706 = vpack.c.b16 %v676, %v674
        %v707 = vpack.c.b16 %v679, %v677
        %v708 = vpack.c.b16 %v680, %v678
        %v709 = vpack.c.b16 %v683, %v681
        %v710 = vpack.c.b16 %v684, %v682
        %v711 = vpack.c.b16 %v687, %v685
        %v712 = vpack.c.b16 %v688, %v686
        %v713 = vpack.c.b16 %v691, %v689
        %v714 = vpack.c.b16 %v692, %v690
        %v715 = vpack.c.b16 %v695, %v693
        %v716 = vpack.c.b16 %v696, %v694
        %v717 = vpack.c.b16 %v699, %v697
        %v718 = vpack.c.b16 %v700, %v698
        %v719 = vpack.c.b16 %v703, %v701
        %v720 = vpack.c.b16 %v704, %v702
        %737 = vmatprep.subr.bf16.mxu0 %v720
        %738 = vmatpush1.bf16.msra.mxu0 %v719
        %739 = vmatprep.subr.bf16.mxu0 %v718
        %740 = vmatpush1.bf16.msra.mxu0 %v717
        %741 = vmatprep.subr.bf16.mxu0 %v716
        %742 = vmatpush1.bf16.msra.mxu0 %v715
        %743 = vmatprep.subr.bf16.mxu0 %v714
        %744 = vmatpush1.bf16.msra.mxu0 %v713
        %745 = vmatprep.subr.bf16.mxu0 %v712
        %746 = vmatpush1.bf16.msra.mxu0 %v711
        %747 = vmatprep.subr.bf16.mxu0 %v710
        %748 = vmatpush1.bf16.msra.mxu0 %v709
        %749 = vmatprep.subr.bf16.mxu0 %v708
        %750 = vmatpush1.bf16.msra.mxu0 %v707
        %751 = vmatprep.subr.bf16.mxu0 %v706
        %752 = vmatpush1.bf16.msra.mxu0 %v705
        %753 = vmatprep.subr.bf16.mxu0 0
        %754 = vmatpush2.bf16.msra.mxu0 0
        %755 = vmatprep.subr.bf16.mxu0 0
        %756 = vmatpush2.bf16.msra.mxu0 0
        %757 = vmatprep.subr.bf16.mxu0 0
        %758 = vmatpush2.bf16.msra.mxu0 0
        %759 = vmatprep.subr.bf16.mxu0 0
        %760 = vmatpush2.bf16.msra.mxu0 0
        %761 = vmatprep.subr.bf16.mxu0 0
        %762 = vmatpush2.bf16.msra.mxu0 0
        %763 = vmatprep.subr.bf16.mxu0 0
        %764 = vmatpush2.bf16.msra.mxu0 0
        %765 = vmatprep.subr.bf16.mxu0 0
        %766 = vmatpush2.bf16.msra.mxu0 0
        %767 = vmatprep.subr.bf16.mxu0 0
        %768 = vmatpush2.bf16.msra.mxu0 0
        %769 = vmatprep.mubr.bf16.mxu0 0
        %770 = vmatmul.mubr.bf16.gmra.mxu0 %v633
        %v771 = vpop.f32.mrf.mxu0
        %v772 = vadd.f32 0.0, %v771
        %v773 = vpop.f32.mrf.mxu0
        %v774 = vadd.f32 0.0, %v773
        %v775 = vpop.f32.mrf.mxu0
        %v776 = vadd.f32 0.0, %v775
        %v777 = vpop.f32.mrf.mxu0
        %v778 = vadd.f32 0.0, %v777
        %779 = vmatprep.mubr.bf16.mxu0 0
        %780 = vmatmul.mubr.bf16.gmra.mxu0 %v634
        %v781 = vpop.f32.mrf.mxu0
        %v782 = vadd.f32 0.0, %v781
        %v783 = vpop.f32.mrf.mxu0
        %v784 = vadd.f32 0.0, %v783
        %v785 = vpop.f32.mrf.mxu0
        %v786 = vadd.f32 0.0, %v785
        %v787 = vpop.f32.mrf.mxu0
        %v788 = vadd.f32 0.0, %v787
        %789 = vmatprep.mubr.bf16.mxu0 0
        %790 = vmatmul.mubr.bf16.gmra.mxu0 %v635
        %v791 = vpop.f32.mrf.mxu0
        %v792 = vadd.f32 0.0, %v791
        %v793 = vpop.f32.mrf.mxu0
        %v794 = vadd.f32 0.0, %v793
        %v795 = vpop.f32.mrf.mxu0
        %v796 = vadd.f32 0.0, %v795
        %v797 = vpop.f32.mrf.mxu0
        %v798 = vadd.f32 0.0, %v797
        %799 = vmatprep.mubr.bf16.mxu0 0
        %800 = vmatmul.mubr.bf16.gmra.mxu0 %v636
        %v801 = vpop.f32.mrf.mxu0
        %v802 = vadd.f32 0.0, %v801
        %v803 = vpop.f32.mrf.mxu0
        %v804 = vadd.f32 0.0, %v803
        %v805 = vpop.f32.mrf.mxu0
        %v806 = vadd.f32 0.0, %v805
        %v807 = vpop.f32.mrf.mxu0
        %v808 = vadd.f32 0.0, %v807
        %809 = vmatprep.mubr.bf16.mxu0 0
        %810 = vmatmul.mubr.bf16.gmra.mxu0 %v637
        %v811 = vpop.f32.mrf.mxu0
        %v812 = vadd.f32 0.0, %v811
        %v813 = vpop.f32.mrf.mxu0
        %v814 = vadd.f32 0.0, %v813
        %v815 = vpop.f32.mrf.mxu0
        %v816 = vadd.f32 0.0, %v815
        %v817 = vpop.f32.mrf.mxu0
        %v818 = vadd.f32 0.0, %v817
        %819 = vmatprep.mubr.bf16.mxu0 0
        %820 = vmatmul.mubr.bf16.gmra.mxu0 %v638
        %v821 = vpop.f32.mrf.mxu0
        %v822 = vadd.f32 0.0, %v821
        %v823 = vpop.f32.mrf.mxu0
        %v824 = vadd.f32 0.0, %v823
        %v825 = vpop.f32.mrf.mxu0
        %v826 = vadd.f32 0.0, %v825
        %v827 = vpop.f32.mrf.mxu0
        %v828 = vadd.f32 0.0, %v827
        %829 = vmatprep.mubr.bf16.mxu0 0
        %830 = vmatmul.mubr.bf16.gmra.mxu0 %v639
        %v831 = vpop.f32.mrf.mxu0
        %v832 = vadd.f32 0.0, %v831
        %v833 = vpop.f32.mrf.mxu0
        %v834 = vadd.f32 0.0, %v833
        %v835 = vpop.f32.mrf.mxu0
        %v836 = vadd.f32 0.0, %v835
        %v837 = vpop.f32.mrf.mxu0
        %v838 = vadd.f32 0.0, %v837
        %839 = vmatprep.mubr.bf16.mxu0 0
        %840 = vmatmul.mubr.bf16.gmra.mxu0 %v640
        %v841 = vpop.f32.mrf.mxu0
        %v842 = vadd.f32 0.0, %v841
        %v843 = vpop.f32.mrf.mxu0
        %v844 = vadd.f32 0.0, %v843
        %v845 = vpop.f32.mrf.mxu0
        %v846 = vadd.f32 0.0, %v845
        %v847 = vpop.f32.mrf.mxu0
        %v848 = vadd.f32 0.0, %v847
        %849 = vdwg.mxu0
        %v850 = vlaneseq
        %v851 = vshrl.u32 %v850, 7
        %v852 = vsub.s32 1, %v851
        %v853 = vrot.slane %v426, %v852
        %v854 = vadd.f32 %v772, %v853
        %v855 = vadd.f32 %v776, %v853
        %v856 = vadd.f32 %v782, %v853
        %v857 = vadd.f32 %v786, %v853
        %v858 = vadd.f32 %v792, %v853
        %v859 = vadd.f32 %v796, %v853
        %v860 = vadd.f32 %v802, %v853
        %v861 = vadd.f32 %v806, %v853
        %v862 = vadd.f32 %v812, %v853
        %v863 = vadd.f32 %v816, %v853
        %v864 = vadd.f32 %v822, %v853
        %v865 = vadd.f32 %v826, %v853
        %v866 = vadd.f32 %v832, %v853
        %v867 = vadd.f32 %v836, %v853
        %v868 = vadd.f32 %v842, %v853
        %v869 = vadd.f32 %v846, %v853
        %v870 = vpack.c.bf16 %v855, %v854
        %v871 = vpack.c.bf16 %v857, %v856
        %v872 = vpack.c.bf16 %v859, %v858
        %v873 = vpack.c.bf16 %v861, %v860
        %v874 = vpack.c.bf16 %v863, %v862
        %v875 = vpack.c.bf16 %v865, %v864
        %v876 = vpack.c.bf16 %v867, %v866
        %v877 = vpack.c.bf16 %v869, %v868
        %v878 = vlaneseq
        %v879 = vshrl.u32 %v878, 7
        %v880 = vsub.s32 2, %v879
        %v881 = vrot.slane %v426, %v880
        %v882 = vadd.f32 %v774, %v881
        %v883 = vadd.f32 %v778, %v881
        %v884 = vadd.f32 %v784, %v881
        %v885 = vadd.f32 %v788, %v881
        %v886 = vadd.f32 %v794, %v881
        %v887 = vadd.f32 %v798, %v881
        %v888 = vadd.f32 %v804, %v881
        %v889 = vadd.f32 %v808, %v881
        %v890 = vadd.f32 %v814, %v881
        %v891 = vadd.f32 %v818, %v881
        %v892 = vadd.f32 %v824, %v881
        %v893 = vadd.f32 %v828, %v881
        %v894 = vadd.f32 %v834, %v881
        %v895 = vadd.f32 %v838, %v881
        %v896 = vadd.f32 %v844, %v881
        %v897 = vadd.f32 %v848, %v881
        %v898 = vpack.c.bf16 %v883, %v882
        %v899 = vpack.c.bf16 %v885, %v884
        %v900 = vpack.c.bf16 %v887, %v886
        %v901 = vpack.c.bf16 %v889, %v888
        %v902 = vpack.c.bf16 %v891, %v890
        %v903 = vpack.c.bf16 %v893, %v892
        %v904 = vpack.c.bf16 %v895, %v894
        %v905 = vpack.c.bf16 %v897, %v896
        %v906 = vld [vmem:[#allocation6] sm:$0xf]
        %vm907 = vcmask 261120
        %v909 = vsel %vm907, %v906, 0
        %v912 = vsel %vm907, %v870, 0
        %914 = vmatprep.subr.bf16.mxu0 0
        %915 = vmatpush1.bf16.xpose.msra.mxu0 0
        %916 = vmatprep.subr.bf16.mxu0 0
        %917 = vmatpush1.bf16.xpose.msra.mxu0 0
        %918 = vmatprep.subr.bf16.mxu0 0
        %919 = vmatpush1.bf16.xpose.msra.mxu0 0
        %920 = vmatprep.subr.bf16.mxu0 0
        %921 = vmatpush1.bf16.xpose.msra.mxu0 0
        %922 = vmatprep.subr.bf16.mxu0 0
        %923 = vmatpush1.bf16.xpose.msra.mxu0 0
        %924 = vmatprep.subr.bf16.mxu0 0
        %925 = vmatpush1.bf16.xpose.msra.mxu0 0
        %926 = vmatprep.subr.bf16.mxu0 0
        %927 = vmatpush1.bf16.xpose.msra.mxu0 0
        %928 = vmatprep.subr.bf16.mxu0 0
        %929 = vmatpush1.bf16.xpose.msra.mxu0 %v912
        %930 = vmatprep.subr.bf16.mxu0 0
        %931 = vmatpush2.bf16.xpose.msra.mxu0 0
        %932 = vmatprep.subr.bf16.mxu0 0
        %933 = vmatpush2.bf16.xpose.msra.mxu0 0
        %934 = vmatprep.subr.bf16.mxu0 0
        %935 = vmatpush2.bf16.xpose.msra.mxu0 0
        %936 = vmatprep.subr.bf16.mxu0 0
        %937 = vmatpush2.bf16.xpose.msra.mxu0 0
        %938 = vmatprep.subr.bf16.mxu0 0
        %939 = vmatpush2.bf16.xpose.msra.mxu0 0
        %940 = vmatprep.subr.bf16.mxu0 0
        %941 = vmatpush2.bf16.xpose.msra.mxu0 0
        %942 = vmatprep.subr.bf16.mxu0 0
        %943 = vmatpush2.bf16.xpose.msra.mxu0 0
        %944 = vmatprep.subr.bf16.mxu0 0
        %945 = vmatpush2.bf16.xpose.msra.mxu0 0
        %946 = vmatprep.mubr.bf16.mxu0 0
        %947 = vmatmul.mubr.bf16.gmra.mxu0 %v909
        %v948 = vpop.f32.mrf.mxu0
        %v949 = vadd.f32 0.0, %v948
        %v950 = vpop.f32.mrf.mxu0
        %v951 = vpop.f32.mrf.mxu0
        %v952 = vpop.f32.mrf.mxu0
        %953 = vdwg.mxu0
        %v955 = vsel %vm907, %v871, 0
        %957 = vmatprep.subr.bf16.mxu0 0
        %958 = vmatpush1.bf16.xpose.msra.mxu0 0
        %959 = vmatprep.subr.bf16.mxu0 0
        %960 = vmatpush1.bf16.xpose.msra.mxu0 0
        %961 = vmatprep.subr.bf16.mxu0 0
        %962 = vmatpush1.bf16.xpose.msra.mxu0 0
        %963 = vmatprep.subr.bf16.mxu0 0
        %964 = vmatpush1.bf16.xpose.msra.mxu0 0
        %965 = vmatprep.subr.bf16.mxu0 0
        %966 = vmatpush1.bf16.xpose.msra.mxu0 0
        %967 = vmatprep.subr.bf16.mxu0 0
        %968 = vmatpush1.bf16.xpose.msra.mxu0 0
        %969 = vmatprep.subr.bf16.mxu0 0
        %970 = vmatpush1.bf16.xpose.msra.mxu0 0
        %971 = vmatprep.subr.bf16.mxu0 0
        %972 = vmatpush1.bf16.xpose.msra.mxu0 %v955
        %973 = vmatprep.subr.bf16.mxu0 0
        %974 = vmatpush2.bf16.xpose.msra.mxu0 0
        %975 = vmatprep.subr.bf16.mxu0 0
        %976 = vmatpush2.bf16.xpose.msra.mxu0 0
        %977 = vmatprep.subr.bf16.mxu0 0
        %978 = vmatpush2.bf16.xpose.msra.mxu0 0
        %979 = vmatprep.subr.bf16.mxu0 0
        %980 = vmatpush2.bf16.xpose.msra.mxu0 0
        %981 = vmatprep.subr.bf16.mxu0 0
        %982 = vmatpush2.bf16.xpose.msra.mxu0 0
        %983 = vmatprep.subr.bf16.mxu0 0
        %984 = vmatpush2.bf16.xpose.msra.mxu0 0
        %985 = vmatprep.subr.bf16.mxu0 0
        %986 = vmatpush2.bf16.xpose.msra.mxu0 0
        %987 = vmatprep.subr.bf16.mxu0 0
        %988 = vmatpush2.bf16.xpose.msra.mxu0 0
        %989 = vmatprep.mubr.bf16.mxu0 0
        %990 = vmatmul.mubr.bf16.gmra.mxu0 %v909
        %v991 = vpop.f32.mrf.mxu0
        %v992 = vadd.f32 0.0, %v991
        %v993 = vpop.f32.mrf.mxu0
        %v994 = vpop.f32.mrf.mxu0
        %v995 = vpop.f32.mrf.mxu0
        %996 = vdwg.mxu0
        %v998 = vsel %vm907, %v872, 0
        %1000 = vmatprep.subr.bf16.mxu0 0
        %1001 = vmatpush1.bf16.xpose.msra.mxu0 0
        %1002 = vmatprep.subr.bf16.mxu0 0
        %1003 = vmatpush1.bf16.xpose.msra.mxu0 0
        %1004 = vmatprep.subr.bf16.mxu0 0
        %1005 = vmatpush1.bf16.xpose.msra.mxu0 0
        %1006 = vmatprep.subr.bf16.mxu0 0
        %1007 = vmatpush1.bf16.xpose.msra.mxu0 0
        %1008 = vmatprep.subr.bf16.mxu0 0
        %1009 = vmatpush1.bf16.xpose.msra.mxu0 0
        %1010 = vmatprep.subr.bf16.mxu0 0
        %1011 = vmatpush1.bf16.xpose.msra.mxu0 0
        %1012 = vmatprep.subr.bf16.mxu0 0
        %1013 = vmatpush1.bf16.xpose.msra.mxu0 0
        %1014 = vmatprep.subr.bf16.mxu0 0
        %1015 = vmatpush1.bf16.xpose.msra.mxu0 %v998
        %1016 = vmatprep.subr.bf16.mxu0 0
        %1017 = vmatpush2.bf16.xpose.msra.mxu0 0
        %1018 = vmatprep.subr.bf16.mxu0 0
        %1019 = vmatpush2.bf16.xpose.msra.mxu0 0
        %1020 = vmatprep.subr.bf16.mxu0 0
        %1021 = vmatpush2.bf16.xpose.msra.mxu0 0
        %1022 = vmatprep.subr.bf16.mxu0 0
        %1023 = vmatpush2.bf16.xpose.msra.mxu0 0
        %1024 = vmatprep.subr.bf16.mxu0 0
        %1025 = vmatpush2.bf16.xpose.msra.mxu0 0
        %1026 = vmatprep.subr.bf16.mxu0 0
        %1027 = vmatpush2.bf16.xpose.msra.mxu0 0
        %1028 = vmatprep.subr.bf16.mxu0 0
        %1029 = vmatpush2.bf16.xpose.msra.mxu0 0
        %1030 = vmatprep.subr.bf16.mxu0 0
        %1031 = vmatpush2.bf16.xpose.msra.mxu0 0
        %1032 = vmatprep.mubr.bf16.mxu0 0
        %1033 = vmatmul.mubr.bf16.gmra.mxu0 %v909
        %v1034 = vpop.f32.mrf.mxu0
        %v1035 = vadd.f32 0.0, %v1034
        %v1036 = vpop.f32.mrf.mxu0
        %v1037 = vpop.f32.mrf.mxu0
        %v1038 = vpop.f32.mrf.mxu0
        %1039 = vdwg.mxu0
        %v1041 = vsel %vm907, %v873, 0
        %1043 = vmatprep.subr.bf16.mxu0 0
        %1044 = vmatpush1.bf16.xpose.msra.mxu0 0
        %1045 = vmatprep.subr.bf16.mxu0 0
        %1046 = vmatpush1.bf16.xpose.msra.mxu0 0
        %1047 = vmatprep.subr.bf16.mxu0 0
        %1048 = vmatpush1.bf16.xpose.msra.mxu0 0
        %1049 = vmatprep.subr.bf16.mxu0 0
        %1050 = vmatpush1.bf16.xpose.msra.mxu0 0
        %1051 = vmatprep.subr.bf16.mxu0 0
        %1052 = vmatpush1.bf16.xpose.msra.mxu0 0
        %1053 = vmatprep.subr.bf16.mxu0 0
        %1054 = vmatpush1.bf16.xpose.msra.mxu0 0
        %1055 = vmatprep.subr.bf16.mxu0 0
        %1056 = vmatpush1.bf16.xpose.msra.mxu0 0
        %1057 = vmatprep.subr.bf16.mxu0 0
        %1058 = vmatpush1.bf16.xpose.msra.mxu0 %v1041
        %1059 = vmatprep.subr.bf16.mxu0 0
        %1060 = vmatpush2.bf16.xpose.msra.mxu0 0
        %1061 = vmatprep.subr.bf16.mxu0 0
        %1062 = vmatpush2.bf16.xpose.msra.mxu0 0
        %1063 = vmatprep.subr.bf16.mxu0 0
        %1064 = vmatpush2.bf16.xpose.msra.mxu0 0
        %1065 = vmatprep.subr.bf16.mxu0 0
        %1066 = vmatpush2.bf16.xpose.msra.mxu0 0
        %1067 = vmatprep.subr.bf16.mxu0 0
        %1068 = vmatpush2.bf16.xpose.msra.mxu0 0
        %1069 = vmatprep.subr.bf16.mxu0 0
        %1070 = vmatpush2.bf16.xpose.msra.mxu0 0
        %1071 = vmatprep.subr.bf16.mxu0 0
        %1072 = vmatpush2.bf16.xpose.msra.mxu0 0
        %1073 = vmatprep.subr.bf16.mxu0 0
        %1074 = vmatpush2.bf16.xpose.msra.mxu0 0
        %1075 = vmatprep.mubr.bf16.mxu0 0
        %1076 = vmatmul.mubr.bf16.gmra.mxu0 %v909
        %v1077 = vpop.f32.mrf.mxu0
        %v1078 = vadd.f32 0.0, %v1077
        %v1079 = vpop.f32.mrf.mxu0
        %v1080 = vpop.f32.mrf.mxu0
        %v1081 = vpop.f32.mrf.mxu0
        %1082 = vdwg.mxu0
        %v1084 = vsel %vm907, %v874, 0
        %1086 = vmatprep.subr.bf16.mxu0 0
        %1087 = vmatpush1.bf16.xpose.msra.mxu0 0
        %1088 = vmatprep.subr.bf16.mxu0 0
        %1089 = vmatpush1.bf16.xpose.msra.mxu0 0
        %1090 = vmatprep.subr.bf16.mxu0 0
        %1091 = vmatpush1.bf16.xpose.msra.mxu0 0
        %1092 = vmatprep.subr.bf16.mxu0 0
        %1093 = vmatpush1.bf16.xpose.msra.mxu0 0
        %1094 = vmatprep.subr.bf16.mxu0 0
        %1095 = vmatpush1.bf16.xpose.msra.mxu0 0
        %1096 = vmatprep.subr.bf16.mxu0 0
        %1097 = vmatpush1.bf16.xpose.msra.mxu0 0
        %1098 = vmatprep.subr.bf16.mxu0 0
        %1099 = vmatpush1.bf16.xpose.msra.mxu0 0
        %1100 = vmatprep.subr.bf16.mxu0 0
        %1101 = vmatpush1.bf16.xpose.msra.mxu0 %v1084
        %1102 = vmatprep.subr.bf16.mxu0 0
        %1103 = vmatpush2.bf16.xpose.msra.mxu0 0
        %1104 = vmatprep.subr.bf16.mxu0 0
        %1105 = vmatpush2.bf16.xpose.msra.mxu0 0
        %1106 = vmatprep.subr.bf16.mxu0 0
        %1107 = vmatpush2.bf16.xpose.msra.mxu0 0
        %1108 = vmatprep.subr.bf16.mxu0 0
        %1109 = vmatpush2.bf16.xpose.msra.mxu0 0
        %1110 = vmatprep.subr.bf16.mxu0 0
        %1111 = vmatpush2.bf16.xpose.msra.mxu0 0
        %1112 = vmatprep.subr.bf16.mxu0 0
        %1113 = vmatpush2.bf16.xpose.msra.mxu0 0
        %1114 = vmatprep.subr.bf16.mxu0 0
        %1115 = vmatpush2.bf16.xpose.msra.mxu0 0
        %1116 = vmatprep.subr.bf16.mxu0 0
        %1117 = vmatpush2.bf16.xpose.msra.mxu0 0
        %1118 = vmatprep.mubr.bf16.mxu0 0
        %1119 = vmatmul.mubr.bf16.gmra.mxu0 %v909
        %v1120 = vpop.f32.mrf.mxu0
        %v1121 = vadd.f32 0.0, %v1120
        %v1122 = vpop.f32.mrf.mxu0
        %v1123 = vpop.f32.mrf.mxu0
        %v1124 = vpop.f32.mrf.mxu0
        %1125 = vdwg.mxu0
        %v1127 = vsel %vm907, %v875, 0
        %1129 = vmatprep.subr.bf16.mxu0 0
        %1130 = vmatpush1.bf16.xpose.msra.mxu0 0
        %1131 = vmatprep.subr.bf16.mxu0 0
        %1132 = vmatpush1.bf16.xpose.msra.mxu0 0
        %1133 = vmatprep.subr.bf16.mxu0 0
        %1134 = vmatpush1.bf16.xpose.msra.mxu0 0
        %1135 = vmatprep.subr.bf16.mxu0 0
        %1136 = vmatpush1.bf16.xpose.msra.mxu0 0
        %1137 = vmatprep.subr.bf16.mxu0 0
        %1138 = vmatpush1.bf16.xpose.msra.mxu0 0
        %1139 = vmatprep.subr.bf16.mxu0 0
        %1140 = vmatpush1.bf16.xpose.msra.mxu0 0
        %1141 = vmatprep.subr.bf16.mxu0 0
        %1142 = vmatpush1.bf16.xpose.msra.mxu0 0
        %1143 = vmatprep.subr.bf16.mxu0 0
        %1144 = vmatpush1.bf16.xpose.msra.mxu0 %v1127
        %1145 = vmatprep.subr.bf16.mxu0 0
        %1146 = vmatpush2.bf16.xpose.msra.mxu0 0
        %1147 = vmatprep.subr.bf16.mxu0 0
        %1148 = vmatpush2.bf16.xpose.msra.mxu0 0
        %1149 = vmatprep.subr.bf16.mxu0 0
        %1150 = vmatpush2.bf16.xpose.msra.mxu0 0
        %1151 = vmatprep.subr.bf16.mxu0 0
        %1152 = vmatpush2.bf16.xpose.msra.mxu0 0
        %1153 = vmatprep.subr.bf16.mxu0 0
        %1154 = vmatpush2.bf16.xpose.msra.mxu0 0
        %1155 = vmatprep.subr.bf16.mxu0 0
        %1156 = vmatpush2.bf16.xpose.msra.mxu0 0
        %1157 = vmatprep.subr.bf16.mxu0 0
        %1158 = vmatpush2.bf16.xpose.msra.mxu0 0
        %1159 = vmatprep.subr.bf16.mxu0 0
        %1160 = vmatpush2.bf16.xpose.msra.mxu0 0
        %1161 = vmatprep.mubr.bf16.mxu0 0
        %1162 = vmatmul.mubr.bf16.gmra.mxu0 %v909
        %v1163 = vpop.f32.mrf.mxu0
        %v1164 = vadd.f32 0.0, %v1163
        %v1165 = vpop.f32.mrf.mxu0
        %v1166 = vpop.f32.mrf.mxu0
        %v1167 = vpop.f32.mrf.mxu0
        %1168 = vdwg.mxu0
        %v1170 = vsel %vm907, %v876, 0
        %1172 = vmatprep.subr.bf16.mxu0 0
        %1173 = vmatpush1.bf16.xpose.msra.mxu0 0
        %1174 = vmatprep.subr.bf16.mxu0 0
        %1175 = vmatpush1.bf16.xpose.msra.mxu0 0
        %1176 = vmatprep.subr.bf16.mxu0 0
        %1177 = vmatpush1.bf16.xpose.msra.mxu0 0
        %1178 = vmatprep.subr.bf16.mxu0 0
        %1179 = vmatpush1.bf16.xpose.msra.mxu0 0
        %1180 = vmatprep.subr.bf16.mxu0 0
        %1181 = vmatpush1.bf16.xpose.msra.mxu0 0
        %1182 = vmatprep.subr.bf16.mxu0 0
        %1183 = vmatpush1.bf16.xpose.msra.mxu0 0
        %1184 = vmatprep.subr.bf16.mxu0 0
        %1185 = vmatpush1.bf16.xpose.msra.mxu0 0
        %1186 = vmatprep.subr.bf16.mxu0 0
        %1187 = vmatpush1.bf16.xpose.msra.mxu0 %v1170
        %1188 = vmatprep.subr.bf16.mxu0 0
        %1189 = vmatpush2.bf16.xpose.msra.mxu0 0
        %1190 = vmatprep.subr.bf16.mxu0 0
        %1191 = vmatpush2.bf16.xpose.msra.mxu0 0
        %1192 = vmatprep.subr.bf16.mxu0 0
        %1193 = vmatpush2.bf16.xpose.msra.mxu0 0
        %1194 = vmatprep.subr.bf16.mxu0 0
        %1195 = vmatpush2.bf16.xpose.msra.mxu0 0
        %1196 = vmatprep.subr.bf16.mxu0 0
        %1197 = vmatpush2.bf16.xpose.msra.mxu0 0
        %1198 = vmatprep.subr.bf16.mxu0 0
        %1199 = vmatpush2.bf16.xpose.msra.mxu0 0
        %1200 = vmatprep.subr.bf16.mxu0 0
        %1201 = vmatpush2.bf16.xpose.msra.mxu0 0
        %1202 = vmatprep.subr.bf16.mxu0 0
        %1203 = vmatpush2.bf16.xpose.msra.mxu0 0
        %1204 = vmatprep.mubr.bf16.mxu0 0
        %1205 = vmatmul.mubr.bf16.gmra.mxu0 %v909
        %v1206 = vpop.f32.mrf.mxu0
        %v1207 = vadd.f32 0.0, %v1206
        %v1208 = vpop.f32.mrf.mxu0
        %v1209 = vpop.f32.mrf.mxu0
        %v1210 = vpop.f32.mrf.mxu0
        %1211 = vdwg.mxu0
        %v1213 = vsel %vm907, %v877, 0
        %1215 = vmatprep.subr.bf16.mxu0 0
        %1216 = vmatpush1.bf16.xpose.msra.mxu0 0
        %1217 = vmatprep.subr.bf16.mxu0 0
        %1218 = vmatpush1.bf16.xpose.msra.mxu0 0
        %1219 = vmatprep.subr.bf16.mxu0 0
        %1220 = vmatpush1.bf16.xpose.msra.mxu0 0
        %1221 = vmatprep.subr.bf16.mxu0 0
        %1222 = vmatpush1.bf16.xpose.msra.mxu0 0
        %1223 = vmatprep.subr.bf16.mxu0 0
        %1224 = vmatpush1.bf16.xpose.msra.mxu0 0
        %1225 = vmatprep.subr.bf16.mxu0 0
        %1226 = vmatpush1.bf16.xpose.msra.mxu0 0
        %1227 = vmatprep.subr.bf16.mxu0 0
        %1228 = vmatpush1.bf16.xpose.msra.mxu0 0
        %1229 = vmatprep.subr.bf16.mxu0 0
        %1230 = vmatpush1.bf16.xpose.msra.mxu0 %v1213
        %1231 = vmatprep.subr.bf16.mxu0 0
        %1232 = vmatpush2.bf16.xpose.msra.mxu0 0
        %1233 = vmatprep.subr.bf16.mxu0 0
        %1234 = vmatpush2.bf16.xpose.msra.mxu0 0
        %1235 = vmatprep.subr.bf16.mxu0 0
        %1236 = vmatpush2.bf16.xpose.msra.mxu0 0
        %1237 = vmatprep.subr.bf16.mxu0 0
        %1238 = vmatpush2.bf16.xpose.msra.mxu0 0
        %1239 = vmatprep.subr.bf16.mxu0 0
        %1240 = vmatpush2.bf16.xpose.msra.mxu0 0
        %1241 = vmatprep.subr.bf16.mxu0 0
        %1242 = vmatpush2.bf16.xpose.msra.mxu0 0
        %1243 = vmatprep.subr.bf16.mxu0 0
        %1244 = vmatpush2.bf16.xpose.msra.mxu0 0
        %1245 = vmatprep.subr.bf16.mxu0 0
        %1246 = vmatpush2.bf16.xpose.msra.mxu0 0
        %1247 = vmatprep.mubr.bf16.mxu0 0
        %1248 = vmatmul.mubr.bf16.gmra.mxu0 %v909
        %v1249 = vpop.f32.mrf.mxu0
        %v1250 = vadd.f32 0.0, %v1249
        %v1251 = vpop.f32.mrf.mxu0
        %v1252 = vpop.f32.mrf.mxu0
        %v1253 = vpop.f32.mrf.mxu0
        %1254 = vdwg.mxu0
        %vm1255 = vcmask 130048
        %v1256 = vsel %vm1255, %v949, -inf
        %1257 = vmax.xlane.f32.xlu0 %v1256
        %v1258 = vpop.xlane.xlu0 %1257
        %v1259 = vsel %vm1255, %v992, -inf
        %1260 = vmax.xlane.f32.xlu0 %v1259
        %v1261 = vpop.xlane.xlu0 %1260
        %v1262 = vsel %vm1255, %v1035, -inf
        %1263 = vmax.xlane.f32.xlu0 %v1262
        %v1264 = vpop.xlane.xlu0 %1263
        %v1265 = vsel %vm1255, %v1078, -inf
        %1266 = vmax.xlane.f32.xlu0 %v1265
        %v1267 = vpop.xlane.xlu0 %1266
        %v1268 = vsel %vm1255, %v1121, -inf
        %1269 = vmax.xlane.f32.xlu0 %v1268
        %v1270 = vpop.xlane.xlu0 %1269
        %v1271 = vsel %vm1255, %v1164, -inf
        %1272 = vmax.xlane.f32.xlu0 %v1271
        %v1273 = vpop.xlane.xlu0 %1272
        %v1274 = vsel %vm1255, %v1207, -inf
        %1275 = vmax.xlane.f32.xlu0 %v1274
        %v1276 = vpop.xlane.xlu0 %1275
        %v1277 = vsel %vm1255, %v1250, -inf
        %1278 = vmax.xlane.f32.xlu0 %v1277
        %v1279 = vpop.xlane.xlu0 %1278
        %v1280 = vsub.f32 %v949, %v1258
        %v1281 = vsub.f32 %v992, %v1261
        %v1282 = vsub.f32 %v1035, %v1264
        %v1283 = vsub.f32 %v1078, %v1267
        %v1284 = vsub.f32 %v1121, %v1270
        %v1285 = vsub.f32 %v1164, %v1273
        %v1286 = vsub.f32 %v1207, %v1276
        %v1287 = vsub.f32 %v1250, %v1279
        %v1288 = vmul.f32 %v1280, 1.442695
        %v1289 = vpow.pop %v1288
        %v1290 = vmul.f32 %v1281, 1.442695
        %v1291 = vpow.pop %v1290
        %v1292 = vmul.f32 %v1282, 1.442695
        %v1293 = vpow.pop %v1292
        %v1294 = vmul.f32 %v1283, 1.442695
        %v1295 = vpow.pop %v1294
        %v1296 = vmul.f32 %v1284, 1.442695
        %v1297 = vpow.pop %v1296
        %v1298 = vmul.f32 %v1285, 1.442695
        %v1299 = vpow.pop %v1298
        %v1300 = vmul.f32 %v1286, 1.442695
        %v1301 = vpow.pop %v1300
        %v1302 = vmul.f32 %v1287, 1.442695
        %v1303 = vpow.pop %v1302
        %v1304 = vsel %vm1255, %v1289, 0.0
        %1305 = vadd.xlane.f32.xlu0 %v1304
        %v1306 = vpop.xlane.xlu0 %1305
        %v1307 = vsel %vm1255, %v1291, 0.0
        %1308 = vadd.xlane.f32.xlu0 %v1307
        %v1309 = vpop.xlane.xlu0 %1308
        %v1310 = vsel %vm1255, %v1293, 0.0
        %1311 = vadd.xlane.f32.xlu0 %v1310
        %v1312 = vpop.xlane.xlu0 %1311
        %v1313 = vsel %vm1255, %v1295, 0.0
        %1314 = vadd.xlane.f32.xlu0 %v1313
        %v1315 = vpop.xlane.xlu0 %1314
        %v1316 = vsel %vm1255, %v1297, 0.0
        %1317 = vadd.xlane.f32.xlu0 %v1316
        %v1318 = vpop.xlane.xlu0 %1317
        %v1319 = vsel %vm1255, %v1299, 0.0
        %1320 = vadd.xlane.f32.xlu0 %v1319
        %v1321 = vpop.xlane.xlu0 %1320
        %v1322 = vsel %vm1255, %v1301, 0.0
        %1323 = vadd.xlane.f32.xlu0 %v1322
        %v1324 = vpop.xlane.xlu0 %1323
        %v1325 = vsel %vm1255, %v1303, 0.0
        %1326 = vadd.xlane.f32.xlu0 %v1325
        %v1327 = vpop.xlane.xlu0 %1326
        %v1328 = vrcp.pop %v1306
        %v1329 = vmul.f32 %v1289, %v1328
        %v1330 = vrcp.pop %v1309
        %v1331 = vmul.f32 %v1291, %v1330
        %v1332 = vrcp.pop %v1312
        %v1333 = vmul.f32 %v1293, %v1332
        %v1334 = vrcp.pop %v1315
        %v1335 = vmul.f32 %v1295, %v1334
        %v1336 = vrcp.pop %v1318
        %v1337 = vmul.f32 %v1297, %v1336
        %v1338 = vrcp.pop %v1321
        %v1339 = vmul.f32 %v1299, %v1338
        %v1340 = vrcp.pop %v1324
        %v1341 = vmul.f32 %v1301, %v1340
        %v1342 = vrcp.pop %v1327
        %v1343 = vmul.f32 %v1303, %v1342
        %v1344 = vpack.c.bf16 %v1329, %v1329
        %v1345 = vpack.c.bf16 %v1331, %v1331
        %v1346 = vpack.c.bf16 %v1333, %v1333
        %v1347 = vpack.c.bf16 %v1335, %v1335
        %v1348 = vpack.c.bf16 %v1337, %v1337
        %v1349 = vpack.c.bf16 %v1339, %v1339
        %v1350 = vpack.c.bf16 %v1341, %v1341
        %v1351 = vpack.c.bf16 %v1343, %v1343
        %v1353 = vsel %vm1255, %v1344, 0
        %1355 = vmatprep.subr.bf16.mxu0 0
        %1356 = vmatpush1.bf16.msra.mxu0 0
        %1357 = vmatprep.subr.bf16.mxu0 0
        %1358 = vmatpush1.bf16.msra.mxu0 0
        %1359 = vmatprep.subr.bf16.mxu0 0
        %1360 = vmatpush1.bf16.msra.mxu0 0
        %1361 = vmatprep.subr.bf16.mxu0 0
        %1362 = vmatpush1.bf16.msra.mxu0 0
        %1363 = vmatprep.subr.bf16.mxu0 0
        %1364 = vmatpush1.bf16.msra.mxu0 0
        %1365 = vmatprep.subr.bf16.mxu0 0
        %1366 = vmatpush1.bf16.msra.mxu0 0
        %1367 = vmatprep.subr.bf16.mxu0 0
        %1368 = vmatpush1.bf16.msra.mxu0 0
        %1369 = vmatprep.subr.bf16.mxu0 0
        %1370 = vmatpush1.bf16.msra.mxu0 %v898
        %1371 = vmatprep.subr.bf16.mxu0 0
        %1372 = vmatpush2.bf16.msra.mxu0 0
        %1373 = vmatprep.subr.bf16.mxu0 0
        %1374 = vmatpush2.bf16.msra.mxu0 0
        %1375 = vmatprep.subr.bf16.mxu0 0
        %1376 = vmatpush2.bf16.msra.mxu0 0
        %1377 = vmatprep.subr.bf16.mxu0 0
        %1378 = vmatpush2.bf16.msra.mxu0 0
        %1379 = vmatprep.subr.bf16.mxu0 0
        %1380 = vmatpush2.bf16.msra.mxu0 0
        %1381 = vmatprep.subr.bf16.mxu0 0
        %1382 = vmatpush2.bf16.msra.mxu0 0
        %1383 = vmatprep.subr.bf16.mxu0 0
        %1384 = vmatpush2.bf16.msra.mxu0 0
        %1385 = vmatprep.subr.bf16.mxu0 0
        %1386 = vmatpush2.bf16.msra.mxu0 0
        %1387 = vmatprep.mubr.bf16.mxu0 0
        %1388 = vmatmul.mubr.bf16.gmra.mxu0 %v1353
        %v1389 = vpop.f32.mrf.mxu0
        %v1390 = vadd.f32 0.0, %v1389
        %v1391 = vpop.f32.mrf.mxu0
        %v1392 = vpop.f32.mrf.mxu0
        %v1393 = vpop.f32.mrf.mxu0
        %1394 = vdwg.mxu0
        %v1396 = vsel %vm1255, %v1345, 0
        %1398 = vmatprep.subr.bf16.mxu0 0
        %1399 = vmatpush1.bf16.msra.mxu0 0
        %1400 = vmatprep.subr.bf16.mxu0 0
        %1401 = vmatpush1.bf16.msra.mxu0 0
        %1402 = vmatprep.subr.bf16.mxu0 0
        %1403 = vmatpush1.bf16.msra.mxu0 0
        %1404 = vmatprep.subr.bf16.mxu0 0
        %1405 = vmatpush1.bf16.msra.mxu0 0
        %1406 = vmatprep.subr.bf16.mxu0 0
        %1407 = vmatpush1.bf16.msra.mxu0 0
        %1408 = vmatprep.subr.bf16.mxu0 0
        %1409 = vmatpush1.bf16.msra.mxu0 0
        %1410 = vmatprep.subr.bf16.mxu0 0
        %1411 = vmatpush1.bf16.msra.mxu0 0
        %1412 = vmatprep.subr.bf16.mxu0 0
        %1413 = vmatpush1.bf16.msra.mxu0 %v899
        %1414 = vmatprep.subr.bf16.mxu0 0
        %1415 = vmatpush2.bf16.msra.mxu0 0
        %1416 = vmatprep.subr.bf16.mxu0 0
        %1417 = vmatpush2.bf16.msra.mxu0 0
        %1418 = vmatprep.subr.bf16.mxu0 0
        %1419 = vmatpush2.bf16.msra.mxu0 0
        %1420 = vmatprep.subr.bf16.mxu0 0
        %1421 = vmatpush2.bf16.msra.mxu0 0
        %1422 = vmatprep.subr.bf16.mxu0 0
        %1423 = vmatpush2.bf16.msra.mxu0 0
        %1424 = vmatprep.subr.bf16.mxu0 0
        %1425 = vmatpush2.bf16.msra.mxu0 0
        %1426 = vmatprep.subr.bf16.mxu0 0
        %1427 = vmatpush2.bf16.msra.mxu0 0
        %1428 = vmatprep.subr.bf16.mxu0 0
        %1429 = vmatpush2.bf16.msra.mxu0 0
        %1430 = vmatprep.mubr.bf16.mxu0 0
        %1431 = vmatmul.mubr.bf16.gmra.mxu0 %v1396
        %v1432 = vpop.f32.mrf.mxu0
        %v1433 = vadd.f32 0.0, %v1432
        %v1434 = vpop.f32.mrf.mxu0
        %v1435 = vpop.f32.mrf.mxu0
        %v1436 = vpop.f32.mrf.mxu0
        %1437 = vdwg.mxu0
        %v1439 = vsel %vm1255, %v1346, 0
        %1441 = vmatprep.subr.bf16.mxu0 0
        %1442 = vmatpush1.bf16.msra.mxu0 0
        %1443 = vmatprep.subr.bf16.mxu0 0
        %1444 = vmatpush1.bf16.msra.mxu0 0
        %1445 = vmatprep.subr.bf16.mxu0 0
        %1446 = vmatpush1.bf16.msra.mxu0 0
        %1447 = vmatprep.subr.bf16.mxu0 0
        %1448 = vmatpush1.bf16.msra.mxu0 0
        %1449 = vmatprep.subr.bf16.mxu0 0
        %1450 = vmatpush1.bf16.msra.mxu0 0
        %1451 = vmatprep.subr.bf16.mxu0 0
        %1452 = vmatpush1.bf16.msra.mxu0 0
        %1453 = vmatprep.subr.bf16.mxu0 0
        %1454 = vmatpush1.bf16.msra.mxu0 0
        %1455 = vmatprep.subr.bf16.mxu0 0
        %1456 = vmatpush1.bf16.msra.mxu0 %v900
        %1457 = vmatprep.subr.bf16.mxu0 0
        %1458 = vmatpush2.bf16.msra.mxu0 0
        %1459 = vmatprep.subr.bf16.mxu0 0
        %1460 = vmatpush2.bf16.msra.mxu0 0
        %1461 = vmatprep.subr.bf16.mxu0 0
        %1462 = vmatpush2.bf16.msra.mxu0 0
        %1463 = vmatprep.subr.bf16.mxu0 0
        %1464 = vmatpush2.bf16.msra.mxu0 0
        %1465 = vmatprep.subr.bf16.mxu0 0
        %1466 = vmatpush2.bf16.msra.mxu0 0
        %1467 = vmatprep.subr.bf16.mxu0 0
        %1468 = vmatpush2.bf16.msra.mxu0 0
        %1469 = vmatprep.subr.bf16.mxu0 0
        %1470 = vmatpush2.bf16.msra.mxu0 0
        %1471 = vmatprep.subr.bf16.mxu0 0
        %1472 = vmatpush2.bf16.msra.mxu0 0
        %1473 = vmatprep.mubr.bf16.mxu0 0
        %1474 = vmatmul.mubr.bf16.gmra.mxu0 %v1439
        %v1475 = vpop.f32.mrf.mxu0
        %v1476 = vadd.f32 0.0, %v1475
        %v1477 = vpop.f32.mrf.mxu0
        %v1478 = vpop.f32.mrf.mxu0
        %v1479 = vpop.f32.mrf.mxu0
        %1480 = vdwg.mxu0
        %v1482 = vsel %vm1255, %v1347, 0
        %1484 = vmatprep.subr.bf16.mxu0 0
        %1485 = vmatpush1.bf16.msra.mxu0 0
        %1486 = vmatprep.subr.bf16.mxu0 0
        %1487 = vmatpush1.bf16.msra.mxu0 0
        %1488 = vmatprep.subr.bf16.mxu0 0
        %1489 = vmatpush1.bf16.msra.mxu0 0
        %1490 = vmatprep.subr.bf16.mxu0 0
        %1491 = vmatpush1.bf16.msra.mxu0 0
        %1492 = vmatprep.subr.bf16.mxu0 0
        %1493 = vmatpush1.bf16.msra.mxu0 0
        %1494 = vmatprep.subr.bf16.mxu0 0
        %1495 = vmatpush1.bf16.msra.mxu0 0
        %1496 = vmatprep.subr.bf16.mxu0 0
        %1497 = vmatpush1.bf16.msra.mxu0 0
        %1498 = vmatprep.subr.bf16.mxu0 0
        %1499 = vmatpush1.bf16.msra.mxu0 %v901
        %1500 = vmatprep.subr.bf16.mxu0 0
        %1501 = vmatpush2.bf16.msra.mxu0 0
        %1502 = vmatprep.subr.bf16.mxu0 0
        %1503 = vmatpush2.bf16.msra.mxu0 0
        %1504 = vmatprep.subr.bf16.mxu0 0
        %1505 = vmatpush2.bf16.msra.mxu0 0
        %1506 = vmatprep.subr.bf16.mxu0 0
        %1507 = vmatpush2.bf16.msra.mxu0 0
        %1508 = vmatprep.subr.bf16.mxu0 0
        %1509 = vmatpush2.bf16.msra.mxu0 0
        %1510 = vmatprep.subr.bf16.mxu0 0
        %1511 = vmatpush2.bf16.msra.mxu0 0
        %1512 = vmatprep.subr.bf16.mxu0 0
        %1513 = vmatpush2.bf16.msra.mxu0 0
        %1514 = vmatprep.subr.bf16.mxu0 0
        %1515 = vmatpush2.bf16.msra.mxu0 0
        %1516 = vmatprep.mubr.bf16.mxu0 0
        %1517 = vmatmul.mubr.bf16.gmra.mxu0 %v1482
        %v1518 = vpop.f32.mrf.mxu0
        %v1519 = vadd.f32 0.0, %v1518
        %v1520 = vpop.f32.mrf.mxu0
        %v1521 = vpop.f32.mrf.mxu0
        %v1522 = vpop.f32.mrf.mxu0
        %1523 = vdwg.mxu0
        %v1525 = vsel %vm1255, %v1348, 0
        %1527 = vmatprep.subr.bf16.mxu0 0
        %1528 = vmatpush1.bf16.msra.mxu0 0
        %1529 = vmatprep.subr.bf16.mxu0 0
        %1530 = vmatpush1.bf16.msra.mxu0 0
        %1531 = vmatprep.subr.bf16.mxu0 0
        %1532 = vmatpush1.bf16.msra.mxu0 0
        %1533 = vmatprep.subr.bf16.mxu0 0
        %1534 = vmatpush1.bf16.msra.mxu0 0
        %1535 = vmatprep.subr.bf16.mxu0 0
        %1536 = vmatpush1.bf16.msra.mxu0 0
        %1537 = vmatprep.subr.bf16.mxu0 0
        %1538 = vmatpush1.bf16.msra.mxu0 0
        %1539 = vmatprep.subr.bf16.mxu0 0
        %1540 = vmatpush1.bf16.msra.mxu0 0
        %1541 = vmatprep.subr.bf16.mxu0 0
        %1542 = vmatpush1.bf16.msra.mxu0 %v902
        %1543 = vmatprep.subr.bf16.mxu0 0
        %1544 = vmatpush2.bf16.msra.mxu0 0
        %1545 = vmatprep.subr.bf16.mxu0 0
        %1546 = vmatpush2.bf16.msra.mxu0 0
        %1547 = vmatprep.subr.bf16.mxu0 0
        %1548 = vmatpush2.bf16.msra.mxu0 0
        %1549 = vmatprep.subr.bf16.mxu0 0
        %1550 = vmatpush2.bf16.msra.mxu0 0
        %1551 = vmatprep.subr.bf16.mxu0 0
        %1552 = vmatpush2.bf16.msra.mxu0 0
        %1553 = vmatprep.subr.bf16.mxu0 0
        %1554 = vmatpush2.bf16.msra.mxu0 0
        %1555 = vmatprep.subr.bf16.mxu0 0
        %1556 = vmatpush2.bf16.msra.mxu0 0
        %1557 = vmatprep.subr.bf16.mxu0 0
        %1558 = vmatpush2.bf16.msra.mxu0 0
        %1559 = vmatprep.mubr.bf16.mxu0 0
        %1560 = vmatmul.mubr.bf16.gmra.mxu0 %v1525
        %v1561 = vpop.f32.mrf.mxu0
        %v1562 = vadd.f32 0.0, %v1561
        %v1563 = vpop.f32.mrf.mxu0
        %v1564 = vpop.f32.mrf.mxu0
        %v1565 = vpop.f32.mrf.mxu0
        %1566 = vdwg.mxu0
        %v1568 = vsel %vm1255, %v1349, 0
        %1570 = vmatprep.subr.bf16.mxu0 0
        %1571 = vmatpush1.bf16.msra.mxu0 0
        %1572 = vmatprep.subr.bf16.mxu0 0
        %1573 = vmatpush1.bf16.msra.mxu0 0
        %1574 = vmatprep.subr.bf16.mxu0 0
        %1575 = vmatpush1.bf16.msra.mxu0 0
        %1576 = vmatprep.subr.bf16.mxu0 0
        %1577 = vmatpush1.bf16.msra.mxu0 0
        %1578 = vmatprep.subr.bf16.mxu0 0
        %1579 = vmatpush1.bf16.msra.mxu0 0
        %1580 = vmatprep.subr.bf16.mxu0 0
        %1581 = vmatpush1.bf16.msra.mxu0 0
        %1582 = vmatprep.subr.bf16.mxu0 0
        %1583 = vmatpush1.bf16.msra.mxu0 0
        %1584 = vmatprep.subr.bf16.mxu0 0
        %1585 = vmatpush1.bf16.msra.mxu0 %v903
        %1586 = vmatprep.subr.bf16.mxu0 0
        %1587 = vmatpush2.bf16.msra.mxu0 0
        %1588 = vmatprep.subr.bf16.mxu0 0
        %1589 = vmatpush2.bf16.msra.mxu0 0
        %1590 = vmatprep.subr.bf16.mxu0 0
        %1591 = vmatpush2.bf16.msra.mxu0 0
        %1592 = vmatprep.subr.bf16.mxu0 0
        %1593 = vmatpush2.bf16.msra.mxu0 0
        %1594 = vmatprep.subr.bf16.mxu0 0
        %1595 = vmatpush2.bf16.msra.mxu0 0
        %1596 = vmatprep.subr.bf16.mxu0 0
        %1597 = vmatpush2.bf16.msra.mxu0 0
        %1598 = vmatprep.subr.bf16.mxu0 0
        %1599 = vmatpush2.bf16.msra.mxu0 0
        %1600 = vmatprep.subr.bf16.mxu0 0
        %1601 = vmatpush2.bf16.msra.mxu0 0
        %1602 = vmatprep.mubr.bf16.mxu0 0
        %1603 = vmatmul.mubr.bf16.gmra.mxu0 %v1568
        %v1604 = vpop.f32.mrf.mxu0
        %v1605 = vadd.f32 0.0, %v1604
        %v1606 = vpop.f32.mrf.mxu0
        %v1607 = vpop.f32.mrf.mxu0
        %v1608 = vpop.f32.mrf.mxu0
        %1609 = vdwg.mxu0
        %v1611 = vsel %vm1255, %v1350, 0
        %1613 = vmatprep.subr.bf16.mxu0 0
        %1614 = vmatpush1.bf16.msra.mxu0 0
        %1615 = vmatprep.subr.bf16.mxu0 0
        %1616 = vmatpush1.bf16.msra.mxu0 0
        %1617 = vmatprep.subr.bf16.mxu0 0
        %1618 = vmatpush1.bf16.msra.mxu0 0
        %1619 = vmatprep.subr.bf16.mxu0 0
        %1620 = vmatpush1.bf16.msra.mxu0 0
        %1621 = vmatprep.subr.bf16.mxu0 0
        %1622 = vmatpush1.bf16.msra.mxu0 0
        %1623 = vmatprep.subr.bf16.mxu0 0
        %1624 = vmatpush1.bf16.msra.mxu0 0
        %1625 = vmatprep.subr.bf16.mxu0 0
        %1626 = vmatpush1.bf16.msra.mxu0 0
        %1627 = vmatprep.subr.bf16.mxu0 0
        %1628 = vmatpush1.bf16.msra.mxu0 %v904
        %1629 = vmatprep.subr.bf16.mxu0 0
        %1630 = vmatpush2.bf16.msra.mxu0 0
        %1631 = vmatprep.subr.bf16.mxu0 0
        %1632 = vmatpush2.bf16.msra.mxu0 0
        %1633 = vmatprep.subr.bf16.mxu0 0
        %1634 = vmatpush2.bf16.msra.mxu0 0
        %1635 = vmatprep.subr.bf16.mxu0 0
        %1636 = vmatpush2.bf16.msra.mxu0 0
        %1637 = vmatprep.subr.bf16.mxu0 0
        %1638 = vmatpush2.bf16.msra.mxu0 0
        %1639 = vmatprep.subr.bf16.mxu0 0
        %1640 = vmatpush2.bf16.msra.mxu0 0
        %1641 = vmatprep.subr.bf16.mxu0 0
        %1642 = vmatpush2.bf16.msra.mxu0 0
        %1643 = vmatprep.subr.bf16.mxu0 0
        %1644 = vmatpush2.bf16.msra.mxu0 0
        %1645 = vmatprep.mubr.bf16.mxu0 0
        %1646 = vmatmul.mubr.bf16.gmra.mxu0 %v1611
        %v1647 = vpop.f32.mrf.mxu0
        %v1648 = vadd.f32 0.0, %v1647
        %v1649 = vpop.f32.mrf.mxu0
        %v1650 = vpop.f32.mrf.mxu0
        %v1651 = vpop.f32.mrf.mxu0
        %1652 = vdwg.mxu0
        %v1654 = vsel %vm1255, %v1351, 0
        %1656 = vmatprep.subr.bf16.mxu0 0
        %1657 = vmatpush1.bf16.msra.mxu0 0
        %1658 = vmatprep.subr.bf16.mxu0 0
        %1659 = vmatpush1.bf16.msra.mxu0 0
        %1660 = vmatprep.subr.bf16.mxu0 0
        %1661 = vmatpush1.bf16.msra.mxu0 0
        %1662 = vmatprep.subr.bf16.mxu0 0
        %1663 = vmatpush1.bf16.msra.mxu0 0
        %1664 = vmatprep.subr.bf16.mxu0 0
        %1665 = vmatpush1.bf16.msra.mxu0 0
        %1666 = vmatprep.subr.bf16.mxu0 0
        %1667 = vmatpush1.bf16.msra.mxu0 0
        %1668 = vmatprep.subr.bf16.mxu0 0
        %1669 = vmatpush1.bf16.msra.mxu0 0
        %1670 = vmatprep.subr.bf16.mxu0 0
        %1671 = vmatpush1.bf16.msra.mxu0 %v905
        %1672 = vmatprep.subr.bf16.mxu0 0
        %1673 = vmatpush2.bf16.msra.mxu0 0
        %1674 = vmatprep.subr.bf16.mxu0 0
        %1675 = vmatpush2.bf16.msra.mxu0 0
        %1676 = vmatprep.subr.bf16.mxu0 0
        %1677 = vmatpush2.bf16.msra.mxu0 0
        %1678 = vmatprep.subr.bf16.mxu0 0
        %1679 = vmatpush2.bf16.msra.mxu0 0
        %1680 = vmatprep.subr.bf16.mxu0 0
        %1681 = vmatpush2.bf16.msra.mxu0 0
        %1682 = vmatprep.subr.bf16.mxu0 0
        %1683 = vmatpush2.bf16.msra.mxu0 0
        %1684 = vmatprep.subr.bf16.mxu0 0
        %1685 = vmatpush2.bf16.msra.mxu0 0
        %1686 = vmatprep.subr.bf16.mxu0 0
        %1687 = vmatpush2.bf16.msra.mxu0 0
        %1688 = vmatprep.mubr.bf16.mxu0 0
        %1689 = vmatmul.mubr.bf16.gmra.mxu0 %v1654
        %v1690 = vpop.f32.mrf.mxu0
        %v1691 = vadd.f32 0.0, %v1690
        %v1692 = vpop.f32.mrf.mxu0
        %v1693 = vpop.f32.mrf.mxu0
        %v1694 = vpop.f32.mrf.mxu0
        %1695 = vdwg.mxu0
        %v1696 = vpack.c.bf16 %v1433, %v1390
        %v1697 = vpack.c.bf16 %v1519, %v1476
        %v1698 = vpack.c.bf16 %v1605, %v1562
        %v1699 = vpack.c.bf16 %v1691, %v1648
        %v1704 = vunpack.c.l.b16 %v1696
        %v1705 = vunpack.c.h.b16 %v1696
        %v1706 = vunpack.c.l.b16 %v1697
        %v1707 = vunpack.c.h.b16 %v1697
        %v1708 = vunpack.c.l.b16 %v1698
        %v1709 = vunpack.c.h.b16 %v1698
        %v1710 = vunpack.c.l.b16 %v1699
        %v1711 = vunpack.c.h.b16 %v1699
        %v1712 = vpack.c.b16 %v1704, %v1704
        %v1713 = vpack.c.b16 %v1705, %v1705
        %v1714 = vpack.c.b16 %v1706, %v1706
        %v1715 = vpack.c.b16 %v1707, %v1707
        %v1716 = vpack.c.b16 %v1708, %v1708
        %v1717 = vpack.c.b16 %v1709, %v1709
        %v1718 = vpack.c.b16 %v1710, %v1710
        %v1719 = vpack.c.b16 %v1711, %v1711
        %vm1728 = vcmask 257024
        %1729 = vst.msk [vmem:[#allocation2] sm:$0xf] %vm1728, %v1712
        %1730 = vst.msk [vmem:[#allocation2 + $0x4] sm:$0xf] %vm1728, %v1713
        %1731 = vst.msk [vmem:[#allocation2 + $0x8] sm:$0xf] %vm1728, %v1714
        %1732 = vst.msk [vmem:[#allocation2 + $0xc] sm:$0xf] %vm1728, %v1715
        %1733 = vst.msk [vmem:[#allocation2 + $0x10] sm:$0xf] %vm1728, %v1716
        %1734 = vst.msk [vmem:[#allocation2 + $0x14] sm:$0xf] %vm1728, %v1717
        %1735 = vst.msk [vmem:[#allocation2 + $0x18] sm:$0xf] %vm1728, %v1718
        %1736 = vst.msk [vmem:[#allocation2 + $0x1c] sm:$0xf] %vm1728, %v1719
        %v1738 = vunpack.c.l.b16 %v906
        %v1739 = vpack.c.b16 %v1738, %v1738
        %1740 = vrot.lane.b32.xlu0 %v1739, 96
        %v1741 = vpop.permute.xlu0 %1740
        %1743 = vrot.lane.b32.xlu0 %v870, 96
        %v1744 = vpop.permute.xlu0 %1743
        %v1746 = vsel %vm907, %v1741, 0
        %v1749 = vsel %vm907, %v1744, 0
        %1751 = vmatprep.subr.bf16.mxu0 0
        %1752 = vmatpush1.bf16.xpose.msra.mxu0 0
        %1753 = vmatprep.subr.bf16.mxu0 0
        %1754 = vmatpush1.bf16.xpose.msra.mxu0 0
        %1755 = vmatprep.subr.bf16.mxu0 0
        %1756 = vmatpush1.bf16.xpose.msra.mxu0 0
        %1757 = vmatprep.subr.bf16.mxu0 0
        %1758 = vmatpush1.bf16.xpose.msra.mxu0 0
        %1759 = vmatprep.subr.bf16.mxu0 0
        %1760 = vmatpush1.bf16.xpose.msra.mxu0 0
        %1761 = vmatprep.subr.bf16.mxu0 0
        %1762 = vmatpush1.bf16.xpose.msra.mxu0 0
        %1763 = vmatprep.subr.bf16.mxu0 0
        %1764 = vmatpush1.bf16.xpose.msra.mxu0 0
        %1765 = vmatprep.subr.bf16.mxu0 0
        %1766 = vmatpush1.bf16.xpose.msra.mxu0 %v1749
        %1767 = vmatprep.subr.bf16.mxu0 0
        %1768 = vmatpush2.bf16.xpose.msra.mxu0 0
        %1769 = vmatprep.subr.bf16.mxu0 0
        %1770 = vmatpush2.bf16.xpose.msra.mxu0 0
        %1771 = vmatprep.subr.bf16.mxu0 0
        %1772 = vmatpush2.bf16.xpose.msra.mxu0 0
        %1773 = vmatprep.subr.bf16.mxu0 0
        %1774 = vmatpush2.bf16.xpose.msra.mxu0 0
        %1775 = vmatprep.subr.bf16.mxu0 0
        %1776 = vmatpush2.bf16.xpose.msra.mxu0 0
        %1777 = vmatprep.subr.bf16.mxu0 0
        %1778 = vmatpush2.bf16.xpose.msra.mxu0 0
        %1779 = vmatprep.subr.bf16.mxu0 0
        %1780 = vmatpush2.bf16.xpose.msra.mxu0 0
        %1781 = vmatprep.subr.bf16.mxu0 0
        %1782 = vmatpush2.bf16.xpose.msra.mxu0 0
        %1783 = vmatprep.mubr.bf16.mxu0 0
        %1784 = vmatmul.mubr.bf16.gmra.mxu0 %v1746
        %v1785 = vpop.f32.mrf.mxu0
        %v1786 = vadd.f32 0.0, %v1785
        %v1787 = vpop.f32.mrf.mxu0
        %v1788 = vpop.f32.mrf.mxu0
        %v1789 = vpop.f32.mrf.mxu0
        %1790 = vdwg.mxu0
        %1792 = vrot.lane.b32.xlu0 %v871, 96
        %v1793 = vpop.permute.xlu0 %1792
        %v1795 = vsel %vm907, %v1793, 0
        %1797 = vmatprep.subr.bf16.mxu0 0
        %1798 = vmatpush1.bf16.xpose.msra.mxu0 0
        %1799 = vmatprep.subr.bf16.mxu0 0
        %1800 = vmatpush1.bf16.xpose.msra.mxu0 0
        %1801 = vmatprep.subr.bf16.mxu0 0
        %1802 = vmatpush1.bf16.xpose.msra.mxu0 0
        %1803 = vmatprep.subr.bf16.mxu0 0
        %1804 = vmatpush1.bf16.xpose.msra.mxu0 0
        %1805 = vmatprep.subr.bf16.mxu0 0
        %1806 = vmatpush1.bf16.xpose.msra.mxu0 0
        %1807 = vmatprep.subr.bf16.mxu0 0
        %1808 = vmatpush1.bf16.xpose.msra.mxu0 0
        %1809 = vmatprep.subr.bf16.mxu0 0
        %1810 = vmatpush1.bf16.xpose.msra.mxu0 0
        %1811 = vmatprep.subr.bf16.mxu0 0
        %1812 = vmatpush1.bf16.xpose.msra.mxu0 %v1795
        %1813 = vmatprep.subr.bf16.mxu0 0
        %1814 = vmatpush2.bf16.xpose.msra.mxu0 0
        %1815 = vmatprep.subr.bf16.mxu0 0
        %1816 = vmatpush2.bf16.xpose.msra.mxu0 0
        %1817 = vmatprep.subr.bf16.mxu0 0
        %1818 = vmatpush2.bf16.xpose.msra.mxu0 0
        %1819 = vmatprep.subr.bf16.mxu0 0
        %1820 = vmatpush2.bf16.xpose.msra.mxu0 0
        %1821 = vmatprep.subr.bf16.mxu0 0
        %1822 = vmatpush2.bf16.xpose.msra.mxu0 0
        %1823 = vmatprep.subr.bf16.mxu0 0
        %1824 = vmatpush2.bf16.xpose.msra.mxu0 0
        %1825 = vmatprep.subr.bf16.mxu0 0
        %1826 = vmatpush2.bf16.xpose.msra.mxu0 0
        %1827 = vmatprep.subr.bf16.mxu0 0
        %1828 = vmatpush2.bf16.xpose.msra.mxu0 0
        %1829 = vmatprep.mubr.bf16.mxu0 0
        %1830 = vmatmul.mubr.bf16.gmra.mxu0 %v1746
        %v1831 = vpop.f32.mrf.mxu0
        %v1832 = vadd.f32 0.0, %v1831
        %v1833 = vpop.f32.mrf.mxu0
        %v1834 = vpop.f32.mrf.mxu0
        %v1835 = vpop.f32.mrf.mxu0
        %1836 = vdwg.mxu0
        %1838 = vrot.lane.b32.xlu0 %v872, 96
        %v1839 = vpop.permute.xlu0 %1838
        %v1841 = vsel %vm907, %v1839, 0
        %1843 = vmatprep.subr.bf16.mxu0 0
        %1844 = vmatpush1.bf16.xpose.msra.mxu0 0
        %1845 = vmatprep.subr.bf16.mxu0 0
        %1846 = vmatpush1.bf16.xpose.msra.mxu0 0
        %1847 = vmatprep.subr.bf16.mxu0 0
        %1848 = vmatpush1.bf16.xpose.msra.mxu0 0
        %1849 = vmatprep.subr.bf16.mxu0 0
        %1850 = vmatpush1.bf16.xpose.msra.mxu0 0
        %1851 = vmatprep.subr.bf16.mxu0 0
        %1852 = vmatpush1.bf16.xpose.msra.mxu0 0
        %1853 = vmatprep.subr.bf16.mxu0 0
        %1854 = vmatpush1.bf16.xpose.msra.mxu0 0
        %1855 = vmatprep.subr.bf16.mxu0 0
        %1856 = vmatpush1.bf16.xpose.msra.mxu0 0
        %1857 = vmatprep.subr.bf16.mxu0 0
        %1858 = vmatpush1.bf16.xpose.msra.mxu0 %v1841
        %1859 = vmatprep.subr.bf16.mxu0 0
        %1860 = vmatpush2.bf16.xpose.msra.mxu0 0
        %1861 = vmatprep.subr.bf16.mxu0 0
        %1862 = vmatpush2.bf16.xpose.msra.mxu0 0
        %1863 = vmatprep.subr.bf16.mxu0 0
        %1864 = vmatpush2.bf16.xpose.msra.mxu0 0
        %1865 = vmatprep.subr.bf16.mxu0 0
        %1866 = vmatpush2.bf16.xpose.msra.mxu0 0
        %1867 = vmatprep.subr.bf16.mxu0 0
        %1868 = vmatpush2.bf16.xpose.msra.mxu0 0
        %1869 = vmatprep.subr.bf16.mxu0 0
        %1870 = vmatpush2.bf16.xpose.msra.mxu0 0
        %1871 = vmatprep.subr.bf16.mxu0 0
        %1872 = vmatpush2.bf16.xpose.msra.mxu0 0
        %1873 = vmatprep.subr.bf16.mxu0 0
        %1874 = vmatpush2.bf16.xpose.msra.mxu0 0
        %1875 = vmatprep.mubr.bf16.mxu0 0
        %1876 = vmatmul.mubr.bf16.gmra.mxu0 %v1746
        %v1877 = vpop.f32.mrf.mxu0
        %v1878 = vadd.f32 0.0, %v1877
        %v1879 = vpop.f32.mrf.mxu0
        %v1880 = vpop.f32.mrf.mxu0
        %v1881 = vpop.f32.mrf.mxu0
        %1882 = vdwg.mxu0
        %1884 = vrot.lane.b32.xlu0 %v873, 96
        %v1885 = vpop.permute.xlu0 %1884
        %v1887 = vsel %vm907, %v1885, 0
        %1889 = vmatprep.subr.bf16.mxu0 0
        %1890 = vmatpush1.bf16.xpose.msra.mxu0 0
        %1891 = vmatprep.subr.bf16.mxu0 0
        %1892 = vmatpush1.bf16.xpose.msra.mxu0 0
        %1893 = vmatprep.subr.bf16.mxu0 0
        %1894 = vmatpush1.bf16.xpose.msra.mxu0 0
        %1895 = vmatprep.subr.bf16.mxu0 0
        %1896 = vmatpush1.bf16.xpose.msra.mxu0 0
        %1897 = vmatprep.subr.bf16.mxu0 0
        %1898 = vmatpush1.bf16.xpose.msra.mxu0 0
        %1899 = vmatprep.subr.bf16.mxu0 0
        %1900 = vmatpush1.bf16.xpose.msra.mxu0 0
        %1901 = vmatprep.subr.bf16.mxu0 0
        %1902 = vmatpush1.bf16.xpose.msra.mxu0 0
        %1903 = vmatprep.subr.bf16.mxu0 0
        %1904 = vmatpush1.bf16.xpose.msra.mxu0 %v1887
        %1905 = vmatprep.subr.bf16.mxu0 0
        %1906 = vmatpush2.bf16.xpose.msra.mxu0 0
        %1907 = vmatprep.subr.bf16.mxu0 0
        %1908 = vmatpush2.bf16.xpose.msra.mxu0 0
        %1909 = vmatprep.subr.bf16.mxu0 0
        %1910 = vmatpush2.bf16.xpose.msra.mxu0 0
        %1911 = vmatprep.subr.bf16.mxu0 0
        %1912 = vmatpush2.bf16.xpose.msra.mxu0 0
        %1913 = vmatprep.subr.bf16.mxu0 0
        %1914 = vmatpush2.bf16.xpose.msra.mxu0 0
        %1915 = vmatprep.subr.bf16.mxu0 0
        %1916 = vmatpush2.bf16.xpose.msra.mxu0 0
        %1917 = vmatprep.subr.bf16.mxu0 0
        %1918 = vmatpush2.bf16.xpose.msra.mxu0 0
        %1919 = vmatprep.subr.bf16.mxu0 0
        %1920 = vmatpush2.bf16.xpose.msra.mxu0 0
        %1921 = vmatprep.mubr.bf16.mxu0 0
        %1922 = vmatmul.mubr.bf16.gmra.mxu0 %v1746
        %v1923 = vpop.f32.mrf.mxu0
        %v1924 = vadd.f32 0.0, %v1923
        %v1925 = vpop.f32.mrf.mxu0
        %v1926 = vpop.f32.mrf.mxu0
        %v1927 = vpop.f32.mrf.mxu0
        %1928 = vdwg.mxu0
        %1930 = vrot.lane.b32.xlu0 %v874, 96
        %v1931 = vpop.permute.xlu0 %1930
        %v1933 = vsel %vm907, %v1931, 0
        %1935 = vmatprep.subr.bf16.mxu0 0
        %1936 = vmatpush1.bf16.xpose.msra.mxu0 0
        %1937 = vmatprep.subr.bf16.mxu0 0
        %1938 = vmatpush1.bf16.xpose.msra.mxu0 0
        %1939 = vmatprep.subr.bf16.mxu0 0
        %1940 = vmatpush1.bf16.xpose.msra.mxu0 0
        %1941 = vmatprep.subr.bf16.mxu0 0
        %1942 = vmatpush1.bf16.xpose.msra.mxu0 0
        %1943 = vmatprep.subr.bf16.mxu0 0
        %1944 = vmatpush1.bf16.xpose.msra.mxu0 0
        %1945 = vmatprep.subr.bf16.mxu0 0
        %1946 = vmatpush1.bf16.xpose.msra.mxu0 0
        %1947 = vmatprep.subr.bf16.mxu0 0
        %1948 = vmatpush1.bf16.xpose.msra.mxu0 0
        %1949 = vmatprep.subr.bf16.mxu0 0
        %1950 = vmatpush1.bf16.xpose.msra.mxu0 %v1933
        %1951 = vmatprep.subr.bf16.mxu0 0
        %1952 = vmatpush2.bf16.xpose.msra.mxu0 0
        %1953 = vmatprep.subr.bf16.mxu0 0
        %1954 = vmatpush2.bf16.xpose.msra.mxu0 0
        %1955 = vmatprep.subr.bf16.mxu0 0
        %1956 = vmatpush2.bf16.xpose.msra.mxu0 0
        %1957 = vmatprep.subr.bf16.mxu0 0
        %1958 = vmatpush2.bf16.xpose.msra.mxu0 0
        %1959 = vmatprep.subr.bf16.mxu0 0
        %1960 = vmatpush2.bf16.xpose.msra.mxu0 0
        %1961 = vmatprep.subr.bf16.mxu0 0
        %1962 = vmatpush2.bf16.xpose.msra.mxu0 0
        %1963 = vmatprep.subr.bf16.mxu0 0
        %1964 = vmatpush2.bf16.xpose.msra.mxu0 0
        %1965 = vmatprep.subr.bf16.mxu0 0
        %1966 = vmatpush2.bf16.xpose.msra.mxu0 0
        %1967 = vmatprep.mubr.bf16.mxu0 0
        %1968 = vmatmul.mubr.bf16.gmra.mxu0 %v1746
        %v1969 = vpop.f32.mrf.mxu0
        %v1970 = vadd.f32 0.0, %v1969
        %v1971 = vpop.f32.mrf.mxu0
        %v1972 = vpop.f32.mrf.mxu0
        %v1973 = vpop.f32.mrf.mxu0
        %1974 = vdwg.mxu0
        %1976 = vrot.lane.b32.xlu0 %v875, 96
        %v1977 = vpop.permute.xlu0 %1976
        %v1979 = vsel %vm907, %v1977, 0
        %1981 = vmatprep.subr.bf16.mxu0 0
        %1982 = vmatpush1.bf16.xpose.msra.mxu0 0
        %1983 = vmatprep.subr.bf16.mxu0 0
        %1984 = vmatpush1.bf16.xpose.msra.mxu0 0
        %1985 = vmatprep.subr.bf16.mxu0 0
        %1986 = vmatpush1.bf16.xpose.msra.mxu0 0
        %1987 = vmatprep.subr.bf16.mxu0 0
        %1988 = vmatpush1.bf16.xpose.msra.mxu0 0
        %1989 = vmatprep.subr.bf16.mxu0 0
        %1990 = vmatpush1.bf16.xpose.msra.mxu0 0
        %1991 = vmatprep.subr.bf16.mxu0 0
        %1992 = vmatpush1.bf16.xpose.msra.mxu0 0
        %1993 = vmatprep.subr.bf16.mxu0 0
        %1994 = vmatpush1.bf16.xpose.msra.mxu0 0
        %1995 = vmatprep.subr.bf16.mxu0 0
        %1996 = vmatpush1.bf16.xpose.msra.mxu0 %v1979
        %1997 = vmatprep.subr.bf16.mxu0 0
        %1998 = vmatpush2.bf16.xpose.msra.mxu0 0
        %1999 = vmatprep.subr.bf16.mxu0 0
        %2000 = vmatpush2.bf16.xpose.msra.mxu0 0
        %2001 = vmatprep.subr.bf16.mxu0 0
        %2002 = vmatpush2.bf16.xpose.msra.mxu0 0
        %2003 = vmatprep.subr.bf16.mxu0 0
        %2004 = vmatpush2.bf16.xpose.msra.mxu0 0
        %2005 = vmatprep.subr.bf16.mxu0 0
        %2006 = vmatpush2.bf16.xpose.msra.mxu0 0
        %2007 = vmatprep.subr.bf16.mxu0 0
        %2008 = vmatpush2.bf16.xpose.msra.mxu0 0
        %2009 = vmatprep.subr.bf16.mxu0 0
        %2010 = vmatpush2.bf16.xpose.msra.mxu0 0
        %2011 = vmatprep.subr.bf16.mxu0 0
        %2012 = vmatpush2.bf16.xpose.msra.mxu0 0
        %2013 = vmatprep.mubr.bf16.mxu0 0
        %2014 = vmatmul.mubr.bf16.gmra.mxu0 %v1746
        %v2015 = vpop.f32.mrf.mxu0
        %v2016 = vadd.f32 0.0, %v2015
        %v2017 = vpop.f32.mrf.mxu0
        %v2018 = vpop.f32.mrf.mxu0
        %v2019 = vpop.f32.mrf.mxu0
        %2020 = vdwg.mxu0
        %2022 = vrot.lane.b32.xlu0 %v876, 96
        %v2023 = vpop.permute.xlu0 %2022
        %v2025 = vsel %vm907, %v2023, 0
        %2027 = vmatprep.subr.bf16.mxu0 0
        %2028 = vmatpush1.bf16.xpose.msra.mxu0 0
        %2029 = vmatprep.subr.bf16.mxu0 0
        %2030 = vmatpush1.bf16.xpose.msra.mxu0 0
        %2031 = vmatprep.subr.bf16.mxu0 0
        %2032 = vmatpush1.bf16.xpose.msra.mxu0 0
        %2033 = vmatprep.subr.bf16.mxu0 0
        %2034 = vmatpush1.bf16.xpose.msra.mxu0 0
        %2035 = vmatprep.subr.bf16.mxu0 0
        %2036 = vmatpush1.bf16.xpose.msra.mxu0 0
        %2037 = vmatprep.subr.bf16.mxu0 0
        %2038 = vmatpush1.bf16.xpose.msra.mxu0 0
        %2039 = vmatprep.subr.bf16.mxu0 0
        %2040 = vmatpush1.bf16.xpose.msra.mxu0 0
        %2041 = vmatprep.subr.bf16.mxu0 0
        %2042 = vmatpush1.bf16.xpose.msra.mxu0 %v2025
        %2043 = vmatprep.subr.bf16.mxu0 0
        %2044 = vmatpush2.bf16.xpose.msra.mxu0 0
        %2045 = vmatprep.subr.bf16.mxu0 0
        %2046 = vmatpush2.bf16.xpose.msra.mxu0 0
        %2047 = vmatprep.subr.bf16.mxu0 0
        %2048 = vmatpush2.bf16.xpose.msra.mxu0 0
        %2049 = vmatprep.subr.bf16.mxu0 0
        %2050 = vmatpush2.bf16.xpose.msra.mxu0 0
        %2051 = vmatprep.subr.bf16.mxu0 0
        %2052 = vmatpush2.bf16.xpose.msra.mxu0 0
        %2053 = vmatprep.subr.bf16.mxu0 0
        %2054 = vmatpush2.bf16.xpose.msra.mxu0 0
        %2055 = vmatprep.subr.bf16.mxu0 0
        %2056 = vmatpush2.bf16.xpose.msra.mxu0 0
        %2057 = vmatprep.subr.bf16.mxu0 0
        %2058 = vmatpush2.bf16.xpose.msra.mxu0 0
        %2059 = vmatprep.mubr.bf16.mxu0 0
        %2060 = vmatmul.mubr.bf16.gmra.mxu0 %v1746
        %v2061 = vpop.f32.mrf.mxu0
        %v2062 = vadd.f32 0.0, %v2061
        %v2063 = vpop.f32.mrf.mxu0
        %v2064 = vpop.f32.mrf.mxu0
        %v2065 = vpop.f32.mrf.mxu0
        %2066 = vdwg.mxu0
        %2068 = vrot.lane.b32.xlu0 %v877, 96
        %v2069 = vpop.permute.xlu0 %2068
        %v2071 = vsel %vm907, %v2069, 0
        %2073 = vmatprep.subr.bf16.mxu0 0
        %2074 = vmatpush1.bf16.xpose.msra.mxu0 0
        %2075 = vmatprep.subr.bf16.mxu0 0
        %2076 = vmatpush1.bf16.xpose.msra.mxu0 0
        %2077 = vmatprep.subr.bf16.mxu0 0
        %2078 = vmatpush1.bf16.xpose.msra.mxu0 0
        %2079 = vmatprep.subr.bf16.mxu0 0
        %2080 = vmatpush1.bf16.xpose.msra.mxu0 0
        %2081 = vmatprep.subr.bf16.mxu0 0
        %2082 = vmatpush1.bf16.xpose.msra.mxu0 0
        %2083 = vmatprep.subr.bf16.mxu0 0
        %2084 = vmatpush1.bf16.xpose.msra.mxu0 0
        %2085 = vmatprep.subr.bf16.mxu0 0
        %2086 = vmatpush1.bf16.xpose.msra.mxu0 0
        %2087 = vmatprep.subr.bf16.mxu0 0
        %2088 = vmatpush1.bf16.xpose.msra.mxu0 %v2071
        %2089 = vmatprep.subr.bf16.mxu0 0
        %2090 = vmatpush2.bf16.xpose.msra.mxu0 0
        %2091 = vmatprep.subr.bf16.mxu0 0
        %2092 = vmatpush2.bf16.xpose.msra.mxu0 0
        %2093 = vmatprep.subr.bf16.mxu0 0
        %2094 = vmatpush2.bf16.xpose.msra.mxu0 0
        %2095 = vmatprep.subr.bf16.mxu0 0
        %2096 = vmatpush2.bf16.xpose.msra.mxu0 0
        %2097 = vmatprep.subr.bf16.mxu0 0
        %2098 = vmatpush2.bf16.xpose.msra.mxu0 0
        %2099 = vmatprep.subr.bf16.mxu0 0
        %2100 = vmatpush2.bf16.xpose.msra.mxu0 0
        %2101 = vmatprep.subr.bf16.mxu0 0
        %2102 = vmatpush2.bf16.xpose.msra.mxu0 0
        %2103 = vmatprep.subr.bf16.mxu0 0
        %2104 = vmatpush2.bf16.xpose.msra.mxu0 0
        %2105 = vmatprep.mubr.bf16.mxu0 0
        %2106 = vmatmul.mubr.bf16.gmra.mxu0 %v1746
        %v2107 = vpop.f32.mrf.mxu0
        %v2108 = vadd.f32 0.0, %v2107
        %v2109 = vpop.f32.mrf.mxu0
        %v2110 = vpop.f32.mrf.mxu0
        %v2111 = vpop.f32.mrf.mxu0
        %2112 = vdwg.mxu0
        %v2113 = vsel %vm1255, %v1786, -inf
        %2114 = vmax.xlane.f32.xlu0 %v2113
        %v2115 = vpop.xlane.xlu0 %2114
        %v2116 = vsel %vm1255, %v1832, -inf
        %2117 = vmax.xlane.f32.xlu0 %v2116
        %v2118 = vpop.xlane.xlu0 %2117
        %v2119 = vsel %vm1255, %v1878, -inf
        %2120 = vmax.xlane.f32.xlu0 %v2119
        %v2121 = vpop.xlane.xlu0 %2120
        %v2122 = vsel %vm1255, %v1924, -inf
        %2123 = vmax.xlane.f32.xlu0 %v2122
        %v2124 = vpop.xlane.xlu0 %2123
        %v2125 = vsel %vm1255, %v1970, -inf
        %2126 = vmax.xlane.f32.xlu0 %v2125
        %v2127 = vpop.xlane.xlu0 %2126
        %v2128 = vsel %vm1255, %v2016, -inf
        %2129 = vmax.xlane.f32.xlu0 %v2128
        %v2130 = vpop.xlane.xlu0 %2129
        %v2131 = vsel %vm1255, %v2062, -inf
        %2132 = vmax.xlane.f32.xlu0 %v2131
        %v2133 = vpop.xlane.xlu0 %2132
        %v2134 = vsel %vm1255, %v2108, -inf
        %2135 = vmax.xlane.f32.xlu0 %v2134
        %v2136 = vpop.xlane.xlu0 %2135
        %v2137 = vsub.f32 %v1786, %v2115
        %v2138 = vsub.f32 %v1832, %v2118
        %v2139 = vsub.f32 %v1878, %v2121
        %v2140 = vsub.f32 %v1924, %v2124
        %v2141 = vsub.f32 %v1970, %v2127
        %v2142 = vsub.f32 %v2016, %v2130
        %v2143 = vsub.f32 %v2062, %v2133
        %v2144 = vsub.f32 %v2108, %v2136
        %v2145 = vmul.f32 %v2137, 1.442695
        %v2146 = vpow.pop %v2145
        %v2147 = vmul.f32 %v2138, 1.442695
        %v2148 = vpow.pop %v2147
        %v2149 = vmul.f32 %v2139, 1.442695
        %v2150 = vpow.pop %v2149
        %v2151 = vmul.f32 %v2140, 1.442695
        %v2152 = vpow.pop %v2151
        %v2153 = vmul.f32 %v2141, 1.442695
        %v2154 = vpow.pop %v2153
        %v2155 = vmul.f32 %v2142, 1.442695
        %v2156 = vpow.pop %v2155
        %v2157 = vmul.f32 %v2143, 1.442695
        %v2158 = vpow.pop %v2157
        %v2159 = vmul.f32 %v2144, 1.442695
        %v2160 = vpow.pop %v2159
        %v2161 = vsel %vm1255, %v2146, 0.0
        %2162 = vadd.xlane.f32.xlu0 %v2161
        %v2163 = vpop.xlane.xlu0 %2162
        %v2164 = vsel %vm1255, %v2148, 0.0
        %2165 = vadd.xlane.f32.xlu0 %v2164
        %v2166 = vpop.xlane.xlu0 %2165
        %v2167 = vsel %vm1255, %v2150, 0.0
        %2168 = vadd.xlane.f32.xlu0 %v2167
        %v2169 = vpop.xlane.xlu0 %2168
        %v2170 = vsel %vm1255, %v2152, 0.0
        %2171 = vadd.xlane.f32.xlu0 %v2170
        %v2172 = vpop.xlane.xlu0 %2171
        %v2173 = vsel %vm1255, %v2154, 0.0
        %2174 = vadd.xlane.f32.xlu0 %v2173
        %v2175 = vpop.xlane.xlu0 %2174
        %v2176 = vsel %vm1255, %v2156, 0.0
        %2177 = vadd.xlane.f32.xlu0 %v2176
        %v2178 = vpop.xlane.xlu0 %2177
        %v2179 = vsel %vm1255, %v2158, 0.0
        %2180 = vadd.xlane.f32.xlu0 %v2179
        %v2181 = vpop.xlane.xlu0 %2180
        %v2182 = vsel %vm1255, %v2160, 0.0
        %2183 = vadd.xlane.f32.xlu0 %v2182
        %v2184 = vpop.xlane.xlu0 %2183
        %v2185 = vrcp.pop %v2163
        %v2186 = vmul.f32 %v2146, %v2185
        %v2187 = vrcp.pop %v2166
        %v2188 = vmul.f32 %v2148, %v2187
        %v2189 = vrcp.pop %v2169
        %v2190 = vmul.f32 %v2150, %v2189
        %v2191 = vrcp.pop %v2172
        %v2192 = vmul.f32 %v2152, %v2191
        %v2193 = vrcp.pop %v2175
        %v2194 = vmul.f32 %v2154, %v2193
        %v2195 = vrcp.pop %v2178
        %v2196 = vmul.f32 %v2156, %v2195
        %v2197 = vrcp.pop %v2181
        %v2198 = vmul.f32 %v2158, %v2197
        %v2199 = vrcp.pop %v2184
        %v2200 = vmul.f32 %v2160, %v2199
        %v2201 = vpack.c.bf16 %v2186, %v2186
        %v2202 = vpack.c.bf16 %v2188, %v2188
        %v2203 = vpack.c.bf16 %v2190, %v2190
        %v2204 = vpack.c.bf16 %v2192, %v2192
        %v2205 = vpack.c.bf16 %v2194, %v2194
        %v2206 = vpack.c.bf16 %v2196, %v2196
        %v2207 = vpack.c.bf16 %v2198, %v2198
        %v2208 = vpack.c.bf16 %v2200, %v2200
        %2210 = vrot.lane.b32.xlu0 %v898, 96
        %v2211 = vpop.permute.xlu0 %2210
        %v2214 = vsel %vm1255, %v2201, 0
        %2216 = vmatprep.subr.bf16.mxu0 0
        %2217 = vmatpush1.bf16.msra.mxu0 0
        %2218 = vmatprep.subr.bf16.mxu0 0
        %2219 = vmatpush1.bf16.msra.mxu0 0
        %2220 = vmatprep.subr.bf16.mxu0 0
        %2221 = vmatpush1.bf16.msra.mxu0 0
        %2222 = vmatprep.subr.bf16.mxu0 0
        %2223 = vmatpush1.bf16.msra.mxu0 0
        %2224 = vmatprep.subr.bf16.mxu0 0
        %2225 = vmatpush1.bf16.msra.mxu0 0
        %2226 = vmatprep.subr.bf16.mxu0 0
        %2227 = vmatpush1.bf16.msra.mxu0 0
        %2228 = vmatprep.subr.bf16.mxu0 0
        %2229 = vmatpush1.bf16.msra.mxu0 0
        %2230 = vmatprep.subr.bf16.mxu0 0
        %2231 = vmatpush1.bf16.msra.mxu0 %v2211
        %2232 = vmatprep.subr.bf16.mxu0 0
        %2233 = vmatpush2.bf16.msra.mxu0 0
        %2234 = vmatprep.subr.bf16.mxu0 0
        %2235 = vmatpush2.bf16.msra.mxu0 0
        %2236 = vmatprep.subr.bf16.mxu0 0
        %2237 = vmatpush2.bf16.msra.mxu0 0
        %2238 = vmatprep.subr.bf16.mxu0 0
        %2239 = vmatpush2.bf16.msra.mxu0 0
        %2240 = vmatprep.subr.bf16.mxu0 0
        %2241 = vmatpush2.bf16.msra.mxu0 0
        %2242 = vmatprep.subr.bf16.mxu0 0
        %2243 = vmatpush2.bf16.msra.mxu0 0
        %2244 = vmatprep.subr.bf16.mxu0 0
        %2245 = vmatpush2.bf16.msra.mxu0 0
        %2246 = vmatprep.subr.bf16.mxu0 0
        %2247 = vmatpush2.bf16.msra.mxu0 0
        %2248 = vmatprep.mubr.bf16.mxu0 0
        %2249 = vmatmul.mubr.bf16.gmra.mxu0 %v2214
        %v2250 = vpop.f32.mrf.mxu0
        %v2251 = vadd.f32 0.0, %v2250
        %v2252 = vpop.f32.mrf.mxu0
        %v2253 = vpop.f32.mrf.mxu0
        %v2254 = vpop.f32.mrf.mxu0
        %2255 = vdwg.mxu0
        %2257 = vrot.lane.b32.xlu0 %v899, 96
        %v2258 = vpop.permute.xlu0 %2257
        %v2261 = vsel %vm1255, %v2202, 0
        %2263 = vmatprep.subr.bf16.mxu0 0
        %2264 = vmatpush1.bf16.msra.mxu0 0
        %2265 = vmatprep.subr.bf16.mxu0 0
        %2266 = vmatpush1.bf16.msra.mxu0 0
        %2267 = vmatprep.subr.bf16.mxu0 0
        %2268 = vmatpush1.bf16.msra.mxu0 0
        %2269 = vmatprep.subr.bf16.mxu0 0
        %2270 = vmatpush1.bf16.msra.mxu0 0
        %2271 = vmatprep.subr.bf16.mxu0 0
        %2272 = vmatpush1.bf16.msra.mxu0 0
        %2273 = vmatprep.subr.bf16.mxu0 0
        %2274 = vmatpush1.bf16.msra.mxu0 0
        %2275 = vmatprep.subr.bf16.mxu0 0
        %2276 = vmatpush1.bf16.msra.mxu0 0
        %2277 = vmatprep.subr.bf16.mxu0 0
        %2278 = vmatpush1.bf16.msra.mxu0 %v2258
        %2279 = vmatprep.subr.bf16.mxu0 0
        %2280 = vmatpush2.bf16.msra.mxu0 0
        %2281 = vmatprep.subr.bf16.mxu0 0
        %2282 = vmatpush2.bf16.msra.mxu0 0
        %2283 = vmatprep.subr.bf16.mxu0 0
        %2284 = vmatpush2.bf16.msra.mxu0 0
        %2285 = vmatprep.subr.bf16.mxu0 0
        %2286 = vmatpush2.bf16.msra.mxu0 0
        %2287 = vmatprep.subr.bf16.mxu0 0
        %2288 = vmatpush2.bf16.msra.mxu0 0
        %2289 = vmatprep.subr.bf16.mxu0 0
        %2290 = vmatpush2.bf16.msra.mxu0 0
        %2291 = vmatprep.subr.bf16.mxu0 0
        %2292 = vmatpush2.bf16.msra.mxu0 0
        %2293 = vmatprep.subr.bf16.mxu0 0
        %2294 = vmatpush2.bf16.msra.mxu0 0
        %2295 = vmatprep.mubr.bf16.mxu0 0
        %2296 = vmatmul.mubr.bf16.gmra.mxu0 %v2261
        %v2297 = vpop.f32.mrf.mxu0
        %v2298 = vadd.f32 0.0, %v2297
        %v2299 = vpop.f32.mrf.mxu0
        %v2300 = vpop.f32.mrf.mxu0
        %v2301 = vpop.f32.mrf.mxu0
        %2302 = vdwg.mxu0
        %2304 = vrot.lane.b32.xlu0 %v900, 96
        %v2305 = vpop.permute.xlu0 %2304
        %v2308 = vsel %vm1255, %v2203, 0
        %2310 = vmatprep.subr.bf16.mxu0 0
        %2311 = vmatpush1.bf16.msra.mxu0 0
        %2312 = vmatprep.subr.bf16.mxu0 0
        %2313 = vmatpush1.bf16.msra.mxu0 0
        %2314 = vmatprep.subr.bf16.mxu0 0
        %2315 = vmatpush1.bf16.msra.mxu0 0
        %2316 = vmatprep.subr.bf16.mxu0 0
        %2317 = vmatpush1.bf16.msra.mxu0 0
        %2318 = vmatprep.subr.bf16.mxu0 0
        %2319 = vmatpush1.bf16.msra.mxu0 0
        %2320 = vmatprep.subr.bf16.mxu0 0
        %2321 = vmatpush1.bf16.msra.mxu0 0
        %2322 = vmatprep.subr.bf16.mxu0 0
        %2323 = vmatpush1.bf16.msra.mxu0 0
        %2324 = vmatprep.subr.bf16.mxu0 0
        %2325 = vmatpush1.bf16.msra.mxu0 %v2305
        %2326 = vmatprep.subr.bf16.mxu0 0
        %2327 = vmatpush2.bf16.msra.mxu0 0
        %2328 = vmatprep.subr.bf16.mxu0 0
        %2329 = vmatpush2.bf16.msra.mxu0 0
        %2330 = vmatprep.subr.bf16.mxu0 0
        %2331 = vmatpush2.bf16.msra.mxu0 0
        %2332 = vmatprep.subr.bf16.mxu0 0
        %2333 = vmatpush2.bf16.msra.mxu0 0
        %2334 = vmatprep.subr.bf16.mxu0 0
        %2335 = vmatpush2.bf16.msra.mxu0 0
        %2336 = vmatprep.subr.bf16.mxu0 0
        %2337 = vmatpush2.bf16.msra.mxu0 0
        %2338 = vmatprep.subr.bf16.mxu0 0
        %2339 = vmatpush2.bf16.msra.mxu0 0
        %2340 = vmatprep.subr.bf16.mxu0 0
        %2341 = vmatpush2.bf16.msra.mxu0 0
        %2342 = vmatprep.mubr.bf16.mxu0 0
        %2343 = vmatmul.mubr.bf16.gmra.mxu0 %v2308
        %v2344 = vpop.f32.mrf.mxu0
        %v2345 = vadd.f32 0.0, %v2344
        %v2346 = vpop.f32.mrf.mxu0
        %v2347 = vpop.f32.mrf.mxu0
        %v2348 = vpop.f32.mrf.mxu0
        %2349 = vdwg.mxu0
        %2351 = vrot.lane.b32.xlu0 %v901, 96
        %v2352 = vpop.permute.xlu0 %2351
        %v2355 = vsel %vm1255, %v2204, 0
        %2357 = vmatprep.subr.bf16.mxu0 0
        %2358 = vmatpush1.bf16.msra.mxu0 0
        %2359 = vmatprep.subr.bf16.mxu0 0
        %2360 = vmatpush1.bf16.msra.mxu0 0
        %2361 = vmatprep.subr.bf16.mxu0 0
        %2362 = vmatpush1.bf16.msra.mxu0 0
        %2363 = vmatprep.subr.bf16.mxu0 0
        %2364 = vmatpush1.bf16.msra.mxu0 0
        %2365 = vmatprep.subr.bf16.mxu0 0
        %2366 = vmatpush1.bf16.msra.mxu0 0
        %2367 = vmatprep.subr.bf16.mxu0 0
        %2368 = vmatpush1.bf16.msra.mxu0 0
        %2369 = vmatprep.subr.bf16.mxu0 0
        %2370 = vmatpush1.bf16.msra.mxu0 0
        %2371 = vmatprep.subr.bf16.mxu0 0
        %2372 = vmatpush1.bf16.msra.mxu0 %v2352
        %2373 = vmatprep.subr.bf16.mxu0 0
        %2374 = vmatpush2.bf16.msra.mxu0 0
        %2375 = vmatprep.subr.bf16.mxu0 0
        %2376 = vmatpush2.bf16.msra.mxu0 0
        %2377 = vmatprep.subr.bf16.mxu0 0
        %2378 = vmatpush2.bf16.msra.mxu0 0
        %2379 = vmatprep.subr.bf16.mxu0 0
        %2380 = vmatpush2.bf16.msra.mxu0 0
        %2381 = vmatprep.subr.bf16.mxu0 0
        %2382 = vmatpush2.bf16.msra.mxu0 0
        %2383 = vmatprep.subr.bf16.mxu0 0
        %2384 = vmatpush2.bf16.msra.mxu0 0
        %2385 = vmatprep.subr.bf16.mxu0 0
        %2386 = vmatpush2.bf16.msra.mxu0 0
        %2387 = vmatprep.subr.bf16.mxu0 0
        %2388 = vmatpush2.bf16.msra.mxu0 0
        %2389 = vmatprep.mubr.bf16.mxu0 0
        %2390 = vmatmul.mubr.bf16.gmra.mxu0 %v2355
        %v2391 = vpop.f32.mrf.mxu0
        %v2392 = vadd.f32 0.0, %v2391
        %v2393 = vpop.f32.mrf.mxu0
        %v2394 = vpop.f32.mrf.mxu0
        %v2395 = vpop.f32.mrf.mxu0
        %2396 = vdwg.mxu0
        %2398 = vrot.lane.b32.xlu0 %v902, 96
        %v2399 = vpop.permute.xlu0 %2398
        %v2402 = vsel %vm1255, %v2205, 0
        %2404 = vmatprep.subr.bf16.mxu0 0
        %2405 = vmatpush1.bf16.msra.mxu0 0
        %2406 = vmatprep.subr.bf16.mxu0 0
        %2407 = vmatpush1.bf16.msra.mxu0 0
        %2408 = vmatprep.subr.bf16.mxu0 0
        %2409 = vmatpush1.bf16.msra.mxu0 0
        %2410 = vmatprep.subr.bf16.mxu0 0
        %2411 = vmatpush1.bf16.msra.mxu0 0
        %2412 = vmatprep.subr.bf16.mxu0 0
        %2413 = vmatpush1.bf16.msra.mxu0 0
        %2414 = vmatprep.subr.bf16.mxu0 0
        %2415 = vmatpush1.bf16.msra.mxu0 0
        %2416 = vmatprep.subr.bf16.mxu0 0
        %2417 = vmatpush1.bf16.msra.mxu0 0
        %2418 = vmatprep.subr.bf16.mxu0 0
        %2419 = vmatpush1.bf16.msra.mxu0 %v2399
        %2420 = vmatprep.subr.bf16.mxu0 0
        %2421 = vmatpush2.bf16.msra.mxu0 0
        %2422 = vmatprep.subr.bf16.mxu0 0
        %2423 = vmatpush2.bf16.msra.mxu0 0
        %2424 = vmatprep.subr.bf16.mxu0 0
        %2425 = vmatpush2.bf16.msra.mxu0 0
        %2426 = vmatprep.subr.bf16.mxu0 0
        %2427 = vmatpush2.bf16.msra.mxu0 0
        %2428 = vmatprep.subr.bf16.mxu0 0
        %2429 = vmatpush2.bf16.msra.mxu0 0
        %2430 = vmatprep.subr.bf16.mxu0 0
        %2431 = vmatpush2.bf16.msra.mxu0 0
        %2432 = vmatprep.subr.bf16.mxu0 0
        %2433 = vmatpush2.bf16.msra.mxu0 0
        %2434 = vmatprep.subr.bf16.mxu0 0
        %2435 = vmatpush2.bf16.msra.mxu0 0
        %2436 = vmatprep.mubr.bf16.mxu0 0
        %2437 = vmatmul.mubr.bf16.gmra.mxu0 %v2402
        %v2438 = vpop.f32.mrf.mxu0
        %v2439 = vadd.f32 0.0, %v2438
        %v2440 = vpop.f32.mrf.mxu0
        %v2441 = vpop.f32.mrf.mxu0
        %v2442 = vpop.f32.mrf.mxu0
        %2443 = vdwg.mxu0
        %2445 = vrot.lane.b32.xlu0 %v903, 96
        %v2446 = vpop.permute.xlu0 %2445
        %v2449 = vsel %vm1255, %v2206, 0
        %2451 = vmatprep.subr.bf16.mxu0 0
        %2452 = vmatpush1.bf16.msra.mxu0 0
        %2453 = vmatprep.subr.bf16.mxu0 0
        %2454 = vmatpush1.bf16.msra.mxu0 0
        %2455 = vmatprep.subr.bf16.mxu0 0
        %2456 = vmatpush1.bf16.msra.mxu0 0
        %2457 = vmatprep.subr.bf16.mxu0 0
        %2458 = vmatpush1.bf16.msra.mxu0 0
        %2459 = vmatprep.subr.bf16.mxu0 0
        %2460 = vmatpush1.bf16.msra.mxu0 0
        %2461 = vmatprep.subr.bf16.mxu0 0
        %2462 = vmatpush1.bf16.msra.mxu0 0
        %2463 = vmatprep.subr.bf16.mxu0 0
        %2464 = vmatpush1.bf16.msra.mxu0 0
        %2465 = vmatprep.subr.bf16.mxu0 0
        %2466 = vmatpush1.bf16.msra.mxu0 %v2446
        %2467 = vmatprep.subr.bf16.mxu0 0
        %2468 = vmatpush2.bf16.msra.mxu0 0
        %2469 = vmatprep.subr.bf16.mxu0 0
        %2470 = vmatpush2.bf16.msra.mxu0 0
        %2471 = vmatprep.subr.bf16.mxu0 0
        %2472 = vmatpush2.bf16.msra.mxu0 0
        %2473 = vmatprep.subr.bf16.mxu0 0
        %2474 = vmatpush2.bf16.msra.mxu0 0
        %2475 = vmatprep.subr.bf16.mxu0 0
        %2476 = vmatpush2.bf16.msra.mxu0 0
        %2477 = vmatprep.subr.bf16.mxu0 0
        %2478 = vmatpush2.bf16.msra.mxu0 0
        %2479 = vmatprep.subr.bf16.mxu0 0
        %2480 = vmatpush2.bf16.msra.mxu0 0
        %2481 = vmatprep.subr.bf16.mxu0 0
        %2482 = vmatpush2.bf16.msra.mxu0 0
        %2483 = vmatprep.mubr.bf16.mxu0 0
        %2484 = vmatmul.mubr.bf16.gmra.mxu0 %v2449
        %v2485 = vpop.f32.mrf.mxu0
        %v2486 = vadd.f32 0.0, %v2485
        %v2487 = vpop.f32.mrf.mxu0
        %v2488 = vpop.f32.mrf.mxu0
        %v2489 = vpop.f32.mrf.mxu0
        %2490 = vdwg.mxu0
        %2492 = vrot.lane.b32.xlu0 %v904, 96
        %v2493 = vpop.permute.xlu0 %2492
        %v2496 = vsel %vm1255, %v2207, 0
        %2498 = vmatprep.subr.bf16.mxu0 0
        %2499 = vmatpush1.bf16.msra.mxu0 0
        %2500 = vmatprep.subr.bf16.mxu0 0
        %2501 = vmatpush1.bf16.msra.mxu0 0
        %2502 = vmatprep.subr.bf16.mxu0 0
        %2503 = vmatpush1.bf16.msra.mxu0 0
        %2504 = vmatprep.subr.bf16.mxu0 0
        %2505 = vmatpush1.bf16.msra.mxu0 0
        %2506 = vmatprep.subr.bf16.mxu0 0
        %2507 = vmatpush1.bf16.msra.mxu0 0
        %2508 = vmatprep.subr.bf16.mxu0 0
        %2509 = vmatpush1.bf16.msra.mxu0 0
        %2510 = vmatprep.subr.bf16.mxu0 0
        %2511 = vmatpush1.bf16.msra.mxu0 0
        %2512 = vmatprep.subr.bf16.mxu0 0
        %2513 = vmatpush1.bf16.msra.mxu0 %v2493
        %2514 = vmatprep.subr.bf16.mxu0 0
        %2515 = vmatpush2.bf16.msra.mxu0 0
        %2516 = vmatprep.subr.bf16.mxu0 0
        %2517 = vmatpush2.bf16.msra.mxu0 0
        %2518 = vmatprep.subr.bf16.mxu0 0
        %2519 = vmatpush2.bf16.msra.mxu0 0
        %2520 = vmatprep.subr.bf16.mxu0 0
        %2521 = vmatpush2.bf16.msra.mxu0 0
        %2522 = vmatprep.subr.bf16.mxu0 0
        %2523 = vmatpush2.bf16.msra.mxu0 0
        %2524 = vmatprep.subr.bf16.mxu0 0
        %2525 = vmatpush2.bf16.msra.mxu0 0
        %2526 = vmatprep.subr.bf16.mxu0 0
        %2527 = vmatpush2.bf16.msra.mxu0 0
        %2528 = vmatprep.subr.bf16.mxu0 0
        %2529 = vmatpush2.bf16.msra.mxu0 0
        %2530 = vmatprep.mubr.bf16.mxu0 0
        %2531 = vmatmul.mubr.bf16.gmra.mxu0 %v2496
        %v2532 = vpop.f32.mrf.mxu0
        %v2533 = vadd.f32 0.0, %v2532
        %v2534 = vpop.f32.mrf.mxu0
        %v2535 = vpop.f32.mrf.mxu0
        %v2536 = vpop.f32.mrf.mxu0
        %2537 = vdwg.mxu0
        %2539 = vrot.lane.b32.xlu0 %v905, 96
        %v2540 = vpop.permute.xlu0 %2539
        %v2543 = vsel %vm1255, %v2208, 0
        %2545 = vmatprep.subr.bf16.mxu0 0
        %2546 = vmatpush1.bf16.msra.mxu0 0
        %2547 = vmatprep.subr.bf16.mxu0 0
        %2548 = vmatpush1.bf16.msra.mxu0 0
        %2549 = vmatprep.subr.bf16.mxu0 0
        %2550 = vmatpush1.bf16.msra.mxu0 0
        %2551 = vmatprep.subr.bf16.mxu0 0
        %2552 = vmatpush1.bf16.msra.mxu0 0
        %2553 = vmatprep.subr.bf16.mxu0 0
        %2554 = vmatpush1.bf16.msra.mxu0 0
        %2555 = vmatprep.subr.bf16.mxu0 0
        %2556 = vmatpush1.bf16.msra.mxu0 0
        %2557 = vmatprep.subr.bf16.mxu0 0
        %2558 = vmatpush1.bf16.msra.mxu0 0
        %2559 = vmatprep.subr.bf16.mxu0 0
        %2560 = vmatpush1.bf16.msra.mxu0 %v2540
        %2561 = vmatprep.subr.bf16.mxu0 0
        %2562 = vmatpush2.bf16.msra.mxu0 0
        %2563 = vmatprep.subr.bf16.mxu0 0
        %2564 = vmatpush2.bf16.msra.mxu0 0
        %2565 = vmatprep.subr.bf16.mxu0 0
        %2566 = vmatpush2.bf16.msra.mxu0 0
        %2567 = vmatprep.subr.bf16.mxu0 0
        %2568 = vmatpush2.bf16.msra.mxu0 0
        %2569 = vmatprep.subr.bf16.mxu0 0
        %2570 = vmatpush2.bf16.msra.mxu0 0
        %2571 = vmatprep.subr.bf16.mxu0 0
        %2572 = vmatpush2.bf16.msra.mxu0 0
        %2573 = vmatprep.subr.bf16.mxu0 0
        %2574 = vmatpush2.bf16.msra.mxu0 0
        %2575 = vmatprep.subr.bf16.mxu0 0
        %2576 = vmatpush2.bf16.msra.mxu0 0
        %2577 = vmatprep.mubr.bf16.mxu0 0
        %2578 = vmatmul.mubr.bf16.gmra.mxu0 %v2543
        %v2579 = vpop.f32.mrf.mxu0
        %v2580 = vadd.f32 0.0, %v2579
        %v2581 = vpop.f32.mrf.mxu0
        %v2582 = vpop.f32.mrf.mxu0
        %v2583 = vpop.f32.mrf.mxu0
        %2584 = vdwg.mxu0
        %v2585 = vpack.c.bf16 %v2298, %v2251
        %v2586 = vpack.c.bf16 %v2392, %v2345
        %v2587 = vpack.c.bf16 %v2486, %v2439
        %v2588 = vpack.c.bf16 %v2580, %v2533
        %v2593 = vunpack.c.l.b16 %v2585
        %v2594 = vunpack.c.h.b16 %v2585
        %v2595 = vunpack.c.l.b16 %v2586
        %v2596 = vunpack.c.h.b16 %v2586
        %v2597 = vunpack.c.l.b16 %v2587
        %v2598 = vunpack.c.h.b16 %v2587
        %v2599 = vunpack.c.l.b16 %v2588
        %v2600 = vunpack.c.h.b16 %v2588
        %v2601 = vpack.c.b16 %v2593, %v2593
        %v2602 = vpack.c.b16 %v2594, %v2594
        %v2603 = vpack.c.b16 %v2595, %v2595
        %v2604 = vpack.c.b16 %v2596, %v2596
        %v2605 = vpack.c.b16 %v2597, %v2597
        %v2606 = vpack.c.b16 %v2598, %v2598
        %v2607 = vpack.c.b16 %v2599, %v2599
        %v2608 = vpack.c.b16 %v2600, %v2600
        %2609 = vrot.lane.b32.xlu0 %v2601, 32
        %v2610 = vpop.permute.xlu0 %2609
        %2611 = vrot.lane.b32.xlu0 %v2602, 32
        %v2612 = vpop.permute.xlu0 %2611
        %2613 = vrot.lane.b32.xlu0 %v2603, 32
        %v2614 = vpop.permute.xlu0 %2613
        %2615 = vrot.lane.b32.xlu0 %v2604, 32
        %v2616 = vpop.permute.xlu0 %2615
        %2617 = vrot.lane.b32.xlu0 %v2605, 32
        %v2618 = vpop.permute.xlu0 %2617
        %2619 = vrot.lane.b32.xlu0 %v2606, 32
        %v2620 = vpop.permute.xlu0 %2619
        %2621 = vrot.lane.b32.xlu0 %v2607, 32
        %v2622 = vpop.permute.xlu0 %2621
        %2623 = vrot.lane.b32.xlu0 %v2608, 32
        %v2624 = vpop.permute.xlu0 %2623
        %vm2633 = vcmask 519424
        %2634 = vst.msk [vmem:[#allocation2] sm:$0xf] %vm2633, %v2610
        %2635 = vst.msk [vmem:[#allocation2 + $0x4] sm:$0xf] %vm2633, %v2612
        %2636 = vst.msk [vmem:[#allocation2 + $0x8] sm:$0xf] %vm2633, %v2614
        %2637 = vst.msk [vmem:[#allocation2 + $0xc] sm:$0xf] %vm2633, %v2616
        %2638 = vst.msk [vmem:[#allocation2 + $0x10] sm:$0xf] %vm2633, %v2618
        %2639 = vst.msk [vmem:[#allocation2 + $0x14] sm:$0xf] %vm2633, %v2620
        %2640 = vst.msk [vmem:[#allocation2 + $0x18] sm:$0xf] %vm2633, %v2622
        %2641 = vst.msk [vmem:[#allocation2 + $0x1c] sm:$0xf] %vm2633, %v2624
        %2642 = vrot.lane.b32.xlu0 %v1739, 64
        %v2643 = vpop.permute.xlu0 %2642
        %2644 = vrot.lane.b32.xlu0 %v870, 64
        %v2645 = vpop.permute.xlu0 %2644
        %v2647 = vsel %vm907, %v2643, 0
        %v2650 = vsel %vm907, %v2645, 0
        %2652 = vmatprep.subr.bf16.mxu0 0
        %2653 = vmatpush1.bf16.xpose.msra.mxu0 0
        %2654 = vmatprep.subr.bf16.mxu0 0
        %2655 = vmatpush1.bf16.xpose.msra.mxu0 0
        %2656 = vmatprep.subr.bf16.mxu0 0
        %2657 = vmatpush1.bf16.xpose.msra.mxu0 0
        %2658 = vmatprep.subr.bf16.mxu0 0
        %2659 = vmatpush1.bf16.xpose.msra.mxu0 0
        %2660 = vmatprep.subr.bf16.mxu0 0
        %2661 = vmatpush1.bf16.xpose.msra.mxu0 0
        %2662 = vmatprep.subr.bf16.mxu0 0
        %2663 = vmatpush1.bf16.xpose.msra.mxu0 0
        %2664 = vmatprep.subr.bf16.mxu0 0
        %2665 = vmatpush1.bf16.xpose.msra.mxu0 0
        %2666 = vmatprep.subr.bf16.mxu0 0
        %2667 = vmatpush1.bf16.xpose.msra.mxu0 %v2650
        %2668 = vmatprep.subr.bf16.mxu0 0
        %2669 = vmatpush2.bf16.xpose.msra.mxu0 0
        %2670 = vmatprep.subr.bf16.mxu0 0
        %2671 = vmatpush2.bf16.xpose.msra.mxu0 0
        %2672 = vmatprep.subr.bf16.mxu0 0
        %2673 = vmatpush2.bf16.xpose.msra.mxu0 0
        %2674 = vmatprep.subr.bf16.mxu0 0
        %2675 = vmatpush2.bf16.xpose.msra.mxu0 0
        %2676 = vmatprep.subr.bf16.mxu0 0
        %2677 = vmatpush2.bf16.xpose.msra.mxu0 0
        %2678 = vmatprep.subr.bf16.mxu0 0
        %2679 = vmatpush2.bf16.xpose.msra.mxu0 0
        %2680 = vmatprep.subr.bf16.mxu0 0
        %2681 = vmatpush2.bf16.xpose.msra.mxu0 0
        %2682 = vmatprep.subr.bf16.mxu0 0
        %2683 = vmatpush2.bf16.xpose.msra.mxu0 0
        %2684 = vmatprep.mubr.bf16.mxu0 0
        %2685 = vmatmul.mubr.bf16.gmra.mxu0 %v2647
        %v2686 = vpop.f32.mrf.mxu0
        %v2687 = vadd.f32 0.0, %v2686
        %v2688 = vpop.f32.mrf.mxu0
        %v2689 = vpop.f32.mrf.mxu0
        %v2690 = vpop.f32.mrf.mxu0
        %2691 = vdwg.mxu0
        %2692 = vrot.lane.b32.xlu0 %v871, 64
        %v2693 = vpop.permute.xlu0 %2692
        %v2695 = vsel %vm907, %v2693, 0
        %2697 = vmatprep.subr.bf16.mxu0 0
        %2698 = vmatpush1.bf16.xpose.msra.mxu0 0
        %2699 = vmatprep.subr.bf16.mxu0 0
        %2700 = vmatpush1.bf16.xpose.msra.mxu0 0
        %2701 = vmatprep.subr.bf16.mxu0 0
        %2702 = vmatpush1.bf16.xpose.msra.mxu0 0
        %2703 = vmatprep.subr.bf16.mxu0 0
        %2704 = vmatpush1.bf16.xpose.msra.mxu0 0
        %2705 = vmatprep.subr.bf16.mxu0 0
        %2706 = vmatpush1.bf16.xpose.msra.mxu0 0
        %2707 = vmatprep.subr.bf16.mxu0 0
        %2708 = vmatpush1.bf16.xpose.msra.mxu0 0
        %2709 = vmatprep.subr.bf16.mxu0 0
        %2710 = vmatpush1.bf16.xpose.msra.mxu0 0
        %2711 = vmatprep.subr.bf16.mxu0 0
        %2712 = vmatpush1.bf16.xpose.msra.mxu0 %v2695
        %2713 = vmatprep.subr.bf16.mxu0 0
        %2714 = vmatpush2.bf16.xpose.msra.mxu0 0
        %2715 = vmatprep.subr.bf16.mxu0 0
        %2716 = vmatpush2.bf16.xpose.msra.mxu0 0
        %2717 = vmatprep.subr.bf16.mxu0 0
        %2718 = vmatpush2.bf16.xpose.msra.mxu0 0
        %2719 = vmatprep.subr.bf16.mxu0 0
        %2720 = vmatpush2.bf16.xpose.msra.mxu0 0
        %2721 = vmatprep.subr.bf16.mxu0 0
        %2722 = vmatpush2.bf16.xpose.msra.mxu0 0
        %2723 = vmatprep.subr.bf16.mxu0 0
        %2724 = vmatpush2.bf16.xpose.msra.mxu0 0
        %2725 = vmatprep.subr.bf16.mxu0 0
        %2726 = vmatpush2.bf16.xpose.msra.mxu0 0
        %2727 = vmatprep.subr.bf16.mxu0 0
        %2728 = vmatpush2.bf16.xpose.msra.mxu0 0
        %2729 = vmatprep.mubr.bf16.mxu0 0
        %2730 = vmatmul.mubr.bf16.gmra.mxu0 %v2647
        %v2731 = vpop.f32.mrf.mxu0
        %v2732 = vadd.f32 0.0, %v2731
        %v2733 = vpop.f32.mrf.mxu0
        %v2734 = vpop.f32.mrf.mxu0
        %v2735 = vpop.f32.mrf.mxu0
        %2736 = vdwg.mxu0
        %2737 = vrot.lane.b32.xlu0 %v872, 64
        %v2738 = vpop.permute.xlu0 %2737
        %v2740 = vsel %vm907, %v2738, 0
        %2742 = vmatprep.subr.bf16.mxu0 0
        %2743 = vmatpush1.bf16.xpose.msra.mxu0 0
        %2744 = vmatprep.subr.bf16.mxu0 0
        %2745 = vmatpush1.bf16.xpose.msra.mxu0 0
        %2746 = vmatprep.subr.bf16.mxu0 0
        %2747 = vmatpush1.bf16.xpose.msra.mxu0 0
        %2748 = vmatprep.subr.bf16.mxu0 0
        %2749 = vmatpush1.bf16.xpose.msra.mxu0 0
        %2750 = vmatprep.subr.bf16.mxu0 0
        %2751 = vmatpush1.bf16.xpose.msra.mxu0 0
        %2752 = vmatprep.subr.bf16.mxu0 0
        %2753 = vmatpush1.bf16.xpose.msra.mxu0 0
        %2754 = vmatprep.subr.bf16.mxu0 0
        %2755 = vmatpush1.bf16.xpose.msra.mxu0 0
        %2756 = vmatprep.subr.bf16.mxu0 0
        %2757 = vmatpush1.bf16.xpose.msra.mxu0 %v2740
        %2758 = vmatprep.subr.bf16.mxu0 0
        %2759 = vmatpush2.bf16.xpose.msra.mxu0 0
        %2760 = vmatprep.subr.bf16.mxu0 0
        %2761 = vmatpush2.bf16.xpose.msra.mxu0 0
        %2762 = vmatprep.subr.bf16.mxu0 0
        %2763 = vmatpush2.bf16.xpose.msra.mxu0 0
        %2764 = vmatprep.subr.bf16.mxu0 0
        %2765 = vmatpush2.bf16.xpose.msra.mxu0 0
        %2766 = vmatprep.subr.bf16.mxu0 0
        %2767 = vmatpush2.bf16.xpose.msra.mxu0 0
        %2768 = vmatprep.subr.bf16.mxu0 0
        %2769 = vmatpush2.bf16.xpose.msra.mxu0 0
        %2770 = vmatprep.subr.bf16.mxu0 0
        %2771 = vmatpush2.bf16.xpose.msra.mxu0 0
        %2772 = vmatprep.subr.bf16.mxu0 0
        %2773 = vmatpush2.bf16.xpose.msra.mxu0 0
        %2774 = vmatprep.mubr.bf16.mxu0 0
        %2775 = vmatmul.mubr.bf16.gmra.mxu0 %v2647
        %v2776 = vpop.f32.mrf.mxu0
        %v2777 = vadd.f32 0.0, %v2776
        %v2778 = vpop.f32.mrf.mxu0
        %v2779 = vpop.f32.mrf.mxu0
        %v2780 = vpop.f32.mrf.mxu0
        %2781 = vdwg.mxu0
        %2782 = vrot.lane.b32.xlu0 %v873, 64
        %v2783 = vpop.permute.xlu0 %2782
        %v2785 = vsel %vm907, %v2783, 0
        %2787 = vmatprep.subr.bf16.mxu0 0
        %2788 = vmatpush1.bf16.xpose.msra.mxu0 0
        %2789 = vmatprep.subr.bf16.mxu0 0
        %2790 = vmatpush1.bf16.xpose.msra.mxu0 0
        %2791 = vmatprep.subr.bf16.mxu0 0
        %2792 = vmatpush1.bf16.xpose.msra.mxu0 0
        %2793 = vmatprep.subr.bf16.mxu0 0
        %2794 = vmatpush1.bf16.xpose.msra.mxu0 0
        %2795 = vmatprep.subr.bf16.mxu0 0
        %2796 = vmatpush1.bf16.xpose.msra.mxu0 0
        %2797 = vmatprep.subr.bf16.mxu0 0
        %2798 = vmatpush1.bf16.xpose.msra.mxu0 0
        %2799 = vmatprep.subr.bf16.mxu0 0
        %2800 = vmatpush1.bf16.xpose.msra.mxu0 0
        %2801 = vmatprep.subr.bf16.mxu0 0
        %2802 = vmatpush1.bf16.xpose.msra.mxu0 %v2785
        %2803 = vmatprep.subr.bf16.mxu0 0
        %2804 = vmatpush2.bf16.xpose.msra.mxu0 0
        %2805 = vmatprep.subr.bf16.mxu0 0
        %2806 = vmatpush2.bf16.xpose.msra.mxu0 0
        %2807 = vmatprep.subr.bf16.mxu0 0
        %2808 = vmatpush2.bf16.xpose.msra.mxu0 0
        %2809 = vmatprep.subr.bf16.mxu0 0
        %2810 = vmatpush2.bf16.xpose.msra.mxu0 0
        %2811 = vmatprep.subr.bf16.mxu0 0
        %2812 = vmatpush2.bf16.xpose.msra.mxu0 0
        %2813 = vmatprep.subr.bf16.mxu0 0
        %2814 = vmatpush2.bf16.xpose.msra.mxu0 0
        %2815 = vmatprep.subr.bf16.mxu0 0
        %2816 = vmatpush2.bf16.xpose.msra.mxu0 0
        %2817 = vmatprep.subr.bf16.mxu0 0
        %2818 = vmatpush2.bf16.xpose.msra.mxu0 0
        %2819 = vmatprep.mubr.bf16.mxu0 0
        %2820 = vmatmul.mubr.bf16.gmra.mxu0 %v2647
        %v2821 = vpop.f32.mrf.mxu0
        %v2822 = vadd.f32 0.0, %v2821
        %v2823 = vpop.f32.mrf.mxu0
        %v2824 = vpop.f32.mrf.mxu0
        %v2825 = vpop.f32.mrf.mxu0
        %2826 = vdwg.mxu0
        %2827 = vrot.lane.b32.xlu0 %v874, 64
        %v2828 = vpop.permute.xlu0 %2827
        %v2830 = vsel %vm907, %v2828, 0
        %2832 = vmatprep.subr.bf16.mxu0 0
        %2833 = vmatpush1.bf16.xpose.msra.mxu0 0
        %2834 = vmatprep.subr.bf16.mxu0 0
        %2835 = vmatpush1.bf16.xpose.msra.mxu0 0
        %2836 = vmatprep.subr.bf16.mxu0 0
        %2837 = vmatpush1.bf16.xpose.msra.mxu0 0
        %2838 = vmatprep.subr.bf16.mxu0 0
        %2839 = vmatpush1.bf16.xpose.msra.mxu0 0
        %2840 = vmatprep.subr.bf16.mxu0 0
        %2841 = vmatpush1.bf16.xpose.msra.mxu0 0
        %2842 = vmatprep.subr.bf16.mxu0 0
        %2843 = vmatpush1.bf16.xpose.msra.mxu0 0
        %2844 = vmatprep.subr.bf16.mxu0 0
        %2845 = vmatpush1.bf16.xpose.msra.mxu0 0
        %2846 = vmatprep.subr.bf16.mxu0 0
        %2847 = vmatpush1.bf16.xpose.msra.mxu0 %v2830
        %2848 = vmatprep.subr.bf16.mxu0 0
        %2849 = vmatpush2.bf16.xpose.msra.mxu0 0
        %2850 = vmatprep.subr.bf16.mxu0 0
        %2851 = vmatpush2.bf16.xpose.msra.mxu0 0
        %2852 = vmatprep.subr.bf16.mxu0 0
        %2853 = vmatpush2.bf16.xpose.msra.mxu0 0
        %2854 = vmatprep.subr.bf16.mxu0 0
        %2855 = vmatpush2.bf16.xpose.msra.mxu0 0
        %2856 = vmatprep.subr.bf16.mxu0 0
        %2857 = vmatpush2.bf16.xpose.msra.mxu0 0
        %2858 = vmatprep.subr.bf16.mxu0 0
        %2859 = vmatpush2.bf16.xpose.msra.mxu0 0
        %2860 = vmatprep.subr.bf16.mxu0 0
        %2861 = vmatpush2.bf16.xpose.msra.mxu0 0
        %2862 = vmatprep.subr.bf16.mxu0 0
        %2863 = vmatpush2.bf16.xpose.msra.mxu0 0
        %2864 = vmatprep.mubr.bf16.mxu0 0
        %2865 = vmatmul.mubr.bf16.gmra.mxu0 %v2647
        %v2866 = vpop.f32.mrf.mxu0
        %v2867 = vadd.f32 0.0, %v2866
        %v2868 = vpop.f32.mrf.mxu0
        %v2869 = vpop.f32.mrf.mxu0
        %v2870 = vpop.f32.mrf.mxu0
        %2871 = vdwg.mxu0
        %2872 = vrot.lane.b32.xlu0 %v875, 64
        %v2873 = vpop.permute.xlu0 %2872
        %v2875 = vsel %vm907, %v2873, 0
        %2877 = vmatprep.subr.bf16.mxu0 0
        %2878 = vmatpush1.bf16.xpose.msra.mxu0 0
        %2879 = vmatprep.subr.bf16.mxu0 0
        %2880 = vmatpush1.bf16.xpose.msra.mxu0 0
        %2881 = vmatprep.subr.bf16.mxu0 0
        %2882 = vmatpush1.bf16.xpose.msra.mxu0 0
        %2883 = vmatprep.subr.bf16.mxu0 0
        %2884 = vmatpush1.bf16.xpose.msra.mxu0 0
        %2885 = vmatprep.subr.bf16.mxu0 0
        %2886 = vmatpush1.bf16.xpose.msra.mxu0 0
        %2887 = vmatprep.subr.bf16.mxu0 0
        %2888 = vmatpush1.bf16.xpose.msra.mxu0 0
        %2889 = vmatprep.subr.bf16.mxu0 0
        %2890 = vmatpush1.bf16.xpose.msra.mxu0 0
        %2891 = vmatprep.subr.bf16.mxu0 0
        %2892 = vmatpush1.bf16.xpose.msra.mxu0 %v2875
        %2893 = vmatprep.subr.bf16.mxu0 0
        %2894 = vmatpush2.bf16.xpose.msra.mxu0 0
        %2895 = vmatprep.subr.bf16.mxu0 0
        %2896 = vmatpush2.bf16.xpose.msra.mxu0 0
        %2897 = vmatprep.subr.bf16.mxu0 0
        %2898 = vmatpush2.bf16.xpose.msra.mxu0 0
        %2899 = vmatprep.subr.bf16.mxu0 0
        %2900 = vmatpush2.bf16.xpose.msra.mxu0 0
        %2901 = vmatprep.subr.bf16.mxu0 0
        %2902 = vmatpush2.bf16.xpose.msra.mxu0 0
        %2903 = vmatprep.subr.bf16.mxu0 0
        %2904 = vmatpush2.bf16.xpose.msra.mxu0 0
        %2905 = vmatprep.subr.bf16.mxu0 0
        %2906 = vmatpush2.bf16.xpose.msra.mxu0 0
        %2907 = vmatprep.subr.bf16.mxu0 0
        %2908 = vmatpush2.bf16.xpose.msra.mxu0 0
        %2909 = vmatprep.mubr.bf16.mxu0 0
        %2910 = vmatmul.mubr.bf16.gmra.mxu0 %v2647
        %v2911 = vpop.f32.mrf.mxu0
        %v2912 = vadd.f32 0.0, %v2911
        %v2913 = vpop.f32.mrf.mxu0
        %v2914 = vpop.f32.mrf.mxu0
        %v2915 = vpop.f32.mrf.mxu0
        %2916 = vdwg.mxu0
        %2917 = vrot.lane.b32.xlu0 %v876, 64
        %v2918 = vpop.permute.xlu0 %2917
        %v2920 = vsel %vm907, %v2918, 0
        %2922 = vmatprep.subr.bf16.mxu0 0
        %2923 = vmatpush1.bf16.xpose.msra.mxu0 0
        %2924 = vmatprep.subr.bf16.mxu0 0
        %2925 = vmatpush1.bf16.xpose.msra.mxu0 0
        %2926 = vmatprep.subr.bf16.mxu0 0
        %2927 = vmatpush1.bf16.xpose.msra.mxu0 0
        %2928 = vmatprep.subr.bf16.mxu0 0
        %2929 = vmatpush1.bf16.xpose.msra.mxu0 0
        %2930 = vmatprep.subr.bf16.mxu0 0
        %2931 = vmatpush1.bf16.xpose.msra.mxu0 0
        %2932 = vmatprep.subr.bf16.mxu0 0
        %2933 = vmatpush1.bf16.xpose.msra.mxu0 0
        %2934 = vmatprep.subr.bf16.mxu0 0
        %2935 = vmatpush1.bf16.xpose.msra.mxu0 0
        %2936 = vmatprep.subr.bf16.mxu0 0
        %2937 = vmatpush1.bf16.xpose.msra.mxu0 %v2920
        %2938 = vmatprep.subr.bf16.mxu0 0
        %2939 = vmatpush2.bf16.xpose.msra.mxu0 0
        %2940 = vmatprep.subr.bf16.mxu0 0
        %2941 = vmatpush2.bf16.xpose.msra.mxu0 0
        %2942 = vmatprep.subr.bf16.mxu0 0
        %2943 = vmatpush2.bf16.xpose.msra.mxu0 0
        %2944 = vmatprep.subr.bf16.mxu0 0
        %2945 = vmatpush2.bf16.xpose.msra.mxu0 0
        %2946 = vmatprep.subr.bf16.mxu0 0
        %2947 = vmatpush2.bf16.xpose.msra.mxu0 0
        %2948 = vmatprep.subr.bf16.mxu0 0
        %2949 = vmatpush2.bf16.xpose.msra.mxu0 0
        %2950 = vmatprep.subr.bf16.mxu0 0
        %2951 = vmatpush2.bf16.xpose.msra.mxu0 0
        %2952 = vmatprep.subr.bf16.mxu0 0
        %2953 = vmatpush2.bf16.xpose.msra.mxu0 0
        %2954 = vmatprep.mubr.bf16.mxu0 0
        %2955 = vmatmul.mubr.bf16.gmra.mxu0 %v2647
        %v2956 = vpop.f32.mrf.mxu0
        %v2957 = vadd.f32 0.0, %v2956
        %v2958 = vpop.f32.mrf.mxu0
        %v2959 = vpop.f32.mrf.mxu0
        %v2960 = vpop.f32.mrf.mxu0
        %2961 = vdwg.mxu0
        %2962 = vrot.lane.b32.xlu0 %v877, 64
        %v2963 = vpop.permute.xlu0 %2962
        %v2965 = vsel %vm907, %v2963, 0
        %2967 = vmatprep.subr.bf16.mxu0 0
        %2968 = vmatpush1.bf16.xpose.msra.mxu0 0
        %2969 = vmatprep.subr.bf16.mxu0 0
        %2970 = vmatpush1.bf16.xpose.msra.mxu0 0
        %2971 = vmatprep.subr.bf16.mxu0 0
        %2972 = vmatpush1.bf16.xpose.msra.mxu0 0
        %2973 = vmatprep.subr.bf16.mxu0 0
        %2974 = vmatpush1.bf16.xpose.msra.mxu0 0
        %2975 = vmatprep.subr.bf16.mxu0 0
        %2976 = vmatpush1.bf16.xpose.msra.mxu0 0
        %2977 = vmatprep.subr.bf16.mxu0 0
        %2978 = vmatpush1.bf16.xpose.msra.mxu0 0
        %2979 = vmatprep.subr.bf16.mxu0 0
        %2980 = vmatpush1.bf16.xpose.msra.mxu0 0
        %2981 = vmatprep.subr.bf16.mxu0 0
        %2982 = vmatpush1.bf16.xpose.msra.mxu0 %v2965
        %2983 = vmatprep.subr.bf16.mxu0 0
        %2984 = vmatpush2.bf16.xpose.msra.mxu0 0
        %2985 = vmatprep.subr.bf16.mxu0 0
        %2986 = vmatpush2.bf16.xpose.msra.mxu0 0
        %2987 = vmatprep.subr.bf16.mxu0 0
        %2988 = vmatpush2.bf16.xpose.msra.mxu0 0
        %2989 = vmatprep.subr.bf16.mxu0 0
        %2990 = vmatpush2.bf16.xpose.msra.mxu0 0
        %2991 = vmatprep.subr.bf16.mxu0 0
        %2992 = vmatpush2.bf16.xpose.msra.mxu0 0
        %2993 = vmatprep.subr.bf16.mxu0 0
        %2994 = vmatpush2.bf16.xpose.msra.mxu0 0
        %2995 = vmatprep.subr.bf16.mxu0 0
        %2996 = vmatpush2.bf16.xpose.msra.mxu0 0
        %2997 = vmatprep.subr.bf16.mxu0 0
        %2998 = vmatpush2.bf16.xpose.msra.mxu0 0
        %2999 = vmatprep.mubr.bf16.mxu0 0
        %3000 = vmatmul.mubr.bf16.gmra.mxu0 %v2647
        %v3001 = vpop.f32.mrf.mxu0
        %v3002 = vadd.f32 0.0, %v3001
        %v3003 = vpop.f32.mrf.mxu0
        %v3004 = vpop.f32.mrf.mxu0
        %v3005 = vpop.f32.mrf.mxu0
        %3006 = vdwg.mxu0
        %v3007 = vsel %vm1255, %v2687, -inf
        %3008 = vmax.xlane.f32.xlu0 %v3007
        %v3009 = vpop.xlane.xlu0 %3008
        %v3010 = vsel %vm1255, %v2732, -inf
        %3011 = vmax.xlane.f32.xlu0 %v3010
        %v3012 = vpop.xlane.xlu0 %3011
        %v3013 = vsel %vm1255, %v2777, -inf
        %3014 = vmax.xlane.f32.xlu0 %v3013
        %v3015 = vpop.xlane.xlu0 %3014
        %v3016 = vsel %vm1255, %v2822, -inf
        %3017 = vmax.xlane.f32.xlu0 %v3016
        %v3018 = vpop.xlane.xlu0 %3017
        %v3019 = vsel %vm1255, %v2867, -inf
        %3020 = vmax.xlane.f32.xlu0 %v3019
        %v3021 = vpop.xlane.xlu0 %3020
        %v3022 = vsel %vm1255, %v2912, -inf
        %3023 = vmax.xlane.f32.xlu0 %v3022
        %v3024 = vpop.xlane.xlu0 %3023
        %v3025 = vsel %vm1255, %v2957, -inf
        %3026 = vmax.xlane.f32.xlu0 %v3025
        %v3027 = vpop.xlane.xlu0 %3026
        %v3028 = vsel %vm1255, %v3002, -inf
        %3029 = vmax.xlane.f32.xlu0 %v3028
        %v3030 = vpop.xlane.xlu0 %3029
        %v3031 = vsub.f32 %v2687, %v3009
        %v3032 = vsub.f32 %v2732, %v3012
        %v3033 = vsub.f32 %v2777, %v3015
        %v3034 = vsub.f32 %v2822, %v3018
        %v3035 = vsub.f32 %v2867, %v3021
        %v3036 = vsub.f32 %v2912, %v3024
        %v3037 = vsub.f32 %v2957, %v3027
        %v3038 = vsub.f32 %v3002, %v3030
        %v3039 = vmul.f32 %v3031, 1.442695
        %v3040 = vpow.pop %v3039
        %v3041 = vmul.f32 %v3032, 1.442695
        %v3042 = vpow.pop %v3041
        %v3043 = vmul.f32 %v3033, 1.442695
        %v3044 = vpow.pop %v3043
        %v3045 = vmul.f32 %v3034, 1.442695
        %v3046 = vpow.pop %v3045
        %v3047 = vmul.f32 %v3035, 1.442695
        %v3048 = vpow.pop %v3047
        %v3049 = vmul.f32 %v3036, 1.442695
        %v3050 = vpow.pop %v3049
        %v3051 = vmul.f32 %v3037, 1.442695
        %v3052 = vpow.pop %v3051
        %v3053 = vmul.f32 %v3038, 1.442695
        %v3054 = vpow.pop %v3053
        %v3055 = vsel %vm1255, %v3040, 0.0
        %3056 = vadd.xlane.f32.xlu0 %v3055
        %v3057 = vpop.xlane.xlu0 %3056
        %v3058 = vsel %vm1255, %v3042, 0.0
        %3059 = vadd.xlane.f32.xlu0 %v3058
        %v3060 = vpop.xlane.xlu0 %3059
        %v3061 = vsel %vm1255, %v3044, 0.0
        %3062 = vadd.xlane.f32.xlu0 %v3061
        %v3063 = vpop.xlane.xlu0 %3062
        %v3064 = vsel %vm1255, %v3046, 0.0
        %3065 = vadd.xlane.f32.xlu0 %v3064
        %v3066 = vpop.xlane.xlu0 %3065
        %v3067 = vsel %vm1255, %v3048, 0.0
        %3068 = vadd.xlane.f32.xlu0 %v3067
        %v3069 = vpop.xlane.xlu0 %3068
        %v3070 = vsel %vm1255, %v3050, 0.0
        %3071 = vadd.xlane.f32.xlu0 %v3070
        %v3072 = vpop.xlane.xlu0 %3071
        %v3073 = vsel %vm1255, %v3052, 0.0
        %3074 = vadd.xlane.f32.xlu0 %v3073
        %v3075 = vpop.xlane.xlu0 %3074
        %v3076 = vsel %vm1255, %v3054, 0.0
        %3077 = vadd.xlane.f32.xlu0 %v3076
        %v3078 = vpop.xlane.xlu0 %3077
        %v3079 = vrcp.pop %v3057
        %v3080 = vmul.f32 %v3040, %v3079
        %v3081 = vrcp.pop %v3060
        %v3082 = vmul.f32 %v3042, %v3081
        %v3083 = vrcp.pop %v3063
        %v3084 = vmul.f32 %v3044, %v3083
        %v3085 = vrcp.pop %v3066
        %v3086 = vmul.f32 %v3046, %v3085
        %v3087 = vrcp.pop %v3069
        %v3088 = vmul.f32 %v3048, %v3087
        %v3089 = vrcp.pop %v3072
        %v3090 = vmul.f32 %v3050, %v3089
        %v3091 = vrcp.pop %v3075
        %v3092 = vmul.f32 %v3052, %v3091
        %v3093 = vrcp.pop %v3078
        %v3094 = vmul.f32 %v3054, %v3093
        %v3095 = vpack.c.bf16 %v3080, %v3080
        %v3096 = vpack.c.bf16 %v3082, %v3082
        %v3097 = vpack.c.bf16 %v3084, %v3084
        %v3098 = vpack.c.bf16 %v3086, %v3086
        %v3099 = vpack.c.bf16 %v3088, %v3088
        %v3100 = vpack.c.bf16 %v3090, %v3090
        %v3101 = vpack.c.bf16 %v3092, %v3092
        %v3102 = vpack.c.bf16 %v3094, %v3094
        %3103 = vrot.lane.b32.xlu0 %v898, 64
        %v3104 = vpop.permute.xlu0 %3103
        %v3107 = vsel %vm1255, %v3095, 0
        %3109 = vmatprep.subr.bf16.mxu0 0
        %3110 = vmatpush1.bf16.msra.mxu0 0
        %3111 = vmatprep.subr.bf16.mxu0 0
        %3112 = vmatpush1.bf16.msra.mxu0 0
        %3113 = vmatprep.subr.bf16.mxu0 0
        %3114 = vmatpush1.bf16.msra.mxu0 0
        %3115 = vmatprep.subr.bf16.mxu0 0
        %3116 = vmatpush1.bf16.msra.mxu0 0
        %3117 = vmatprep.subr.bf16.mxu0 0
        %3118 = vmatpush1.bf16.msra.mxu0 0
        %3119 = vmatprep.subr.bf16.mxu0 0
        %3120 = vmatpush1.bf16.msra.mxu0 0
        %3121 = vmatprep.subr.bf16.mxu0 0
        %3122 = vmatpush1.bf16.msra.mxu0 0
        %3123 = vmatprep.subr.bf16.mxu0 0
        %3124 = vmatpush1.bf16.msra.mxu0 %v3104
        %3125 = vmatprep.subr.bf16.mxu0 0
        %3126 = vmatpush2.bf16.msra.mxu0 0
        %3127 = vmatprep.subr.bf16.mxu0 0
        %3128 = vmatpush2.bf16.msra.mxu0 0
        %3129 = vmatprep.subr.bf16.mxu0 0
        %3130 = vmatpush2.bf16.msra.mxu0 0
        %3131 = vmatprep.subr.bf16.mxu0 0
        %3132 = vmatpush2.bf16.msra.mxu0 0
        %3133 = vmatprep.subr.bf16.mxu0 0
        %3134 = vmatpush2.bf16.msra.mxu0 0
        %3135 = vmatprep.subr.bf16.mxu0 0
        %3136 = vmatpush2.bf16.msra.mxu0 0
        %3137 = vmatprep.subr.bf16.mxu0 0
        %3138 = vmatpush2.bf16.msra.mxu0 0
        %3139 = vmatprep.subr.bf16.mxu0 0
        %3140 = vmatpush2.bf16.msra.mxu0 0
        %3141 = vmatprep.mubr.bf16.mxu0 0
        %3142 = vmatmul.mubr.bf16.gmra.mxu0 %v3107
        %v3143 = vpop.f32.mrf.mxu0
        %v3144 = vadd.f32 0.0, %v3143
        %v3145 = vpop.f32.mrf.mxu0
        %v3146 = vpop.f32.mrf.mxu0
        %v3147 = vpop.f32.mrf.mxu0
        %3148 = vdwg.mxu0
        %3149 = vrot.lane.b32.xlu0 %v899, 64
        %v3150 = vpop.permute.xlu0 %3149
        %v3153 = vsel %vm1255, %v3096, 0
        %3155 = vmatprep.subr.bf16.mxu0 0
        %3156 = vmatpush1.bf16.msra.mxu0 0
        %3157 = vmatprep.subr.bf16.mxu0 0
        %3158 = vmatpush1.bf16.msra.mxu0 0
        %3159 = vmatprep.subr.bf16.mxu0 0
        %3160 = vmatpush1.bf16.msra.mxu0 0
        %3161 = vmatprep.subr.bf16.mxu0 0
        %3162 = vmatpush1.bf16.msra.mxu0 0
        %3163 = vmatprep.subr.bf16.mxu0 0
        %3164 = vmatpush1.bf16.msra.mxu0 0
        %3165 = vmatprep.subr.bf16.mxu0 0
        %3166 = vmatpush1.bf16.msra.mxu0 0
        %3167 = vmatprep.subr.bf16.mxu0 0
        %3168 = vmatpush1.bf16.msra.mxu0 0
        %3169 = vmatprep.subr.bf16.mxu0 0
        %3170 = vmatpush1.bf16.msra.mxu0 %v3150
        %3171 = vmatprep.subr.bf16.mxu0 0
        %3172 = vmatpush2.bf16.msra.mxu0 0
        %3173 = vmatprep.subr.bf16.mxu0 0
        %3174 = vmatpush2.bf16.msra.mxu0 0
        %3175 = vmatprep.subr.bf16.mxu0 0
        %3176 = vmatpush2.bf16.msra.mxu0 0
        %3177 = vmatprep.subr.bf16.mxu0 0
        %3178 = vmatpush2.bf16.msra.mxu0 0
        %3179 = vmatprep.subr.bf16.mxu0 0
        %3180 = vmatpush2.bf16.msra.mxu0 0
        %3181 = vmatprep.subr.bf16.mxu0 0
        %3182 = vmatpush2.bf16.msra.mxu0 0
        %3183 = vmatprep.subr.bf16.mxu0 0
        %3184 = vmatpush2.bf16.msra.mxu0 0
        %3185 = vmatprep.subr.bf16.mxu0 0
        %3186 = vmatpush2.bf16.msra.mxu0 0
        %3187 = vmatprep.mubr.bf16.mxu0 0
        %3188 = vmatmul.mubr.bf16.gmra.mxu0 %v3153
        %v3189 = vpop.f32.mrf.mxu0
        %v3190 = vadd.f32 0.0, %v3189
        %v3191 = vpop.f32.mrf.mxu0
        %v3192 = vpop.f32.mrf.mxu0
        %v3193 = vpop.f32.mrf.mxu0
        %3194 = vdwg.mxu0
        %3195 = vrot.lane.b32.xlu0 %v900, 64
        %v3196 = vpop.permute.xlu0 %3195
        %v3199 = vsel %vm1255, %v3097, 0
        %3201 = vmatprep.subr.bf16.mxu0 0
        %3202 = vmatpush1.bf16.msra.mxu0 0
        %3203 = vmatprep.subr.bf16.mxu0 0
        %3204 = vmatpush1.bf16.msra.mxu0 0
        %3205 = vmatprep.subr.bf16.mxu0 0
        %3206 = vmatpush1.bf16.msra.mxu0 0
        %3207 = vmatprep.subr.bf16.mxu0 0
        %3208 = vmatpush1.bf16.msra.mxu0 0
        %3209 = vmatprep.subr.bf16.mxu0 0
        %3210 = vmatpush1.bf16.msra.mxu0 0
        %3211 = vmatprep.subr.bf16.mxu0 0
        %3212 = vmatpush1.bf16.msra.mxu0 0
        %3213 = vmatprep.subr.bf16.mxu0 0
        %3214 = vmatpush1.bf16.msra.mxu0 0
        %3215 = vmatprep.subr.bf16.mxu0 0
        %3216 = vmatpush1.bf16.msra.mxu0 %v3196
        %3217 = vmatprep.subr.bf16.mxu0 0
        %3218 = vmatpush2.bf16.msra.mxu0 0
        %3219 = vmatprep.subr.bf16.mxu0 0
        %3220 = vmatpush2.bf16.msra.mxu0 0
        %3221 = vmatprep.subr.bf16.mxu0 0
        %3222 = vmatpush2.bf16.msra.mxu0 0
        %3223 = vmatprep.subr.bf16.mxu0 0
        %3224 = vmatpush2.bf16.msra.mxu0 0
        %3225 = vmatprep.subr.bf16.mxu0 0
        %3226 = vmatpush2.bf16.msra.mxu0 0
        %3227 = vmatprep.subr.bf16.mxu0 0
        %3228 = vmatpush2.bf16.msra.mxu0 0
        %3229 = vmatprep.subr.bf16.mxu0 0
        %3230 = vmatpush2.bf16.msra.mxu0 0
        %3231 = vmatprep.subr.bf16.mxu0 0
        %3232 = vmatpush2.bf16.msra.mxu0 0
        %3233 = vmatprep.mubr.bf16.mxu0 0
        %3234 = vmatmul.mubr.bf16.gmra.mxu0 %v3199
        %v3235 = vpop.f32.mrf.mxu0
        %v3236 = vadd.f32 0.0, %v3235
        %v3237 = vpop.f32.mrf.mxu0
        %v3238 = vpop.f32.mrf.mxu0
        %v3239 = vpop.f32.mrf.mxu0
        %3240 = vdwg.mxu0
        %3241 = vrot.lane.b32.xlu0 %v901, 64
        %v3242 = vpop.permute.xlu0 %3241
        %v3245 = vsel %vm1255, %v3098, 0
        %3247 = vmatprep.subr.bf16.mxu0 0
        %3248 = vmatpush1.bf16.msra.mxu0 0
        %3249 = vmatprep.subr.bf16.mxu0 0
        %3250 = vmatpush1.bf16.msra.mxu0 0
        %3251 = vmatprep.subr.bf16.mxu0 0
        %3252 = vmatpush1.bf16.msra.mxu0 0
        %3253 = vmatprep.subr.bf16.mxu0 0
        %3254 = vmatpush1.bf16.msra.mxu0 0
        %3255 = vmatprep.subr.bf16.mxu0 0
        %3256 = vmatpush1.bf16.msra.mxu0 0
        %3257 = vmatprep.subr.bf16.mxu0 0
        %3258 = vmatpush1.bf16.msra.mxu0 0
        %3259 = vmatprep.subr.bf16.mxu0 0
        %3260 = vmatpush1.bf16.msra.mxu0 0
        %3261 = vmatprep.subr.bf16.mxu0 0
        %3262 = vmatpush1.bf16.msra.mxu0 %v3242
        %3263 = vmatprep.subr.bf16.mxu0 0
        %3264 = vmatpush2.bf16.msra.mxu0 0
        %3265 = vmatprep.subr.bf16.mxu0 0
        %3266 = vmatpush2.bf16.msra.mxu0 0
        %3267 = vmatprep.subr.bf16.mxu0 0
        %3268 = vmatpush2.bf16.msra.mxu0 0
        %3269 = vmatprep.subr.bf16.mxu0 0
        %3270 = vmatpush2.bf16.msra.mxu0 0
        %3271 = vmatprep.subr.bf16.mxu0 0
        %3272 = vmatpush2.bf16.msra.mxu0 0
        %3273 = vmatprep.subr.bf16.mxu0 0
        %3274 = vmatpush2.bf16.msra.mxu0 0
        %3275 = vmatprep.subr.bf16.mxu0 0
        %3276 = vmatpush2.bf16.msra.mxu0 0
        %3277 = vmatprep.subr.bf16.mxu0 0
        %3278 = vmatpush2.bf16.msra.mxu0 0
        %3279 = vmatprep.mubr.bf16.mxu0 0
        %3280 = vmatmul.mubr.bf16.gmra.mxu0 %v3245
        %v3281 = vpop.f32.mrf.mxu0
        %v3282 = vadd.f32 0.0, %v3281
        %v3283 = vpop.f32.mrf.mxu0
        %v3284 = vpop.f32.mrf.mxu0
        %v3285 = vpop.f32.mrf.mxu0
        %3286 = vdwg.mxu0
        %3287 = vrot.lane.b32.xlu0 %v902, 64
        %v3288 = vpop.permute.xlu0 %3287
        %v3291 = vsel %vm1255, %v3099, 0
        %3293 = vmatprep.subr.bf16.mxu0 0
        %3294 = vmatpush1.bf16.msra.mxu0 0
        %3295 = vmatprep.subr.bf16.mxu0 0
        %3296 = vmatpush1.bf16.msra.mxu0 0
        %3297 = vmatprep.subr.bf16.mxu0 0
        %3298 = vmatpush1.bf16.msra.mxu0 0
        %3299 = vmatprep.subr.bf16.mxu0 0
        %3300 = vmatpush1.bf16.msra.mxu0 0
        %3301 = vmatprep.subr.bf16.mxu0 0
        %3302 = vmatpush1.bf16.msra.mxu0 0
        %3303 = vmatprep.subr.bf16.mxu0 0
        %3304 = vmatpush1.bf16.msra.mxu0 0
        %3305 = vmatprep.subr.bf16.mxu0 0
        %3306 = vmatpush1.bf16.msra.mxu0 0
        %3307 = vmatprep.subr.bf16.mxu0 0
        %3308 = vmatpush1.bf16.msra.mxu0 %v3288
        %3309 = vmatprep.subr.bf16.mxu0 0
        %3310 = vmatpush2.bf16.msra.mxu0 0
        %3311 = vmatprep.subr.bf16.mxu0 0
        %3312 = vmatpush2.bf16.msra.mxu0 0
        %3313 = vmatprep.subr.bf16.mxu0 0
        %3314 = vmatpush2.bf16.msra.mxu0 0
        %3315 = vmatprep.subr.bf16.mxu0 0
        %3316 = vmatpush2.bf16.msra.mxu0 0
        %3317 = vmatprep.subr.bf16.mxu0 0
        %3318 = vmatpush2.bf16.msra.mxu0 0
        %3319 = vmatprep.subr.bf16.mxu0 0
        %3320 = vmatpush2.bf16.msra.mxu0 0
        %3321 = vmatprep.subr.bf16.mxu0 0
        %3322 = vmatpush2.bf16.msra.mxu0 0
        %3323 = vmatprep.subr.bf16.mxu0 0
        %3324 = vmatpush2.bf16.msra.mxu0 0
        %3325 = vmatprep.mubr.bf16.mxu0 0
        %3326 = vmatmul.mubr.bf16.gmra.mxu0 %v3291
        %v3327 = vpop.f32.mrf.mxu0
        %v3328 = vadd.f32 0.0, %v3327
        %v3329 = vpop.f32.mrf.mxu0
        %v3330 = vpop.f32.mrf.mxu0
        %v3331 = vpop.f32.mrf.mxu0
        %3332 = vdwg.mxu0
        %3333 = vrot.lane.b32.xlu0 %v903, 64
        %v3334 = vpop.permute.xlu0 %3333
        %v3337 = vsel %vm1255, %v3100, 0
        %3339 = vmatprep.subr.bf16.mxu0 0
        %3340 = vmatpush1.bf16.msra.mxu0 0
        %3341 = vmatprep.subr.bf16.mxu0 0
        %3342 = vmatpush1.bf16.msra.mxu0 0
        %3343 = vmatprep.subr.bf16.mxu0 0
        %3344 = vmatpush1.bf16.msra.mxu0 0
        %3345 = vmatprep.subr.bf16.mxu0 0
        %3346 = vmatpush1.bf16.msra.mxu0 0
        %3347 = vmatprep.subr.bf16.mxu0 0
        %3348 = vmatpush1.bf16.msra.mxu0 0
        %3349 = vmatprep.subr.bf16.mxu0 0
        %3350 = vmatpush1.bf16.msra.mxu0 0
        %3351 = vmatprep.subr.bf16.mxu0 0
        %3352 = vmatpush1.bf16.msra.mxu0 0
        %3353 = vmatprep.subr.bf16.mxu0 0
        %3354 = vmatpush1.bf16.msra.mxu0 %v3334
        %3355 = vmatprep.subr.bf16.mxu0 0
        %3356 = vmatpush2.bf16.msra.mxu0 0
        %3357 = vmatprep.subr.bf16.mxu0 0
        %3358 = vmatpush2.bf16.msra.mxu0 0
        %3359 = vmatprep.subr.bf16.mxu0 0
        %3360 = vmatpush2.bf16.msra.mxu0 0
        %3361 = vmatprep.subr.bf16.mxu0 0
        %3362 = vmatpush2.bf16.msra.mxu0 0
        %3363 = vmatprep.subr.bf16.mxu0 0
        %3364 = vmatpush2.bf16.msra.mxu0 0
        %3365 = vmatprep.subr.bf16.mxu0 0
        %3366 = vmatpush2.bf16.msra.mxu0 0
        %3367 = vmatprep.subr.bf16.mxu0 0
        %3368 = vmatpush2.bf16.msra.mxu0 0
        %3369 = vmatprep.subr.bf16.mxu0 0
        %3370 = vmatpush2.bf16.msra.mxu0 0
        %3371 = vmatprep.mubr.bf16.mxu0 0
        %3372 = vmatmul.mubr.bf16.gmra.mxu0 %v3337
        %v3373 = vpop.f32.mrf.mxu0
        %v3374 = vadd.f32 0.0, %v3373
        %v3375 = vpop.f32.mrf.mxu0
        %v3376 = vpop.f32.mrf.mxu0
        %v3377 = vpop.f32.mrf.mxu0
        %3378 = vdwg.mxu0
        %3379 = vrot.lane.b32.xlu0 %v904, 64
        %v3380 = vpop.permute.xlu0 %3379
        %v3383 = vsel %vm1255, %v3101, 0
        %3385 = vmatprep.subr.bf16.mxu0 0
        %3386 = vmatpush1.bf16.msra.mxu0 0
        %3387 = vmatprep.subr.bf16.mxu0 0
        %3388 = vmatpush1.bf16.msra.mxu0 0
        %3389 = vmatprep.subr.bf16.mxu0 0
        %3390 = vmatpush1.bf16.msra.mxu0 0
        %3391 = vmatprep.subr.bf16.mxu0 0
        %3392 = vmatpush1.bf16.msra.mxu0 0
        %3393 = vmatprep.subr.bf16.mxu0 0
        %3394 = vmatpush1.bf16.msra.mxu0 0
        %3395 = vmatprep.subr.bf16.mxu0 0
        %3396 = vmatpush1.bf16.msra.mxu0 0
        %3397 = vmatprep.subr.bf16.mxu0 0
        %3398 = vmatpush1.bf16.msra.mxu0 0
        %3399 = vmatprep.subr.bf16.mxu0 0
        %3400 = vmatpush1.bf16.msra.mxu0 %v3380
        %3401 = vmatprep.subr.bf16.mxu0 0
        %3402 = vmatpush2.bf16.msra.mxu0 0
        %3403 = vmatprep.subr.bf16.mxu0 0
        %3404 = vmatpush2.bf16.msra.mxu0 0
        %3405 = vmatprep.subr.bf16.mxu0 0
        %3406 = vmatpush2.bf16.msra.mxu0 0
        %3407 = vmatprep.subr.bf16.mxu0 0
        %3408 = vmatpush2.bf16.msra.mxu0 0
        %3409 = vmatprep.subr.bf16.mxu0 0
        %3410 = vmatpush2.bf16.msra.mxu0 0
        %3411 = vmatprep.subr.bf16.mxu0 0
        %3412 = vmatpush2.bf16.msra.mxu0 0
        %3413 = vmatprep.subr.bf16.mxu0 0
        %3414 = vmatpush2.bf16.msra.mxu0 0
        %3415 = vmatprep.subr.bf16.mxu0 0
        %3416 = vmatpush2.bf16.msra.mxu0 0
        %3417 = vmatprep.mubr.bf16.mxu0 0
        %3418 = vmatmul.mubr.bf16.gmra.mxu0 %v3383
        %v3419 = vpop.f32.mrf.mxu0
        %v3420 = vadd.f32 0.0, %v3419
        %v3421 = vpop.f32.mrf.mxu0
        %v3422 = vpop.f32.mrf.mxu0
        %v3423 = vpop.f32.mrf.mxu0
        %3424 = vdwg.mxu0
        %3425 = vrot.lane.b32.xlu0 %v905, 64
        %v3426 = vpop.permute.xlu0 %3425
        %v3429 = vsel %vm1255, %v3102, 0
        %3431 = vmatprep.subr.bf16.mxu0 0
        %3432 = vmatpush1.bf16.msra.mxu0 0
        %3433 = vmatprep.subr.bf16.mxu0 0
        %3434 = vmatpush1.bf16.msra.mxu0 0
        %3435 = vmatprep.subr.bf16.mxu0 0
        %3436 = vmatpush1.bf16.msra.mxu0 0
        %3437 = vmatprep.subr.bf16.mxu0 0
        %3438 = vmatpush1.bf16.msra.mxu0 0
        %3439 = vmatprep.subr.bf16.mxu0 0
        %3440 = vmatpush1.bf16.msra.mxu0 0
        %3441 = vmatprep.subr.bf16.mxu0 0
        %3442 = vmatpush1.bf16.msra.mxu0 0
        %3443 = vmatprep.subr.bf16.mxu0 0
        %3444 = vmatpush1.bf16.msra.mxu0 0
        %3445 = vmatprep.subr.bf16.mxu0 0
        %3446 = vmatpush1.bf16.msra.mxu0 %v3426
        %3447 = vmatprep.subr.bf16.mxu0 0
        %3448 = vmatpush2.bf16.msra.mxu0 0
        %3449 = vmatprep.subr.bf16.mxu0 0
        %3450 = vmatpush2.bf16.msra.mxu0 0
        %3451 = vmatprep.subr.bf16.mxu0 0
        %3452 = vmatpush2.bf16.msra.mxu0 0
        %3453 = vmatprep.subr.bf16.mxu0 0
        %3454 = vmatpush2.bf16.msra.mxu0 0
        %3455 = vmatprep.subr.bf16.mxu0 0
        %3456 = vmatpush2.bf16.msra.mxu0 0
        %3457 = vmatprep.subr.bf16.mxu0 0
        %3458 = vmatpush2.bf16.msra.mxu0 0
        %3459 = vmatprep.subr.bf16.mxu0 0
        %3460 = vmatpush2.bf16.msra.mxu0 0
        %3461 = vmatprep.subr.bf16.mxu0 0
        %3462 = vmatpush2.bf16.msra.mxu0 0
        %3463 = vmatprep.mubr.bf16.mxu0 0
        %3464 = vmatmul.mubr.bf16.gmra.mxu0 %v3429
        %v3465 = vpop.f32.mrf.mxu0
        %v3466 = vadd.f32 0.0, %v3465
        %v3467 = vpop.f32.mrf.mxu0
        %v3468 = vpop.f32.mrf.mxu0
        %v3469 = vpop.f32.mrf.mxu0
        %3470 = vdwg.mxu0
        %v3471 = vpack.c.bf16 %v3190, %v3144
        %v3472 = vpack.c.bf16 %v3282, %v3236
        %v3473 = vpack.c.bf16 %v3374, %v3328
        %v3474 = vpack.c.bf16 %v3466, %v3420
        %v3479 = vunpack.c.l.b16 %v3471
        %v3480 = vunpack.c.h.b16 %v3471
        %v3481 = vunpack.c.l.b16 %v3472
        %v3482 = vunpack.c.h.b16 %v3472
        %v3483 = vunpack.c.l.b16 %v3473
        %v3484 = vunpack.c.h.b16 %v3473
        %v3485 = vunpack.c.l.b16 %v3474
        %v3486 = vunpack.c.h.b16 %v3474
        %v3487 = vpack.c.b16 %v3479, %v3479
        %v3488 = vpack.c.b16 %v3480, %v3480
        %v3489 = vpack.c.b16 %v3481, %v3481
        %v3490 = vpack.c.b16 %v3482, %v3482
        %v3491 = vpack.c.b16 %v3483, %v3483
        %v3492 = vpack.c.b16 %v3484, %v3484
        %v3493 = vpack.c.b16 %v3485, %v3485
        %v3494 = vpack.c.b16 %v3486, %v3486
        %3495 = vrot.lane.b32.xlu0 %v3487, 64
        %v3496 = vpop.permute.xlu0 %3495
        %3497 = vrot.lane.b32.xlu0 %v3488, 64
        %v3498 = vpop.permute.xlu0 %3497
        %3499 = vrot.lane.b32.xlu0 %v3489, 64
        %v3500 = vpop.permute.xlu0 %3499
        %3501 = vrot.lane.b32.xlu0 %v3490, 64
        %v3502 = vpop.permute.xlu0 %3501
        %3503 = vrot.lane.b32.xlu0 %v3491, 64
        %v3504 = vpop.permute.xlu0 %3503
        %3505 = vrot.lane.b32.xlu0 %v3492, 64
        %v3506 = vpop.permute.xlu0 %3505
        %3507 = vrot.lane.b32.xlu0 %v3493, 64
        %v3508 = vpop.permute.xlu0 %3507
        %3509 = vrot.lane.b32.xlu0 %v3494, 64
        %v3510 = vpop.permute.xlu0 %3509
        %vm3519 = vcmask 781824
        %3520 = vst.msk [vmem:[#allocation2] sm:$0xf] %vm3519, %v3496
        %3521 = vst.msk [vmem:[#allocation2 + $0x4] sm:$0xf] %vm3519, %v3498
        %3522 = vst.msk [vmem:[#allocation2 + $0x8] sm:$0xf] %vm3519, %v3500
        %3523 = vst.msk [vmem:[#allocation2 + $0xc] sm:$0xf] %vm3519, %v3502
        %3524 = vst.msk [vmem:[#allocation2 + $0x10] sm:$0xf] %vm3519, %v3504
        %3525 = vst.msk [vmem:[#allocation2 + $0x14] sm:$0xf] %vm3519, %v3506
        %3526 = vst.msk [vmem:[#allocation2 + $0x18] sm:$0xf] %vm3519, %v3508
        %3527 = vst.msk [vmem:[#allocation2 + $0x1c] sm:$0xf] %vm3519, %v3510
        %3528 = vrot.lane.b32.xlu0 %v1739, 32
        %v3529 = vpop.permute.xlu0 %3528
        %3530 = vrot.lane.b32.xlu0 %v870, 32
        %v3531 = vpop.permute.xlu0 %3530
        %v3533 = vsel %vm907, %v3529, 0
        %v3536 = vsel %vm907, %v3531, 0
        %3538 = vmatprep.subr.bf16.mxu0 0
        %3539 = vmatpush1.bf16.xpose.msra.mxu0 0
        %3540 = vmatprep.subr.bf16.mxu0 0
        %3541 = vmatpush1.bf16.xpose.msra.mxu0 0
        %3542 = vmatprep.subr.bf16.mxu0 0
        %3543 = vmatpush1.bf16.xpose.msra.mxu0 0
        %3544 = vmatprep.subr.bf16.mxu0 0
        %3545 = vmatpush1.bf16.xpose.msra.mxu0 0
        %3546 = vmatprep.subr.bf16.mxu0 0
        %3547 = vmatpush1.bf16.xpose.msra.mxu0 0
        %3548 = vmatprep.subr.bf16.mxu0 0
        %3549 = vmatpush1.bf16.xpose.msra.mxu0 0
        %3550 = vmatprep.subr.bf16.mxu0 0
        %3551 = vmatpush1.bf16.xpose.msra.mxu0 0
        %3552 = vmatprep.subr.bf16.mxu0 0
        %3553 = vmatpush1.bf16.xpose.msra.mxu0 %v3536
        %3554 = vmatprep.subr.bf16.mxu0 0
        %3555 = vmatpush2.bf16.xpose.msra.mxu0 0
        %3556 = vmatprep.subr.bf16.mxu0 0
        %3557 = vmatpush2.bf16.xpose.msra.mxu0 0
        %3558 = vmatprep.subr.bf16.mxu0 0
        %3559 = vmatpush2.bf16.xpose.msra.mxu0 0
        %3560 = vmatprep.subr.bf16.mxu0 0
        %3561 = vmatpush2.bf16.xpose.msra.mxu0 0
        %3562 = vmatprep.subr.bf16.mxu0 0
        %3563 = vmatpush2.bf16.xpose.msra.mxu0 0
        %3564 = vmatprep.subr.bf16.mxu0 0
        %3565 = vmatpush2.bf16.xpose.msra.mxu0 0
        %3566 = vmatprep.subr.bf16.mxu0 0
        %3567 = vmatpush2.bf16.xpose.msra.mxu0 0
        %3568 = vmatprep.subr.bf16.mxu0 0
        %3569 = vmatpush2.bf16.xpose.msra.mxu0 0
        %3570 = vmatprep.mubr.bf16.mxu0 0
        %3571 = vmatmul.mubr.bf16.gmra.mxu0 %v3533
        %v3572 = vpop.f32.mrf.mxu0
        %v3573 = vadd.f32 0.0, %v3572
        %v3574 = vpop.f32.mrf.mxu0
        %v3575 = vpop.f32.mrf.mxu0
        %v3576 = vpop.f32.mrf.mxu0
        %3577 = vdwg.mxu0
        %3578 = vrot.lane.b32.xlu0 %v871, 32
        %v3579 = vpop.permute.xlu0 %3578
        %v3581 = vsel %vm907, %v3579, 0
        %3583 = vmatprep.subr.bf16.mxu0 0
        %3584 = vmatpush1.bf16.xpose.msra.mxu0 0
        %3585 = vmatprep.subr.bf16.mxu0 0
        %3586 = vmatpush1.bf16.xpose.msra.mxu0 0
        %3587 = vmatprep.subr.bf16.mxu0 0
        %3588 = vmatpush1.bf16.xpose.msra.mxu0 0
        %3589 = vmatprep.subr.bf16.mxu0 0
        %3590 = vmatpush1.bf16.xpose.msra.mxu0 0
        %3591 = vmatprep.subr.bf16.mxu0 0
        %3592 = vmatpush1.bf16.xpose.msra.mxu0 0
        %3593 = vmatprep.subr.bf16.mxu0 0
        %3594 = vmatpush1.bf16.xpose.msra.mxu0 0
        %3595 = vmatprep.subr.bf16.mxu0 0
        %3596 = vmatpush1.bf16.xpose.msra.mxu0 0
        %3597 = vmatprep.subr.bf16.mxu0 0
        %3598 = vmatpush1.bf16.xpose.msra.mxu0 %v3581
        %3599 = vmatprep.subr.bf16.mxu0 0
        %3600 = vmatpush2.bf16.xpose.msra.mxu0 0
        %3601 = vmatprep.subr.bf16.mxu0 0
        %3602 = vmatpush2.bf16.xpose.msra.mxu0 0
        %3603 = vmatprep.subr.bf16.mxu0 0
        %3604 = vmatpush2.bf16.xpose.msra.mxu0 0
        %3605 = vmatprep.subr.bf16.mxu0 0
        %3606 = vmatpush2.bf16.xpose.msra.mxu0 0
        %3607 = vmatprep.subr.bf16.mxu0 0
        %3608 = vmatpush2.bf16.xpose.msra.mxu0 0
        %3609 = vmatprep.subr.bf16.mxu0 0
        %3610 = vmatpush2.bf16.xpose.msra.mxu0 0
        %3611 = vmatprep.subr.bf16.mxu0 0
        %3612 = vmatpush2.bf16.xpose.msra.mxu0 0
        %3613 = vmatprep.subr.bf16.mxu0 0
        %3614 = vmatpush2.bf16.xpose.msra.mxu0 0
        %3615 = vmatprep.mubr.bf16.mxu0 0
        %3616 = vmatmul.mubr.bf16.gmra.mxu0 %v3533
        %v3617 = vpop.f32.mrf.mxu0
        %v3618 = vadd.f32 0.0, %v3617
        %v3619 = vpop.f32.mrf.mxu0
        %v3620 = vpop.f32.mrf.mxu0
        %v3621 = vpop.f32.mrf.mxu0
        %3622 = vdwg.mxu0
        %3623 = vrot.lane.b32.xlu0 %v872, 32
        %v3624 = vpop.permute.xlu0 %3623
        %v3626 = vsel %vm907, %v3624, 0
        %3628 = vmatprep.subr.bf16.mxu0 0
        %3629 = vmatpush1.bf16.xpose.msra.mxu0 0
        %3630 = vmatprep.subr.bf16.mxu0 0
        %3631 = vmatpush1.bf16.xpose.msra.mxu0 0
        %3632 = vmatprep.subr.bf16.mxu0 0
        %3633 = vmatpush1.bf16.xpose.msra.mxu0 0
        %3634 = vmatprep.subr.bf16.mxu0 0
        %3635 = vmatpush1.bf16.xpose.msra.mxu0 0
        %3636 = vmatprep.subr.bf16.mxu0 0
        %3637 = vmatpush1.bf16.xpose.msra.mxu0 0
        %3638 = vmatprep.subr.bf16.mxu0 0
        %3639 = vmatpush1.bf16.xpose.msra.mxu0 0
        %3640 = vmatprep.subr.bf16.mxu0 0
        %3641 = vmatpush1.bf16.xpose.msra.mxu0 0
        %3642 = vmatprep.subr.bf16.mxu0 0
        %3643 = vmatpush1.bf16.xpose.msra.mxu0 %v3626
        %3644 = vmatprep.subr.bf16.mxu0 0
        %3645 = vmatpush2.bf16.xpose.msra.mxu0 0
        %3646 = vmatprep.subr.bf16.mxu0 0
        %3647 = vmatpush2.bf16.xpose.msra.mxu0 0
        %3648 = vmatprep.subr.bf16.mxu0 0
        %3649 = vmatpush2.bf16.xpose.msra.mxu0 0
        %3650 = vmatprep.subr.bf16.mxu0 0
        %3651 = vmatpush2.bf16.xpose.msra.mxu0 0
        %3652 = vmatprep.subr.bf16.mxu0 0
        %3653 = vmatpush2.bf16.xpose.msra.mxu0 0
        %3654 = vmatprep.subr.bf16.mxu0 0
        %3655 = vmatpush2.bf16.xpose.msra.mxu0 0
        %3656 = vmatprep.subr.bf16.mxu0 0
        %3657 = vmatpush2.bf16.xpose.msra.mxu0 0
        %3658 = vmatprep.subr.bf16.mxu0 0
        %3659 = vmatpush2.bf16.xpose.msra.mxu0 0
        %3660 = vmatprep.mubr.bf16.mxu0 0
        %3661 = vmatmul.mubr.bf16.gmra.mxu0 %v3533
        %v3662 = vpop.f32.mrf.mxu0
        %v3663 = vadd.f32 0.0, %v3662
        %v3664 = vpop.f32.mrf.mxu0
        %v3665 = vpop.f32.mrf.mxu0
        %v3666 = vpop.f32.mrf.mxu0
        %3667 = vdwg.mxu0
        %3668 = vrot.lane.b32.xlu0 %v873, 32
        %v3669 = vpop.permute.xlu0 %3668
        %v3671 = vsel %vm907, %v3669, 0
        %3673 = vmatprep.subr.bf16.mxu0 0
        %3674 = vmatpush1.bf16.xpose.msra.mxu0 0
        %3675 = vmatprep.subr.bf16.mxu0 0
        %3676 = vmatpush1.bf16.xpose.msra.mxu0 0
        %3677 = vmatprep.subr.bf16.mxu0 0
        %3678 = vmatpush1.bf16.xpose.msra.mxu0 0
        %3679 = vmatprep.subr.bf16.mxu0 0
        %3680 = vmatpush1.bf16.xpose.msra.mxu0 0
        %3681 = vmatprep.subr.bf16.mxu0 0
        %3682 = vmatpush1.bf16.xpose.msra.mxu0 0
        %3683 = vmatprep.subr.bf16.mxu0 0
        %3684 = vmatpush1.bf16.xpose.msra.mxu0 0
        %3685 = vmatprep.subr.bf16.mxu0 0
        %3686 = vmatpush1.bf16.xpose.msra.mxu0 0
        %3687 = vmatprep.subr.bf16.mxu0 0
        %3688 = vmatpush1.bf16.xpose.msra.mxu0 %v3671
        %3689 = vmatprep.subr.bf16.mxu0 0
        %3690 = vmatpush2.bf16.xpose.msra.mxu0 0
        %3691 = vmatprep.subr.bf16.mxu0 0
        %3692 = vmatpush2.bf16.xpose.msra.mxu0 0
        %3693 = vmatprep.subr.bf16.mxu0 0
        %3694 = vmatpush2.bf16.xpose.msra.mxu0 0
        %3695 = vmatprep.subr.bf16.mxu0 0
        %3696 = vmatpush2.bf16.xpose.msra.mxu0 0
        %3697 = vmatprep.subr.bf16.mxu0 0
        %3698 = vmatpush2.bf16.xpose.msra.mxu0 0
        %3699 = vmatprep.subr.bf16.mxu0 0
        %3700 = vmatpush2.bf16.xpose.msra.mxu0 0
        %3701 = vmatprep.subr.bf16.mxu0 0
        %3702 = vmatpush2.bf16.xpose.msra.mxu0 0
        %3703 = vmatprep.subr.bf16.mxu0 0
        %3704 = vmatpush2.bf16.xpose.msra.mxu0 0
        %3705 = vmatprep.mubr.bf16.mxu0 0
        %3706 = vmatmul.mubr.bf16.gmra.mxu0 %v3533
        %v3707 = vpop.f32.mrf.mxu0
        %v3708 = vadd.f32 0.0, %v3707
        %v3709 = vpop.f32.mrf.mxu0
        %v3710 = vpop.f32.mrf.mxu0
        %v3711 = vpop.f32.mrf.mxu0
        %3712 = vdwg.mxu0
        %3713 = vrot.lane.b32.xlu0 %v874, 32
        %v3714 = vpop.permute.xlu0 %3713
        %v3716 = vsel %vm907, %v3714, 0
        %3718 = vmatprep.subr.bf16.mxu0 0
        %3719 = vmatpush1.bf16.xpose.msra.mxu0 0
        %3720 = vmatprep.subr.bf16.mxu0 0
        %3721 = vmatpush1.bf16.xpose.msra.mxu0 0
        %3722 = vmatprep.subr.bf16.mxu0 0
        %3723 = vmatpush1.bf16.xpose.msra.mxu0 0
        %3724 = vmatprep.subr.bf16.mxu0 0
        %3725 = vmatpush1.bf16.xpose.msra.mxu0 0
        %3726 = vmatprep.subr.bf16.mxu0 0
        %3727 = vmatpush1.bf16.xpose.msra.mxu0 0
        %3728 = vmatprep.subr.bf16.mxu0 0
        %3729 = vmatpush1.bf16.xpose.msra.mxu0 0
        %3730 = vmatprep.subr.bf16.mxu0 0
        %3731 = vmatpush1.bf16.xpose.msra.mxu0 0
        %3732 = vmatprep.subr.bf16.mxu0 0
        %3733 = vmatpush1.bf16.xpose.msra.mxu0 %v3716
        %3734 = vmatprep.subr.bf16.mxu0 0
        %3735 = vmatpush2.bf16.xpose.msra.mxu0 0
        %3736 = vmatprep.subr.bf16.mxu0 0
        %3737 = vmatpush2.bf16.xpose.msra.mxu0 0
        %3738 = vmatprep.subr.bf16.mxu0 0
        %3739 = vmatpush2.bf16.xpose.msra.mxu0 0
        %3740 = vmatprep.subr.bf16.mxu0 0
        %3741 = vmatpush2.bf16.xpose.msra.mxu0 0
        %3742 = vmatprep.subr.bf16.mxu0 0
        %3743 = vmatpush2.bf16.xpose.msra.mxu0 0
        %3744 = vmatprep.subr.bf16.mxu0 0
        %3745 = vmatpush2.bf16.xpose.msra.mxu0 0
        %3746 = vmatprep.subr.bf16.mxu0 0
        %3747 = vmatpush2.bf16.xpose.msra.mxu0 0
        %3748 = vmatprep.subr.bf16.mxu0 0
        %3749 = vmatpush2.bf16.xpose.msra.mxu0 0
        %3750 = vmatprep.mubr.bf16.mxu0 0
        %3751 = vmatmul.mubr.bf16.gmra.mxu0 %v3533
        %v3752 = vpop.f32.mrf.mxu0
        %v3753 = vadd.f32 0.0, %v3752
        %v3754 = vpop.f32.mrf.mxu0
        %v3755 = vpop.f32.mrf.mxu0
        %v3756 = vpop.f32.mrf.mxu0
        %3757 = vdwg.mxu0
        %3758 = vrot.lane.b32.xlu0 %v875, 32
        %v3759 = vpop.permute.xlu0 %3758
        %v3761 = vsel %vm907, %v3759, 0
        %3763 = vmatprep.subr.bf16.mxu0 0
        %3764 = vmatpush1.bf16.xpose.msra.mxu0 0
        %3765 = vmatprep.subr.bf16.mxu0 0
        %3766 = vmatpush1.bf16.xpose.msra.mxu0 0
        %3767 = vmatprep.subr.bf16.mxu0 0
        %3768 = vmatpush1.bf16.xpose.msra.mxu0 0
        %3769 = vmatprep.subr.bf16.mxu0 0
        %3770 = vmatpush1.bf16.xpose.msra.mxu0 0
        %3771 = vmatprep.subr.bf16.mxu0 0
        %3772 = vmatpush1.bf16.xpose.msra.mxu0 0
        %3773 = vmatprep.subr.bf16.mxu0 0
        %3774 = vmatpush1.bf16.xpose.msra.mxu0 0
        %3775 = vmatprep.subr.bf16.mxu0 0
        %3776 = vmatpush1.bf16.xpose.msra.mxu0 0
        %3777 = vmatprep.subr.bf16.mxu0 0
        %3778 = vmatpush1.bf16.xpose.msra.mxu0 %v3761
        %3779 = vmatprep.subr.bf16.mxu0 0
        %3780 = vmatpush2.bf16.xpose.msra.mxu0 0
        %3781 = vmatprep.subr.bf16.mxu0 0
        %3782 = vmatpush2.bf16.xpose.msra.mxu0 0
        %3783 = vmatprep.subr.bf16.mxu0 0
        %3784 = vmatpush2.bf16.xpose.msra.mxu0 0
        %3785 = vmatprep.subr.bf16.mxu0 0
        %3786 = vmatpush2.bf16.xpose.msra.mxu0 0
        %3787 = vmatprep.subr.bf16.mxu0 0
        %3788 = vmatpush2.bf16.xpose.msra.mxu0 0
        %3789 = vmatprep.subr.bf16.mxu0 0
        %3790 = vmatpush2.bf16.xpose.msra.mxu0 0
        %3791 = vmatprep.subr.bf16.mxu0 0
        %3792 = vmatpush2.bf16.xpose.msra.mxu0 0
        %3793 = vmatprep.subr.bf16.mxu0 0
        %3794 = vmatpush2.bf16.xpose.msra.mxu0 0
        %3795 = vmatprep.mubr.bf16.mxu0 0
        %3796 = vmatmul.mubr.bf16.gmra.mxu0 %v3533
        %v3797 = vpop.f32.mrf.mxu0
        %v3798 = vadd.f32 0.0, %v3797
        %v3799 = vpop.f32.mrf.mxu0
        %v3800 = vpop.f32.mrf.mxu0
        %v3801 = vpop.f32.mrf.mxu0
        %3802 = vdwg.mxu0
        %3803 = vrot.lane.b32.xlu0 %v876, 32
        %v3804 = vpop.permute.xlu0 %3803
        %v3806 = vsel %vm907, %v3804, 0
        %3808 = vmatprep.subr.bf16.mxu0 0
        %3809 = vmatpush1.bf16.xpose.msra.mxu0 0
        %3810 = vmatprep.subr.bf16.mxu0 0
        %3811 = vmatpush1.bf16.xpose.msra.mxu0 0
        %3812 = vmatprep.subr.bf16.mxu0 0
        %3813 = vmatpush1.bf16.xpose.msra.mxu0 0
        %3814 = vmatprep.subr.bf16.mxu0 0
        %3815 = vmatpush1.bf16.xpose.msra.mxu0 0
        %3816 = vmatprep.subr.bf16.mxu0 0
        %3817 = vmatpush1.bf16.xpose.msra.mxu0 0
        %3818 = vmatprep.subr.bf16.mxu0 0
        %3819 = vmatpush1.bf16.xpose.msra.mxu0 0
        %3820 = vmatprep.subr.bf16.mxu0 0
        %3821 = vmatpush1.bf16.xpose.msra.mxu0 0
        %3822 = vmatprep.subr.bf16.mxu0 0
        %3823 = vmatpush1.bf16.xpose.msra.mxu0 %v3806
        %3824 = vmatprep.subr.bf16.mxu0 0
        %3825 = vmatpush2.bf16.xpose.msra.mxu0 0
        %3826 = vmatprep.subr.bf16.mxu0 0
        %3827 = vmatpush2.bf16.xpose.msra.mxu0 0
        %3828 = vmatprep.subr.bf16.mxu0 0
        %3829 = vmatpush2.bf16.xpose.msra.mxu0 0
        %3830 = vmatprep.subr.bf16.mxu0 0
        %3831 = vmatpush2.bf16.xpose.msra.mxu0 0
        %3832 = vmatprep.subr.bf16.mxu0 0
        %3833 = vmatpush2.bf16.xpose.msra.mxu0 0
        %3834 = vmatprep.subr.bf16.mxu0 0
        %3835 = vmatpush2.bf16.xpose.msra.mxu0 0
        %3836 = vmatprep.subr.bf16.mxu0 0
        %3837 = vmatpush2.bf16.xpose.msra.mxu0 0
        %3838 = vmatprep.subr.bf16.mxu0 0
        %3839 = vmatpush2.bf16.xpose.msra.mxu0 0
        %3840 = vmatprep.mubr.bf16.mxu0 0
        %3841 = vmatmul.mubr.bf16.gmra.mxu0 %v3533
        %v3842 = vpop.f32.mrf.mxu0
        %v3843 = vadd.f32 0.0, %v3842
        %v3844 = vpop.f32.mrf.mxu0
        %v3845 = vpop.f32.mrf.mxu0
        %v3846 = vpop.f32.mrf.mxu0
        %3847 = vdwg.mxu0
        %3848 = vrot.lane.b32.xlu0 %v877, 32
        %v3849 = vpop.permute.xlu0 %3848
        %v3851 = vsel %vm907, %v3849, 0
        %3853 = vmatprep.subr.bf16.mxu0 0
        %3854 = vmatpush1.bf16.xpose.msra.mxu0 0
        %3855 = vmatprep.subr.bf16.mxu0 0
        %3856 = vmatpush1.bf16.xpose.msra.mxu0 0
        %3857 = vmatprep.subr.bf16.mxu0 0
        %3858 = vmatpush1.bf16.xpose.msra.mxu0 0
        %3859 = vmatprep.subr.bf16.mxu0 0
        %3860 = vmatpush1.bf16.xpose.msra.mxu0 0
        %3861 = vmatprep.subr.bf16.mxu0 0
        %3862 = vmatpush1.bf16.xpose.msra.mxu0 0
        %3863 = vmatprep.subr.bf16.mxu0 0
        %3864 = vmatpush1.bf16.xpose.msra.mxu0 0
        %3865 = vmatprep.subr.bf16.mxu0 0
        %3866 = vmatpush1.bf16.xpose.msra.mxu0 0
        %3867 = vmatprep.subr.bf16.mxu0 0
        %3868 = vmatpush1.bf16.xpose.msra.mxu0 %v3851
        %3869 = vmatprep.subr.bf16.mxu0 0
        %3870 = vmatpush2.bf16.xpose.msra.mxu0 0
        %3871 = vmatprep.subr.bf16.mxu0 0
        %3872 = vmatpush2.bf16.xpose.msra.mxu0 0
        %3873 = vmatprep.subr.bf16.mxu0 0
        %3874 = vmatpush2.bf16.xpose.msra.mxu0 0
        %3875 = vmatprep.subr.bf16.mxu0 0
        %3876 = vmatpush2.bf16.xpose.msra.mxu0 0
        %3877 = vmatprep.subr.bf16.mxu0 0
        %3878 = vmatpush2.bf16.xpose.msra.mxu0 0
        %3879 = vmatprep.subr.bf16.mxu0 0
        %3880 = vmatpush2.bf16.xpose.msra.mxu0 0
        %3881 = vmatprep.subr.bf16.mxu0 0
        %3882 = vmatpush2.bf16.xpose.msra.mxu0 0
        %3883 = vmatprep.subr.bf16.mxu0 0
        %3884 = vmatpush2.bf16.xpose.msra.mxu0 0
        %3885 = vmatprep.mubr.bf16.mxu0 0
        %3886 = vmatmul.mubr.bf16.gmra.mxu0 %v3533
        %v3887 = vpop.f32.mrf.mxu0
        %v3888 = vadd.f32 0.0, %v3887
        %v3889 = vpop.f32.mrf.mxu0
        %v3890 = vpop.f32.mrf.mxu0
        %v3891 = vpop.f32.mrf.mxu0
        %3892 = vdwg.mxu0
        %v3893 = vsel %vm1255, %v3573, -inf
        %3894 = vmax.xlane.f32.xlu0 %v3893
        %v3895 = vpop.xlane.xlu0 %3894
        %v3896 = vsel %vm1255, %v3618, -inf
        %3897 = vmax.xlane.f32.xlu0 %v3896
        %v3898 = vpop.xlane.xlu0 %3897
        %v3899 = vsel %vm1255, %v3663, -inf
        %3900 = vmax.xlane.f32.xlu0 %v3899
        %v3901 = vpop.xlane.xlu0 %3900
        %v3902 = vsel %vm1255, %v3708, -inf
        %3903 = vmax.xlane.f32.xlu0 %v3902
        %v3904 = vpop.xlane.xlu0 %3903
        %v3905 = vsel %vm1255, %v3753, -inf
        %3906 = vmax.xlane.f32.xlu0 %v3905
        %v3907 = vpop.xlane.xlu0 %3906
        %v3908 = vsel %vm1255, %v3798, -inf
        %3909 = vmax.xlane.f32.xlu0 %v3908
        %v3910 = vpop.xlane.xlu0 %3909
        %v3911 = vsel %vm1255, %v3843, -inf
        %3912 = vmax.xlane.f32.xlu0 %v3911
        %v3913 = vpop.xlane.xlu0 %3912
        %v3914 = vsel %vm1255, %v3888, -inf
        %3915 = vmax.xlane.f32.xlu0 %v3914
        %v3916 = vpop.xlane.xlu0 %3915
        %v3917 = vsub.f32 %v3573, %v3895
        %v3918 = vsub.f32 %v3618, %v3898
        %v3919 = vsub.f32 %v3663, %v3901
        %v3920 = vsub.f32 %v3708, %v3904
        %v3921 = vsub.f32 %v3753, %v3907
        %v3922 = vsub.f32 %v3798, %v3910
        %v3923 = vsub.f32 %v3843, %v3913
        %v3924 = vsub.f32 %v3888, %v3916
        %v3925 = vmul.f32 %v3917, 1.442695
        %v3926 = vpow.pop %v3925
        %v3927 = vmul.f32 %v3918, 1.442695
        %v3928 = vpow.pop %v3927
        %v3929 = vmul.f32 %v3919, 1.442695
        %v3930 = vpow.pop %v3929
        %v3931 = vmul.f32 %v3920, 1.442695
        %v3932 = vpow.pop %v3931
        %v3933 = vmul.f32 %v3921, 1.442695
        %v3934 = vpow.pop %v3933
        %v3935 = vmul.f32 %v3922, 1.442695
        %v3936 = vpow.pop %v3935
        %v3937 = vmul.f32 %v3923, 1.442695
        %v3938 = vpow.pop %v3937
        %v3939 = vmul.f32 %v3924, 1.442695
        %v3940 = vpow.pop %v3939
        %v3941 = vsel %vm1255, %v3926, 0.0
        %3942 = vadd.xlane.f32.xlu0 %v3941
        %v3943 = vpop.xlane.xlu0 %3942
        %v3944 = vsel %vm1255, %v3928, 0.0
        %3945 = vadd.xlane.f32.xlu0 %v3944
        %v3946 = vpop.xlane.xlu0 %3945
        %v3947 = vsel %vm1255, %v3930, 0.0
        %3948 = vadd.xlane.f32.xlu0 %v3947
        %v3949 = vpop.xlane.xlu0 %3948
        %v3950 = vsel %vm1255, %v3932, 0.0
        %3951 = vadd.xlane.f32.xlu0 %v3950
        %v3952 = vpop.xlane.xlu0 %3951
        %v3953 = vsel %vm1255, %v3934, 0.0
        %3954 = vadd.xlane.f32.xlu0 %v3953
        %v3955 = vpop.xlane.xlu0 %3954
        %v3956 = vsel %vm1255, %v3936, 0.0
        %3957 = vadd.xlane.f32.xlu0 %v3956
        %v3958 = vpop.xlane.xlu0 %3957
        %v3959 = vsel %vm1255, %v3938, 0.0
        %3960 = vadd.xlane.f32.xlu0 %v3959
        %v3961 = vpop.xlane.xlu0 %3960
        %v3962 = vsel %vm1255, %v3940, 0.0
        %3963 = vadd.xlane.f32.xlu0 %v3962
        %v3964 = vpop.xlane.xlu0 %3963
        %v3965 = vrcp.pop %v3943
        %v3966 = vmul.f32 %v3926, %v3965
        %v3967 = vrcp.pop %v3946
        %v3968 = vmul.f32 %v3928, %v3967
        %v3969 = vrcp.pop %v3949
        %v3970 = vmul.f32 %v3930, %v3969
        %v3971 = vrcp.pop %v3952
        %v3972 = vmul.f32 %v3932, %v3971
        %v3973 = vrcp.pop %v3955
        %v3974 = vmul.f32 %v3934, %v3973
        %v3975 = vrcp.pop %v3958
        %v3976 = vmul.f32 %v3936, %v3975
        %v3977 = vrcp.pop %v3961
        %v3978 = vmul.f32 %v3938, %v3977
        %v3979 = vrcp.pop %v3964
        %v3980 = vmul.f32 %v3940, %v3979
        %v3981 = vpack.c.bf16 %v3966, %v3966
        %v3982 = vpack.c.bf16 %v3968, %v3968
        %v3983 = vpack.c.bf16 %v3970, %v3970
        %v3984 = vpack.c.bf16 %v3972, %v3972
        %v3985 = vpack.c.bf16 %v3974, %v3974
        %v3986 = vpack.c.bf16 %v3976, %v3976
        %v3987 = vpack.c.bf16 %v3978, %v3978
        %v3988 = vpack.c.bf16 %v3980, %v3980
        %3989 = vrot.lane.b32.xlu0 %v898, 32
        %v3990 = vpop.permute.xlu0 %3989
        %v3993 = vsel %vm1255, %v3981, 0
        %3995 = vmatprep.subr.bf16.mxu0 0
        %3996 = vmatpush1.bf16.msra.mxu0 0
        %3997 = vmatprep.subr.bf16.mxu0 0
        %3998 = vmatpush1.bf16.msra.mxu0 0
        %3999 = vmatprep.subr.bf16.mxu0 0
        %4000 = vmatpush1.bf16.msra.mxu0 0
        %4001 = vmatprep.subr.bf16.mxu0 0
        %4002 = vmatpush1.bf16.msra.mxu0 0
        %4003 = vmatprep.subr.bf16.mxu0 0
        %4004 = vmatpush1.bf16.msra.mxu0 0
        %4005 = vmatprep.subr.bf16.mxu0 0
        %4006 = vmatpush1.bf16.msra.mxu0 0
        %4007 = vmatprep.subr.bf16.mxu0 0
        %4008 = vmatpush1.bf16.msra.mxu0 0
        %4009 = vmatprep.subr.bf16.mxu0 0
        %4010 = vmatpush1.bf16.msra.mxu0 %v3990
        %4011 = vmatprep.subr.bf16.mxu0 0
        %4012 = vmatpush2.bf16.msra.mxu0 0
        %4013 = vmatprep.subr.bf16.mxu0 0
        %4014 = vmatpush2.bf16.msra.mxu0 0
        %4015 = vmatprep.subr.bf16.mxu0 0
        %4016 = vmatpush2.bf16.msra.mxu0 0
        %4017 = vmatprep.subr.bf16.mxu0 0
        %4018 = vmatpush2.bf16.msra.mxu0 0
        %4019 = vmatprep.subr.bf16.mxu0 0
        %4020 = vmatpush2.bf16.msra.mxu0 0
        %4021 = vmatprep.subr.bf16.mxu0 0
        %4022 = vmatpush2.bf16.msra.mxu0 0
        %4023 = vmatprep.subr.bf16.mxu0 0
        %4024 = vmatpush2.bf16.msra.mxu0 0
        %4025 = vmatprep.subr.bf16.mxu0 0
        %4026 = vmatpush2.bf16.msra.mxu0 0
        %4027 = vmatprep.mubr.bf16.mxu0 0
        %4028 = vmatmul.mubr.bf16.gmra.mxu0 %v3993
        %v4029 = vpop.f32.mrf.mxu0
        %v4030 = vadd.f32 0.0, %v4029
        %v4031 = vpop.f32.mrf.mxu0
        %v4032 = vpop.f32.mrf.mxu0
        %v4033 = vpop.f32.mrf.mxu0
        %4034 = vdwg.mxu0
        %4035 = vrot.lane.b32.xlu0 %v899, 32
        %v4036 = vpop.permute.xlu0 %4035
        %v4039 = vsel %vm1255, %v3982, 0
        %4041 = vmatprep.subr.bf16.mxu0 0
        %4042 = vmatpush1.bf16.msra.mxu0 0
        %4043 = vmatprep.subr.bf16.mxu0 0
        %4044 = vmatpush1.bf16.msra.mxu0 0
        %4045 = vmatprep.subr.bf16.mxu0 0
        %4046 = vmatpush1.bf16.msra.mxu0 0
        %4047 = vmatprep.subr.bf16.mxu0 0
        %4048 = vmatpush1.bf16.msra.mxu0 0
        %4049 = vmatprep.subr.bf16.mxu0 0
        %4050 = vmatpush1.bf16.msra.mxu0 0
        %4051 = vmatprep.subr.bf16.mxu0 0
        %4052 = vmatpush1.bf16.msra.mxu0 0
        %4053 = vmatprep.subr.bf16.mxu0 0
        %4054 = vmatpush1.bf16.msra.mxu0 0
        %4055 = vmatprep.subr.bf16.mxu0 0
        %4056 = vmatpush1.bf16.msra.mxu0 %v4036
        %4057 = vmatprep.subr.bf16.mxu0 0
        %4058 = vmatpush2.bf16.msra.mxu0 0
        %4059 = vmatprep.subr.bf16.mxu0 0
        %4060 = vmatpush2.bf16.msra.mxu0 0
        %4061 = vmatprep.subr.bf16.mxu0 0
        %4062 = vmatpush2.bf16.msra.mxu0 0
        %4063 = vmatprep.subr.bf16.mxu0 0
        %4064 = vmatpush2.bf16.msra.mxu0 0
        %4065 = vmatprep.subr.bf16.mxu0 0
        %4066 = vmatpush2.bf16.msra.mxu0 0
        %4067 = vmatprep.subr.bf16.mxu0 0
        %4068 = vmatpush2.bf16.msra.mxu0 0
        %4069 = vmatprep.subr.bf16.mxu0 0
        %4070 = vmatpush2.bf16.msra.mxu0 0
        %4071 = vmatprep.subr.bf16.mxu0 0
        %4072 = vmatpush2.bf16.msra.mxu0 0
        %4073 = vmatprep.mubr.bf16.mxu0 0
        %4074 = vmatmul.mubr.bf16.gmra.mxu0 %v4039
        %v4075 = vpop.f32.mrf.mxu0
        %v4076 = vadd.f32 0.0, %v4075
        %v4077 = vpop.f32.mrf.mxu0
        %v4078 = vpop.f32.mrf.mxu0
        %v4079 = vpop.f32.mrf.mxu0
        %4080 = vdwg.mxu0
        %4081 = vrot.lane.b32.xlu0 %v900, 32
        %v4082 = vpop.permute.xlu0 %4081
        %v4085 = vsel %vm1255, %v3983, 0
        %4087 = vmatprep.subr.bf16.mxu0 0
        %4088 = vmatpush1.bf16.msra.mxu0 0
        %4089 = vmatprep.subr.bf16.mxu0 0
        %4090 = vmatpush1.bf16.msra.mxu0 0
        %4091 = vmatprep.subr.bf16.mxu0 0
        %4092 = vmatpush1.bf16.msra.mxu0 0
        %4093 = vmatprep.subr.bf16.mxu0 0
        %4094 = vmatpush1.bf16.msra.mxu0 0
        %4095 = vmatprep.subr.bf16.mxu0 0
        %4096 = vmatpush1.bf16.msra.mxu0 0
        %4097 = vmatprep.subr.bf16.mxu0 0
        %4098 = vmatpush1.bf16.msra.mxu0 0
        %4099 = vmatprep.subr.bf16.mxu0 0
        %4100 = vmatpush1.bf16.msra.mxu0 0
        %4101 = vmatprep.subr.bf16.mxu0 0
        %4102 = vmatpush1.bf16.msra.mxu0 %v4082
        %4103 = vmatprep.subr.bf16.mxu0 0
        %4104 = vmatpush2.bf16.msra.mxu0 0
        %4105 = vmatprep.subr.bf16.mxu0 0
        %4106 = vmatpush2.bf16.msra.mxu0 0
        %4107 = vmatprep.subr.bf16.mxu0 0
        %4108 = vmatpush2.bf16.msra.mxu0 0
        %4109 = vmatprep.subr.bf16.mxu0 0
        %4110 = vmatpush2.bf16.msra.mxu0 0
        %4111 = vmatprep.subr.bf16.mxu0 0
        %4112 = vmatpush2.bf16.msra.mxu0 0
        %4113 = vmatprep.subr.bf16.mxu0 0
        %4114 = vmatpush2.bf16.msra.mxu0 0
        %4115 = vmatprep.subr.bf16.mxu0 0
        %4116 = vmatpush2.bf16.msra.mxu0 0
        %4117 = vmatprep.subr.bf16.mxu0 0
        %4118 = vmatpush2.bf16.msra.mxu0 0
        %4119 = vmatprep.mubr.bf16.mxu0 0
        %4120 = vmatmul.mubr.bf16.gmra.mxu0 %v4085
        %v4121 = vpop.f32.mrf.mxu0
        %v4122 = vadd.f32 0.0, %v4121
        %v4123 = vpop.f32.mrf.mxu0
        %v4124 = vpop.f32.mrf.mxu0
        %v4125 = vpop.f32.mrf.mxu0
        %4126 = vdwg.mxu0
        %4127 = vrot.lane.b32.xlu0 %v901, 32
        %v4128 = vpop.permute.xlu0 %4127
        %v4131 = vsel %vm1255, %v3984, 0
        %4133 = vmatprep.subr.bf16.mxu0 0
        %4134 = vmatpush1.bf16.msra.mxu0 0
        %4135 = vmatprep.subr.bf16.mxu0 0
        %4136 = vmatpush1.bf16.msra.mxu0 0
        %4137 = vmatprep.subr.bf16.mxu0 0
        %4138 = vmatpush1.bf16.msra.mxu0 0
        %4139 = vmatprep.subr.bf16.mxu0 0
        %4140 = vmatpush1.bf16.msra.mxu0 0
        %4141 = vmatprep.subr.bf16.mxu0 0
        %4142 = vmatpush1.bf16.msra.mxu0 0
        %4143 = vmatprep.subr.bf16.mxu0 0
        %4144 = vmatpush1.bf16.msra.mxu0 0
        %4145 = vmatprep.subr.bf16.mxu0 0
        %4146 = vmatpush1.bf16.msra.mxu0 0
        %4147 = vmatprep.subr.bf16.mxu0 0
        %4148 = vmatpush1.bf16.msra.mxu0 %v4128
        %4149 = vmatprep.subr.bf16.mxu0 0
        %4150 = vmatpush2.bf16.msra.mxu0 0
        %4151 = vmatprep.subr.bf16.mxu0 0
        %4152 = vmatpush2.bf16.msra.mxu0 0
        %4153 = vmatprep.subr.bf16.mxu0 0
        %4154 = vmatpush2.bf16.msra.mxu0 0
        %4155 = vmatprep.subr.bf16.mxu0 0
        %4156 = vmatpush2.bf16.msra.mxu0 0
        %4157 = vmatprep.subr.bf16.mxu0 0
        %4158 = vmatpush2.bf16.msra.mxu0 0
        %4159 = vmatprep.subr.bf16.mxu0 0
        %4160 = vmatpush2.bf16.msra.mxu0 0
        %4161 = vmatprep.subr.bf16.mxu0 0
        %4162 = vmatpush2.bf16.msra.mxu0 0
        %4163 = vmatprep.subr.bf16.mxu0 0
        %4164 = vmatpush2.bf16.msra.mxu0 0
        %4165 = vmatprep.mubr.bf16.mxu0 0
        %4166 = vmatmul.mubr.bf16.gmra.mxu0 %v4131
        %v4167 = vpop.f32.mrf.mxu0
        %v4168 = vadd.f32 0.0, %v4167
        %v4169 = vpop.f32.mrf.mxu0
        %v4170 = vpop.f32.mrf.mxu0
        %v4171 = vpop.f32.mrf.mxu0
        %4172 = vdwg.mxu0
        %4173 = vrot.lane.b32.xlu0 %v902, 32
        %v4174 = vpop.permute.xlu0 %4173
        %v4177 = vsel %vm1255, %v3985, 0
        %4179 = vmatprep.subr.bf16.mxu0 0
        %4180 = vmatpush1.bf16.msra.mxu0 0
        %4181 = vmatprep.subr.bf16.mxu0 0
        %4182 = vmatpush1.bf16.msra.mxu0 0
        %4183 = vmatprep.subr.bf16.mxu0 0
        %4184 = vmatpush1.bf16.msra.mxu0 0
        %4185 = vmatprep.subr.bf16.mxu0 0
        %4186 = vmatpush1.bf16.msra.mxu0 0
        %4187 = vmatprep.subr.bf16.mxu0 0
        %4188 = vmatpush1.bf16.msra.mxu0 0
        %4189 = vmatprep.subr.bf16.mxu0 0
        %4190 = vmatpush1.bf16.msra.mxu0 0
        %4191 = vmatprep.subr.bf16.mxu0 0
        %4192 = vmatpush1.bf16.msra.mxu0 0
        %4193 = vmatprep.subr.bf16.mxu0 0
        %4194 = vmatpush1.bf16.msra.mxu0 %v4174
        %4195 = vmatprep.subr.bf16.mxu0 0
        %4196 = vmatpush2.bf16.msra.mxu0 0
        %4197 = vmatprep.subr.bf16.mxu0 0
        %4198 = vmatpush2.bf16.msra.mxu0 0
        %4199 = vmatprep.subr.bf16.mxu0 0
        %4200 = vmatpush2.bf16.msra.mxu0 0
        %4201 = vmatprep.subr.bf16.mxu0 0
        %4202 = vmatpush2.bf16.msra.mxu0 0
        %4203 = vmatprep.subr.bf16.mxu0 0
        %4204 = vmatpush2.bf16.msra.mxu0 0
        %4205 = vmatprep.subr.bf16.mxu0 0
        %4206 = vmatpush2.bf16.msra.mxu0 0
        %4207 = vmatprep.subr.bf16.mxu0 0
        %4208 = vmatpush2.bf16.msra.mxu0 0
        %4209 = vmatprep.subr.bf16.mxu0 0
        %4210 = vmatpush2.bf16.msra.mxu0 0
        %4211 = vmatprep.mubr.bf16.mxu0 0
        %4212 = vmatmul.mubr.bf16.gmra.mxu0 %v4177
        %v4213 = vpop.f32.mrf.mxu0
        %v4214 = vadd.f32 0.0, %v4213
        %v4215 = vpop.f32.mrf.mxu0
        %v4216 = vpop.f32.mrf.mxu0
        %v4217 = vpop.f32.mrf.mxu0
        %4218 = vdwg.mxu0
        %4219 = vrot.lane.b32.xlu0 %v903, 32
        %v4220 = vpop.permute.xlu0 %4219
        %v4223 = vsel %vm1255, %v3986, 0
        %4225 = vmatprep.subr.bf16.mxu0 0
        %4226 = vmatpush1.bf16.msra.mxu0 0
        %4227 = vmatprep.subr.bf16.mxu0 0
        %4228 = vmatpush1.bf16.msra.mxu0 0
        %4229 = vmatprep.subr.bf16.mxu0 0
        %4230 = vmatpush1.bf16.msra.mxu0 0
        %4231 = vmatprep.subr.bf16.mxu0 0
        %4232 = vmatpush1.bf16.msra.mxu0 0
        %4233 = vmatprep.subr.bf16.mxu0 0
        %4234 = vmatpush1.bf16.msra.mxu0 0
        %4235 = vmatprep.subr.bf16.mxu0 0
        %4236 = vmatpush1.bf16.msra.mxu0 0
        %4237 = vmatprep.subr.bf16.mxu0 0
        %4238 = vmatpush1.bf16.msra.mxu0 0
        %4239 = vmatprep.subr.bf16.mxu0 0
        %4240 = vmatpush1.bf16.msra.mxu0 %v4220
        %4241 = vmatprep.subr.bf16.mxu0 0
        %4242 = vmatpush2.bf16.msra.mxu0 0
        %4243 = vmatprep.subr.bf16.mxu0 0
        %4244 = vmatpush2.bf16.msra.mxu0 0
        %4245 = vmatprep.subr.bf16.mxu0 0
        %4246 = vmatpush2.bf16.msra.mxu0 0
        %4247 = vmatprep.subr.bf16.mxu0 0
        %4248 = vmatpush2.bf16.msra.mxu0 0
        %4249 = vmatprep.subr.bf16.mxu0 0
        %4250 = vmatpush2.bf16.msra.mxu0 0
        %4251 = vmatprep.subr.bf16.mxu0 0
        %4252 = vmatpush2.bf16.msra.mxu0 0
        %4253 = vmatprep.subr.bf16.mxu0 0
        %4254 = vmatpush2.bf16.msra.mxu0 0
        %4255 = vmatprep.subr.bf16.mxu0 0
        %4256 = vmatpush2.bf16.msra.mxu0 0
        %4257 = vmatprep.mubr.bf16.mxu0 0
        %4258 = vmatmul.mubr.bf16.gmra.mxu0 %v4223
        %v4259 = vpop.f32.mrf.mxu0
        %v4260 = vadd.f32 0.0, %v4259
        %v4261 = vpop.f32.mrf.mxu0
        %v4262 = vpop.f32.mrf.mxu0
        %v4263 = vpop.f32.mrf.mxu0
        %4264 = vdwg.mxu0
        %4265 = vrot.lane.b32.xlu0 %v904, 32
        %v4266 = vpop.permute.xlu0 %4265
        %v4269 = vsel %vm1255, %v3987, 0
        %4271 = vmatprep.subr.bf16.mxu0 0
        %4272 = vmatpush1.bf16.msra.mxu0 0
        %4273 = vmatprep.subr.bf16.mxu0 0
        %4274 = vmatpush1.bf16.msra.mxu0 0
        %4275 = vmatprep.subr.bf16.mxu0 0
        %4276 = vmatpush1.bf16.msra.mxu0 0
        %4277 = vmatprep.subr.bf16.mxu0 0
        %4278 = vmatpush1.bf16.msra.mxu0 0
        %4279 = vmatprep.subr.bf16.mxu0 0
        %4280 = vmatpush1.bf16.msra.mxu0 0
        %4281 = vmatprep.subr.bf16.mxu0 0
        %4282 = vmatpush1.bf16.msra.mxu0 0
        %4283 = vmatprep.subr.bf16.mxu0 0
        %4284 = vmatpush1.bf16.msra.mxu0 0
        %4285 = vmatprep.subr.bf16.mxu0 0
        %4286 = vmatpush1.bf16.msra.mxu0 %v4266
        %4287 = vmatprep.subr.bf16.mxu0 0
        %4288 = vmatpush2.bf16.msra.mxu0 0
        %4289 = vmatprep.subr.bf16.mxu0 0
        %4290 = vmatpush2.bf16.msra.mxu0 0
        %4291 = vmatprep.subr.bf16.mxu0 0
        %4292 = vmatpush2.bf16.msra.mxu0 0
        %4293 = vmatprep.subr.bf16.mxu0 0
        %4294 = vmatpush2.bf16.msra.mxu0 0
        %4295 = vmatprep.subr.bf16.mxu0 0
        %4296 = vmatpush2.bf16.msra.mxu0 0
        %4297 = vmatprep.subr.bf16.mxu0 0
        %4298 = vmatpush2.bf16.msra.mxu0 0
        %4299 = vmatprep.subr.bf16.mxu0 0
        %4300 = vmatpush2.bf16.msra.mxu0 0
        %4301 = vmatprep.subr.bf16.mxu0 0
        %4302 = vmatpush2.bf16.msra.mxu0 0
        %4303 = vmatprep.mubr.bf16.mxu0 0
        %4304 = vmatmul.mubr.bf16.gmra.mxu0 %v4269
        %v4305 = vpop.f32.mrf.mxu0
        %v4306 = vadd.f32 0.0, %v4305
        %v4307 = vpop.f32.mrf.mxu0
        %v4308 = vpop.f32.mrf.mxu0
        %v4309 = vpop.f32.mrf.mxu0
        %4310 = vdwg.mxu0
        %4311 = vrot.lane.b32.xlu0 %v905, 32
        %v4312 = vpop.permute.xlu0 %4311
        %v4315 = vsel %vm1255, %v3988, 0
        %4317 = vmatprep.subr.bf16.mxu0 0
        %4318 = vmatpush1.bf16.msra.mxu0 0
        %4319 = vmatprep.subr.bf16.mxu0 0
        %4320 = vmatpush1.bf16.msra.mxu0 0
        %4321 = vmatprep.subr.bf16.mxu0 0
        %4322 = vmatpush1.bf16.msra.mxu0 0
        %4323 = vmatprep.subr.bf16.mxu0 0
        %4324 = vmatpush1.bf16.msra.mxu0 0
        %4325 = vmatprep.subr.bf16.mxu0 0
        %4326 = vmatpush1.bf16.msra.mxu0 0
        %4327 = vmatprep.subr.bf16.mxu0 0
        %4328 = vmatpush1.bf16.msra.mxu0 0
        %4329 = vmatprep.subr.bf16.mxu0 0
        %4330 = vmatpush1.bf16.msra.mxu0 0
        %4331 = vmatprep.subr.bf16.mxu0 0
        %4332 = vmatpush1.bf16.msra.mxu0 %v4312
        %4333 = vmatprep.subr.bf16.mxu0 0
        %4334 = vmatpush2.bf16.msra.mxu0 0
        %4335 = vmatprep.subr.bf16.mxu0 0
        %4336 = vmatpush2.bf16.msra.mxu0 0
        %4337 = vmatprep.subr.bf16.mxu0 0
        %4338 = vmatpush2.bf16.msra.mxu0 0
        %4339 = vmatprep.subr.bf16.mxu0 0
        %4340 = vmatpush2.bf16.msra.mxu0 0
        %4341 = vmatprep.subr.bf16.mxu0 0
        %4342 = vmatpush2.bf16.msra.mxu0 0
        %4343 = vmatprep.subr.bf16.mxu0 0
        %4344 = vmatpush2.bf16.msra.mxu0 0
        %4345 = vmatprep.subr.bf16.mxu0 0
        %4346 = vmatpush2.bf16.msra.mxu0 0
        %4347 = vmatprep.subr.bf16.mxu0 0
        %4348 = vmatpush2.bf16.msra.mxu0 0
        %4349 = vmatprep.mubr.bf16.mxu0 0
        %4350 = vmatmul.mubr.bf16.gmra.mxu0 %v4315
        %v4351 = vpop.f32.mrf.mxu0
        %v4352 = vadd.f32 0.0, %v4351
        %v4353 = vpop.f32.mrf.mxu0
        %v4354 = vpop.f32.mrf.mxu0
        %v4355 = vpop.f32.mrf.mxu0
        %4356 = vdwg.mxu0
        %v4357 = vpack.c.bf16 %v4076, %v4030
        %v4358 = vpack.c.bf16 %v4168, %v4122
        %v4359 = vpack.c.bf16 %v4260, %v4214
        %v4360 = vpack.c.bf16 %v4352, %v4306
        %v4365 = vunpack.c.l.b16 %v4357
        %v4366 = vunpack.c.h.b16 %v4357
        %v4367 = vunpack.c.l.b16 %v4358
        %v4368 = vunpack.c.h.b16 %v4358
        %v4369 = vunpack.c.l.b16 %v4359
        %v4370 = vunpack.c.h.b16 %v4359
        %v4371 = vunpack.c.l.b16 %v4360
        %v4372 = vunpack.c.h.b16 %v4360
        %v4373 = vpack.c.b16 %v4365, %v4365
        %v4374 = vpack.c.b16 %v4366, %v4366
        %v4375 = vpack.c.b16 %v4367, %v4367
        %v4376 = vpack.c.b16 %v4368, %v4368
        %v4377 = vpack.c.b16 %v4369, %v4369
        %v4378 = vpack.c.b16 %v4370, %v4370
        %v4379 = vpack.c.b16 %v4371, %v4371
        %v4380 = vpack.c.b16 %v4372, %v4372
        %4381 = vrot.lane.b32.xlu0 %v4373, 96
        %v4382 = vpop.permute.xlu0 %4381
        %4383 = vrot.lane.b32.xlu0 %v4374, 96
        %v4384 = vpop.permute.xlu0 %4383
        %4385 = vrot.lane.b32.xlu0 %v4375, 96
        %v4386 = vpop.permute.xlu0 %4385
        %4387 = vrot.lane.b32.xlu0 %v4376, 96
        %v4388 = vpop.permute.xlu0 %4387
        %4389 = vrot.lane.b32.xlu0 %v4377, 96
        %v4390 = vpop.permute.xlu0 %4389
        %4391 = vrot.lane.b32.xlu0 %v4378, 96
        %v4392 = vpop.permute.xlu0 %4391
        %4393 = vrot.lane.b32.xlu0 %v4379, 96
        %v4394 = vpop.permute.xlu0 %4393
        %4395 = vrot.lane.b32.xlu0 %v4380, 96
        %v4396 = vpop.permute.xlu0 %4395
        %vm4405 = vcmask 1044224
        %4406 = vst.msk [vmem:[#allocation2] sm:$0xf] %vm4405, %v4382
        %4407 = vst.msk [vmem:[#allocation2 + $0x4] sm:$0xf] %vm4405, %v4384
        %4408 = vst.msk [vmem:[#allocation2 + $0x8] sm:$0xf] %vm4405, %v4386
        %4409 = vst.msk [vmem:[#allocation2 + $0xc] sm:$0xf] %vm4405, %v4388
        %4410 = vst.msk [vmem:[#allocation2 + $0x10] sm:$0xf] %vm4405, %v4390
        %4411 = vst.msk [vmem:[#allocation2 + $0x14] sm:$0xf] %vm4405, %v4392
        %4412 = vst.msk [vmem:[#allocation2 + $0x18] sm:$0xf] %vm4405, %v4394
        %4413 = vst.msk [vmem:[#allocation2 + $0x1c] sm:$0xf] %vm4405, %v4396
        %v4414 = vld [vmem:[#allocation2] sm:$0xf]
        %v4415 = vld [vmem:[#allocation2 + $0x4] sm:$0xf]
        %v4416 = vld [vmem:[#allocation2 + $0x8] sm:$0xf]
        %v4417 = vld [vmem:[#allocation2 + $0xc] sm:$0xf]
        %v4418 = vld [vmem:[#allocation2 + $0x10] sm:$0xf]
        %v4419 = vld [vmem:[#allocation2 + $0x14] sm:$0xf]
        %v4420 = vld [vmem:[#allocation2 + $0x18] sm:$0xf]
        %v4421 = vld [vmem:[#allocation2 + $0x1c] sm:$0xf]
        %v4422 = vld [vmem:[#allocation12] sm:$0xf]
        %v4423 = vld [vmem:[#allocation12 + $0x4] sm:$0xf]
        %v4424 = vld [vmem:[#allocation12 + $0x8] sm:$0xf]
        %v4425 = vld [vmem:[#allocation12 + $0xc] sm:$0xf]
        %v4426 = vld [vmem:[#allocation12 + $0x10] sm:$0xf]
        %v4427 = vld [vmem:[#allocation12 + $0x14] sm:$0xf]
        %v4428 = vld [vmem:[#allocation12 + $0x18] sm:$0xf]
        %v4429 = vld [vmem:[#allocation12 + $0x1c] sm:$0xf]
        %v4430 = vld [vmem:[#allocation12 + $0x20] sm:$0xf]
        %v4431 = vld [vmem:[#allocation12 + $0x24] sm:$0xf]
        %v4432 = vld [vmem:[#allocation12 + $0x28] sm:$0xf]
        %v4433 = vld [vmem:[#allocation12 + $0x2c] sm:$0xf]
        %v4434 = vld [vmem:[#allocation12 + $0x30] sm:$0xf]
        %v4435 = vld [vmem:[#allocation12 + $0x34] sm:$0xf]
        %v4436 = vld [vmem:[#allocation12 + $0x38] sm:$0xf]
        %v4437 = vld [vmem:[#allocation12 + $0x3c] sm:$0xf]
        %v4438 = vlaneseq
        %v4439 = vshrl.u32 %v4438, 7
        %v4440 = vsub.s32 3, %v4439
        %v4441 = vrot.slane %v426, %v4440
        %v4450 = vunpack.c.l.b16 %v4414
        %v4451 = vunpack.c.l.b16 %v4415
        %v4452 = vunpack.c.l.b16 %v4416
        %v4453 = vunpack.c.l.b16 %v4417
        %v4454 = vunpack.c.l.b16 %v4418
        %v4455 = vunpack.c.l.b16 %v4419
        %v4456 = vunpack.c.l.b16 %v4420
        %v4457 = vunpack.c.l.b16 %v4421
        %v4458 = vpack.c.b16 %v4451, %v4450
        %v4459 = vpack.c.b16 %v4453, %v4452
        %v4460 = vpack.c.b16 %v4455, %v4454
        %v4461 = vpack.c.b16 %v4457, %v4456
        %v4482 = vunpack.c.l.b16 %v4422
        %v4483 = vunpack.c.l.b16 %v4423
        %v4484 = vunpack.c.l.b16 %v4424
        %v4485 = vunpack.c.l.b16 %v4425
        %v4486 = vunpack.c.l.b16 %v4426
        %v4487 = vunpack.c.l.b16 %v4427
        %v4488 = vunpack.c.l.b16 %v4428
        %v4489 = vunpack.c.l.b16 %v4429
        %v4490 = vunpack.c.l.b16 %v4430
        %v4491 = vunpack.c.l.b16 %v4431
        %v4492 = vunpack.c.l.b16 %v4432
        %v4493 = vunpack.c.l.b16 %v4433
        %v4494 = vunpack.c.l.b16 %v4434
        %v4495 = vunpack.c.l.b16 %v4435
        %v4496 = vunpack.c.l.b16 %v4436
        %v4497 = vunpack.c.l.b16 %v4437
        %v4498 = vpack.c.b16 %v4483, %v4482
        %v4499 = vpack.c.b16 %v4485, %v4484
        %v4500 = vpack.c.b16 %v4487, %v4486
        %v4501 = vpack.c.b16 %v4489, %v4488
        %v4502 = vpack.c.b16 %v4491, %v4490
        %v4503 = vpack.c.b16 %v4493, %v4492
        %v4504 = vpack.c.b16 %v4495, %v4494
        %v4505 = vpack.c.b16 %v4497, %v4496
        %4514 = vmatprep.subr.bf16.mxu0 0
        %4515 = vmatpush1.bf16.msra.mxu0 %v4505
        %4516 = vmatprep.subr.bf16.mxu0 0
        %4517 = vmatpush1.bf16.msra.mxu0 %v4504
        %4518 = vmatprep.subr.bf16.mxu0 0
        %4519 = vmatpush1.bf16.msra.mxu0 %v4503
        %4520 = vmatprep.subr.bf16.mxu0 0
        %4521 = vmatpush1.bf16.msra.mxu0 %v4502
        %4522 = vmatprep.subr.bf16.mxu0 0
        %4523 = vmatpush1.bf16.msra.mxu0 %v4501
        %4524 = vmatprep.subr.bf16.mxu0 0
        %4525 = vmatpush1.bf16.msra.mxu0 %v4500
        %4526 = vmatprep.subr.bf16.mxu0 0
        %4527 = vmatpush1.bf16.msra.mxu0 %v4499
        %4528 = vmatprep.subr.bf16.mxu0 0
        %4529 = vmatpush1.bf16.msra.mxu0 %v4498
        %4530 = vmatprep.subr.bf16.mxu0 0
        %4531 = vmatpush2.bf16.msra.mxu0 0
        %4532 = vmatprep.subr.bf16.mxu0 0
        %4533 = vmatpush2.bf16.msra.mxu0 0
        %4534 = vmatprep.subr.bf16.mxu0 0
        %4535 = vmatpush2.bf16.msra.mxu0 0
        %4536 = vmatprep.subr.bf16.mxu0 0
        %4537 = vmatpush2.bf16.msra.mxu0 0
        %4538 = vmatprep.subr.bf16.mxu0 0
        %4539 = vmatpush2.bf16.msra.mxu0 0
        %4540 = vmatprep.subr.bf16.mxu0 0
        %4541 = vmatpush2.bf16.msra.mxu0 0
        %4542 = vmatprep.subr.bf16.mxu0 0
        %4543 = vmatpush2.bf16.msra.mxu0 0
        %4544 = vmatprep.subr.bf16.mxu0 0
        %4545 = vmatpush2.bf16.msra.mxu0 0
        %4546 = vmatprep.mubr.bf16.mxu0 0
        %4547 = vmatmul.mubr.bf16.gmra.mxu0 %v4458
        %v4548 = vpop.f32.mrf.mxu0
        %v4549 = vadd.f32 %v4441, %v4548
        %v4550 = vpop.f32.mrf.mxu0
        %v4551 = vpop.f32.mrf.mxu0
        %v4552 = vadd.f32 %v4441, %v4551
        %v4553 = vpop.f32.mrf.mxu0
        %4554 = vmatprep.mubr.bf16.mxu0 0
        %4555 = vmatmul.mubr.bf16.gmra.mxu0 %v4459
        %v4556 = vpop.f32.mrf.mxu0
        %v4557 = vadd.f32 %v4441, %v4556
        %v4558 = vpop.f32.mrf.mxu0
        %v4559 = vpop.f32.mrf.mxu0
        %v4560 = vadd.f32 %v4441, %v4559
        %v4561 = vpop.f32.mrf.mxu0
        %4562 = vmatprep.mubr.bf16.mxu0 0
        %4563 = vmatmul.mubr.bf16.gmra.mxu0 %v4460
        %v4564 = vpop.f32.mrf.mxu0
        %v4565 = vadd.f32 %v4441, %v4564
        %v4566 = vpop.f32.mrf.mxu0
        %v4567 = vpop.f32.mrf.mxu0
        %v4568 = vadd.f32 %v4441, %v4567
        %v4569 = vpop.f32.mrf.mxu0
        %4570 = vmatprep.mubr.bf16.mxu0 0
        %4571 = vmatmul.mubr.bf16.gmra.mxu0 %v4461
        %v4572 = vpop.f32.mrf.mxu0
        %v4573 = vadd.f32 %v4441, %v4572
        %v4574 = vpop.f32.mrf.mxu0
        %v4575 = vpop.f32.mrf.mxu0
        %v4576 = vadd.f32 %v4441, %v4575
        %v4577 = vpop.f32.mrf.mxu0
        %4578 = vdwg.mxu0
        %v4579 = vld [vmem:[#allocation8] sm:$0xff]
        %v4580 = vadd.f32 %v4549, %v4579
        %v4581 = vadd.f32 %v4552, %v4579
        %v4582 = vadd.f32 %v4557, %v4579
        %v4583 = vadd.f32 %v4560, %v4579
        %v4584 = vadd.f32 %v4565, %v4579
        %v4585 = vadd.f32 %v4568, %v4579
        %v4586 = vadd.f32 %v4573, %v4579
        %v4587 = vadd.f32 %v4576, %v4579
        %4588 = vadd.xlane.f32.xlu0 %v4580
        %v4589 = vpop.xlane.xlu0 %4588
        %4590 = vadd.xlane.f32.xlu0 %v4581
        %v4591 = vpop.xlane.xlu0 %4590
        %4592 = vadd.xlane.f32.xlu0 %v4582
        %v4593 = vpop.xlane.xlu0 %4592
        %4594 = vadd.xlane.f32.xlu0 %v4583
        %v4595 = vpop.xlane.xlu0 %4594
        %4596 = vadd.xlane.f32.xlu0 %v4584
        %v4597 = vpop.xlane.xlu0 %4596
        %4598 = vadd.xlane.f32.xlu0 %v4585
        %v4599 = vpop.xlane.xlu0 %4598
        %4600 = vadd.xlane.f32.xlu0 %v4586
        %v4601 = vpop.xlane.xlu0 %4600
        %4602 = vadd.xlane.f32.xlu0 %v4587
        %v4603 = vpop.xlane.xlu0 %4602
        %v4604 = vrcp.pop 128.0
        %v4605 = vmul.f32 %v4589, %v4604
        %v4606 = vmul.f32 %v4591, %v4604
        %v4607 = vmul.f32 %v4593, %v4604
        %v4608 = vmul.f32 %v4595, %v4604
        %v4609 = vmul.f32 %v4597, %v4604
        %v4610 = vmul.f32 %v4599, %v4604
        %v4611 = vmul.f32 %v4601, %v4604
        %v4612 = vmul.f32 %v4603, %v4604
        %v4613 = vsub.f32 %v4580, %v4605
        %v4614 = vsub.f32 %v4581, %v4606
        %v4615 = vsub.f32 %v4582, %v4607
        %v4616 = vsub.f32 %v4583, %v4608
        %v4617 = vsub.f32 %v4584, %v4609
        %v4618 = vsub.f32 %v4585, %v4610
        %v4619 = vsub.f32 %v4586, %v4611
        %v4620 = vsub.f32 %v4587, %v4612
        %v4621 = vmul.f32 %v4613, %v4613
        %v4622 = vmul.f32 %v4614, %v4614
        %v4623 = vmul.f32 %v4615, %v4615
        %v4624 = vmul.f32 %v4616, %v4616
        %v4625 = vmul.f32 %v4617, %v4617
        %v4626 = vmul.f32 %v4618, %v4618
        %v4627 = vmul.f32 %v4619, %v4619
        %v4628 = vmul.f32 %v4620, %v4620
        %4629 = vadd.xlane.f32.xlu0 %v4621
        %v4630 = vpop.xlane.xlu0 %4629
        %4631 = vadd.xlane.f32.xlu0 %v4622
        %v4632 = vpop.xlane.xlu0 %4631
        %4633 = vadd.xlane.f32.xlu0 %v4623
        %v4634 = vpop.xlane.xlu0 %4633
        %4635 = vadd.xlane.f32.xlu0 %v4624
        %v4636 = vpop.xlane.xlu0 %4635
        %4637 = vadd.xlane.f32.xlu0 %v4625
        %v4638 = vpop.xlane.xlu0 %4637
        %4639 = vadd.xlane.f32.xlu0 %v4626
        %v4640 = vpop.xlane.xlu0 %4639
        %4641 = vadd.xlane.f32.xlu0 %v4627
        %v4642 = vpop.xlane.xlu0 %4641
        %4643 = vadd.xlane.f32.xlu0 %v4628
        %v4644 = vpop.xlane.xlu0 %4643
        %v4645 = vmul.f32 %v4630, %v4604
        %v4646 = vmul.f32 %v4632, %v4604
        %v4647 = vmul.f32 %v4634, %v4604
        %v4648 = vmul.f32 %v4636, %v4604
        %v4649 = vmul.f32 %v4638, %v4604
        %v4650 = vmul.f32 %v4640, %v4604
        %v4651 = vmul.f32 %v4642, %v4604
        %v4652 = vmul.f32 %v4644, %v4604
        %v4653 = vadd.f32 %v4645, 1e-05
        %v4654 = vadd.f32 %v4646, 1e-05
        %v4655 = vadd.f32 %v4647, 1e-05
        %v4656 = vadd.f32 %v4648, 1e-05
        %v4657 = vadd.f32 %v4649, 1e-05
        %v4658 = vadd.f32 %v4650, 1e-05
        %v4659 = vadd.f32 %v4651, 1e-05
        %v4660 = vadd.f32 %v4652, 1e-05
        %v4661 = vrsqrt.pop %v4653
        %v4662 = vrsqrt.pop %v4654
        %v4663 = vrsqrt.pop %v4655
        %v4664 = vrsqrt.pop %v4656
        %v4665 = vrsqrt.pop %v4657
        %v4666 = vrsqrt.pop %v4658
        %v4667 = vrsqrt.pop %v4659
        %v4668 = vrsqrt.pop %v4660
        %v4669 = vmul.f32 %v4613, %v4661
        %v4670 = vmul.f32 %v4614, %v4662
        %v4671 = vmul.f32 %v4615, %v4663
        %v4672 = vmul.f32 %v4616, %v4664
        %v4673 = vmul.f32 %v4617, %v4665
        %v4674 = vmul.f32 %v4618, %v4666
        %v4675 = vmul.f32 %v4619, %v4667
        %v4676 = vmul.f32 %v4620, %v4668
        %v4677 = vlaneseq
        %v4678 = vshrl.u32 %v4677, 7
        %v4679 = vsub.s32 5, %v4678
        %v4680 = vrot.slane %v426, %v4679
        %v4681 = vmul.f32 %v4669, %v4680
        %v4682 = vmul.f32 %v4670, %v4680
        %v4683 = vmul.f32 %v4671, %v4680
        %v4684 = vmul.f32 %v4672, %v4680
        %v4685 = vmul.f32 %v4673, %v4680
        %v4686 = vmul.f32 %v4674, %v4680
        %v4687 = vmul.f32 %v4675, %v4680
        %v4688 = vmul.f32 %v4676, %v4680
        %v4689 = vlaneseq
        %v4690 = vshrl.u32 %v4689, 7
        %v4691 = vsub.s32 6, %v4690
        %v4692 = vrot.slane %v426, %v4691
        %v4693 = vadd.f32 %v4681, %v4692
        %v4694 = vadd.f32 %v4682, %v4692
        %v4695 = vadd.f32 %v4683, %v4692
        %v4696 = vadd.f32 %v4684, %v4692
        %v4697 = vadd.f32 %v4685, %v4692
        %v4698 = vadd.f32 %v4686, %v4692
        %v4699 = vadd.f32 %v4687, %v4692
        %v4700 = vadd.f32 %v4688, %v4692
        %v4701 = vpack.c.bf16 %v4694, %v4693
        %v4702 = vpack.c.bf16 %v4696, %v4695
        %v4703 = vpack.c.bf16 %v4698, %v4697
        %v4704 = vpack.c.bf16 %v4700, %v4699
        %v4705 = vld [vmem:[#allocation14] sm:$0xf]
        %v4706 = vld [vmem:[#allocation14 + $0x4] sm:$0xf]
        %v4707 = vld [vmem:[#allocation14 + $0x8] sm:$0xf]
        %v4708 = vld [vmem:[#allocation14 + $0xc] sm:$0xf]
        %v4709 = vld [vmem:[#allocation14 + $0x10] sm:$0xf]
        %v4710 = vld [vmem:[#allocation14 + $0x14] sm:$0xf]
        %v4711 = vld [vmem:[#allocation14 + $0x18] sm:$0xf]
        %v4712 = vld [vmem:[#allocation14 + $0x1c] sm:$0xf]
        %v4713 = vld [vmem:[#allocation14 + $0x20] sm:$0xf]
        %v4714 = vld [vmem:[#allocation14 + $0x24] sm:$0xf]
        %v4715 = vld [vmem:[#allocation14 + $0x28] sm:$0xf]
        %v4716 = vld [vmem:[#allocation14 + $0x2c] sm:$0xf]
        %v4717 = vld [vmem:[#allocation14 + $0x30] sm:$0xf]
        %v4718 = vld [vmem:[#allocation14 + $0x34] sm:$0xf]
        %v4719 = vld [vmem:[#allocation14 + $0x38] sm:$0xf]
        %v4720 = vld [vmem:[#allocation14 + $0x3c] sm:$0xf]
        %v4721 = vlaneseq
        %v4722 = vshrl.u32 %v4721, 7
        %v4723 = vsub.s32 4, %v4722
        %v4724 = vrot.slane %v426, %v4723
        %v4741 = vunpack.c.l.b16 %v4705
        %v4742 = vunpack.c.l.b16 %v4706
        %v4743 = vunpack.c.l.b16 %v4707
        %v4744 = vunpack.c.l.b16 %v4708
        %v4745 = vunpack.c.l.b16 %v4709
        %v4746 = vunpack.c.l.b16 %v4710
        %v4747 = vunpack.c.l.b16 %v4711
        %v4748 = vunpack.c.l.b16 %v4712
        %v4749 = vunpack.c.l.b16 %v4713
        %v4750 = vunpack.c.l.b16 %v4714
        %v4751 = vunpack.c.l.b16 %v4715
        %v4752 = vunpack.c.l.b16 %v4716
        %v4753 = vunpack.c.l.b16 %v4717
        %v4754 = vunpack.c.l.b16 %v4718
        %v4755 = vunpack.c.l.b16 %v4719
        %v4756 = vunpack.c.l.b16 %v4720
        %v4757 = vpack.c.b16 %v4742, %v4741
        %v4758 = vpack.c.b16 %v4744, %v4743
        %v4759 = vpack.c.b16 %v4746, %v4745
        %v4760 = vpack.c.b16 %v4748, %v4747
        %v4761 = vpack.c.b16 %v4750, %v4749
        %v4762 = vpack.c.b16 %v4752, %v4751
        %v4763 = vpack.c.b16 %v4754, %v4753
        %v4764 = vpack.c.b16 %v4756, %v4755
        %4773 = vmatprep.subr.bf16.mxu0 0
        %4774 = vmatpush1.bf16.msra.mxu0 %v4764
        %4775 = vmatprep.subr.bf16.mxu0 0
        %4776 = vmatpush1.bf16.msra.mxu0 %v4763
        %4777 = vmatprep.subr.bf16.mxu0 0
        %4778 = vmatpush1.bf16.msra.mxu0 %v4762
        %4779 = vmatprep.subr.bf16.mxu0 0
        %4780 = vmatpush1.bf16.msra.mxu0 %v4761
        %4781 = vmatprep.subr.bf16.mxu0 0
        %4782 = vmatpush1.bf16.msra.mxu0 %v4760
        %4783 = vmatprep.subr.bf16.mxu0 0
        %4784 = vmatpush1.bf16.msra.mxu0 %v4759
        %4785 = vmatprep.subr.bf16.mxu0 0
        %4786 = vmatpush1.bf16.msra.mxu0 %v4758
        %4787 = vmatprep.subr.bf16.mxu0 0
        %4788 = vmatpush1.bf16.msra.mxu0 %v4757
        %4789 = vmatprep.subr.bf16.mxu0 0
        %4790 = vmatpush2.bf16.msra.mxu0 0
        %4791 = vmatprep.subr.bf16.mxu0 0
        %4792 = vmatpush2.bf16.msra.mxu0 0
        %4793 = vmatprep.subr.bf16.mxu0 0
        %4794 = vmatpush2.bf16.msra.mxu0 0
        %4795 = vmatprep.subr.bf16.mxu0 0
        %4796 = vmatpush2.bf16.msra.mxu0 0
        %4797 = vmatprep.subr.bf16.mxu0 0
        %4798 = vmatpush2.bf16.msra.mxu0 0
        %4799 = vmatprep.subr.bf16.mxu0 0
        %4800 = vmatpush2.bf16.msra.mxu0 0
        %4801 = vmatprep.subr.bf16.mxu0 0
        %4802 = vmatpush2.bf16.msra.mxu0 0
        %4803 = vmatprep.subr.bf16.mxu0 0
        %4804 = vmatpush2.bf16.msra.mxu0 0
        %4805 = vmatprep.mubr.bf16.mxu0 0
        %4806 = vmatmul.mubr.bf16.gmra.mxu0 %v4701
        %v4807 = vpop.f32.mrf.mxu0
        %v4808 = vadd.f32 %v4724, %v4807
        %v4809 = vpop.f32.mrf.mxu0
        %v4810 = vpop.f32.mrf.mxu0
        %v4811 = vadd.f32 %v4724, %v4810
        %v4812 = vpop.f32.mrf.mxu0
        %4813 = vmatprep.mubr.bf16.mxu0 0
        %4814 = vmatmul.mubr.bf16.gmra.mxu0 %v4702
        %v4815 = vpop.f32.mrf.mxu0
        %v4816 = vadd.f32 %v4724, %v4815
        %v4817 = vpop.f32.mrf.mxu0
        %v4818 = vpop.f32.mrf.mxu0
        %v4819 = vadd.f32 %v4724, %v4818
        %v4820 = vpop.f32.mrf.mxu0
        %4821 = vmatprep.mubr.bf16.mxu0 0
        %4822 = vmatmul.mubr.bf16.gmra.mxu0 %v4703
        %v4823 = vpop.f32.mrf.mxu0
        %v4824 = vadd.f32 %v4724, %v4823
        %v4825 = vpop.f32.mrf.mxu0
        %v4826 = vpop.f32.mrf.mxu0
        %v4827 = vadd.f32 %v4724, %v4826
        %v4828 = vpop.f32.mrf.mxu0
        %4829 = vmatprep.mubr.bf16.mxu0 0
        %4830 = vmatmul.mubr.bf16.gmra.mxu0 %v4704
        %v4831 = vpop.f32.mrf.mxu0
        %v4832 = vadd.f32 %v4724, %v4831
        %v4833 = vpop.f32.mrf.mxu0
        %v4834 = vpop.f32.mrf.mxu0
        %v4835 = vadd.f32 %v4724, %v4834
        %v4836 = vpop.f32.mrf.mxu0
        %4837 = vdwg.mxu0
        %v4838 = vmax.f32 %v4808, 0.0
        %v4839 = vmax.f32 %v4811, 0.0
        %v4840 = vmax.f32 %v4816, 0.0
        %v4841 = vmax.f32 %v4819, 0.0
        %v4842 = vmax.f32 %v4824, 0.0
        %v4843 = vmax.f32 %v4827, 0.0
        %v4844 = vmax.f32 %v4832, 0.0
        %v4845 = vmax.f32 %v4835, 0.0
        %v4846 = vadd.f32 %v4693, %v4838
        %v4847 = vadd.f32 %v4694, %v4839
        %v4848 = vadd.f32 %v4695, %v4840
        %v4849 = vadd.f32 %v4696, %v4841
        %v4850 = vadd.f32 %v4697, %v4842
        %v4851 = vadd.f32 %v4698, %v4843
        %v4852 = vadd.f32 %v4699, %v4844
        %v4853 = vadd.f32 %v4700, %v4845
        %4854 = vadd.xlane.f32.xlu0 %v4846
        %v4855 = vpop.xlane.xlu0 %4854
        %4856 = vadd.xlane.f32.xlu0 %v4847
        %v4857 = vpop.xlane.xlu0 %4856
        %4858 = vadd.xlane.f32.xlu0 %v4848
        %v4859 = vpop.xlane.xlu0 %4858
        %4860 = vadd.xlane.f32.xlu0 %v4849
        %v4861 = vpop.xlane.xlu0 %4860
        %4862 = vadd.xlane.f32.xlu0 %v4850
        %v4863 = vpop.xlane.xlu0 %4862
        %4864 = vadd.xlane.f32.xlu0 %v4851
        %v4865 = vpop.xlane.xlu0 %4864
        %4866 = vadd.xlane.f32.xlu0 %v4852
        %v4867 = vpop.xlane.xlu0 %4866
        %4868 = vadd.xlane.f32.xlu0 %v4853
        %v4869 = vpop.xlane.xlu0 %4868
        %v4870 = vmul.f32 %v4855, %v4604
        %v4871 = vmul.f32 %v4857, %v4604
        %v4872 = vmul.f32 %v4859, %v4604
        %v4873 = vmul.f32 %v4861, %v4604
        %v4874 = vmul.f32 %v4863, %v4604
        %v4875 = vmul.f32 %v4865, %v4604
        %v4876 = vmul.f32 %v4867, %v4604
        %v4877 = vmul.f32 %v4869, %v4604
        %v4878 = vsub.f32 %v4846, %v4870
        %v4879 = vsub.f32 %v4847, %v4871
        %v4880 = vsub.f32 %v4848, %v4872
        %v4881 = vsub.f32 %v4849, %v4873
        %v4882 = vsub.f32 %v4850, %v4874
        %v4883 = vsub.f32 %v4851, %v4875
        %v4884 = vsub.f32 %v4852, %v4876
        %v4885 = vsub.f32 %v4853, %v4877
        %v4886 = vmul.f32 %v4878, %v4878
        %v4887 = vmul.f32 %v4879, %v4879
        %v4888 = vmul.f32 %v4880, %v4880
        %v4889 = vmul.f32 %v4881, %v4881
        %v4890 = vmul.f32 %v4882, %v4882
        %v4891 = vmul.f32 %v4883, %v4883
        %v4892 = vmul.f32 %v4884, %v4884
        %v4893 = vmul.f32 %v4885, %v4885
        %4894 = vadd.xlane.f32.xlu0 %v4886
        %v4895 = vpop.xlane.xlu0 %4894
        %4896 = vadd.xlane.f32.xlu0 %v4887
        %v4897 = vpop.xlane.xlu0 %4896
        %4898 = vadd.xlane.f32.xlu0 %v4888
        %v4899 = vpop.xlane.xlu0 %4898
        %4900 = vadd.xlane.f32.xlu0 %v4889
        %v4901 = vpop.xlane.xlu0 %4900
        %4902 = vadd.xlane.f32.xlu0 %v4890
        %v4903 = vpop.xlane.xlu0 %4902
        %4904 = vadd.xlane.f32.xlu0 %v4891
        %v4905 = vpop.xlane.xlu0 %4904
        %4906 = vadd.xlane.f32.xlu0 %v4892
        %v4907 = vpop.xlane.xlu0 %4906
        %4908 = vadd.xlane.f32.xlu0 %v4893
        %v4909 = vpop.xlane.xlu0 %4908
        %v4910 = vmul.f32 %v4895, %v4604
        %v4911 = vmul.f32 %v4897, %v4604
        %v4912 = vmul.f32 %v4899, %v4604
        %v4913 = vmul.f32 %v4901, %v4604
        %v4914 = vmul.f32 %v4903, %v4604
        %v4915 = vmul.f32 %v4905, %v4604
        %v4916 = vmul.f32 %v4907, %v4604
        %v4917 = vmul.f32 %v4909, %v4604
        %v4918 = vadd.f32 %v4910, 1e-05
        %v4919 = vadd.f32 %v4911, 1e-05
        %v4920 = vadd.f32 %v4912, 1e-05
        %v4921 = vadd.f32 %v4913, 1e-05
        %v4922 = vadd.f32 %v4914, 1e-05
        %v4923 = vadd.f32 %v4915, 1e-05
        %v4924 = vadd.f32 %v4916, 1e-05
        %v4925 = vadd.f32 %v4917, 1e-05
        %v4926 = vrsqrt.pop %v4918
        %v4927 = vrsqrt.pop %v4919
        %v4928 = vrsqrt.pop %v4920
        %v4929 = vrsqrt.pop %v4921
        %v4930 = vrsqrt.pop %v4922
        %v4931 = vrsqrt.pop %v4923
        %v4932 = vrsqrt.pop %v4924
        %v4933 = vrsqrt.pop %v4925
        %v4934 = vmul.f32 %v4878, %v4926
        %v4935 = vmul.f32 %v4879, %v4927
        %v4936 = vmul.f32 %v4880, %v4928
        %v4937 = vmul.f32 %v4881, %v4929
        %v4938 = vmul.f32 %v4882, %v4930
        %v4939 = vmul.f32 %v4883, %v4931
        %v4940 = vmul.f32 %v4884, %v4932
        %v4941 = vmul.f32 %v4885, %v4933
        %v4942 = vlaneseq
        %v4943 = vshrl.u32 %v4942, 7
        %v4944 = vsub.s32 7, %v4943
        %v4945 = vrot.slane %v426, %v4944
        %v4946 = vmul.f32 %v4934, %v4945
        %v4947 = vmul.f32 %v4935, %v4945
        %v4948 = vmul.f32 %v4936, %v4945
        %v4949 = vmul.f32 %v4937, %v4945
        %v4950 = vmul.f32 %v4938, %v4945
        %v4951 = vmul.f32 %v4939, %v4945
        %v4952 = vmul.f32 %v4940, %v4945
        %v4953 = vmul.f32 %v4941, %v4945
        %v4954 = vlaneseq
        %v4955 = vshrl.u32 %v4954, 7
        %v4956 = vsub.s32 0, %v4955
        %v4957 = vrot.slane %v427, %v4956
        %v4958 = vadd.f32 %v4946, %v4957
        %v4959 = vadd.f32 %v4947, %v4957
        %v4960 = vadd.f32 %v4948, %v4957
        %v4961 = vadd.f32 %v4949, %v4957
        %v4962 = vadd.f32 %v4950, %v4957
        %v4963 = vadd.f32 %v4951, %v4957
        %v4964 = vadd.f32 %v4952, %v4957
        %v4965 = vadd.f32 %v4953, %v4957
        %4966 = vst [vmem:[%s422] sm:$0xff] %v4958
        %4967 = vst [vmem:[%s422 + $0x8] sm:$0xff] %v4959
        %4968 = vst [vmem:[%s422 + $0x10] sm:$0xff] %v4960
        %4969 = vst [vmem:[%s422 + $0x18] sm:$0xff] %v4961
        %4970 = vst [vmem:[%s422 + $0x20] sm:$0xff] %v4962
        %4971 = vst [vmem:[%s422 + $0x28] sm:$0xff] %v4963
        %4972 = vst [vmem:[%s422 + $0x30] sm:$0xff] %v4964
        %4973 = vst [vmem:[%s422 + $0x38] sm:$0xff] %v4965
        %s4974 = sand.u32 %s210, 1
        %s4975 = scalar_lea.sflag [#allocation5], %s4974
        %s4976 = sand.u32 %s210, 1
        %s4977 = smul.addr %s4976, 64
        %s4978 = scalar_lea.vmem [#allocation17], %s4977
        // Predicated region
        $region85: #{tpu_custom_call.1} parent=51 // pred_check
          %p4979 = pneg %p220
        $region86: #{tpu_custom_call.1} parent=51 // pred_check_branch
          %4981 = sbr.rel (%p4979) target = $region88
        $region87: #{tpu_custom_call.1} parent=51 // pred_region
          %s4982 = smul.u32 8, %s29
          %s4984 = ssub.s32 1024, 1024
          %4985 = vsyncadd %s4975, %s4984
          %s4986 = smul.addr %s4982, 128
          %s4987 = scalar_lea.hbm %s8, %s4986
          %s4988 = sshll.u32 %s4978, 4
          %s4989 = int_to_ptr.vmem [resolvable:$true] %s4988
          %4994 = dma.vmem_to_hbm [thread:$0]  %s4989, 1024, %s4987, %s4975, 128, 128, 8
        $region88: #{tpu_custom_call.1} parent=51 // pred_fallthru
          _
      $region52: #{tpu_custom_call.1} parent=5 // pred_fallthru
        _
      %p4995 = scmp.le.s32.totalorder 2, %s24
      // Predicated region
      $region89: #{tpu_custom_call.1} parent=5 // pred_check
        %p4996 = pneg %p4995
      $region90: #{tpu_custom_call.1} parent=5 // pred_check_branch
        %4998 = sbr.rel (%p4996) target = $region92
      $region91: #{tpu_custom_call.1} parent=5 // pred_region
        %s4999 = ssub.s32 %s24, 2
        // Predicated region
        $region93: #{tpu_custom_call.1} parent=91 // pred_check
          %p5000 = pneg %p226
        $region94: #{tpu_custom_call.1} parent=91 // pred_check_branch
          %5002 = sbr.rel (%p5000) target = $region96
        $region95: #{tpu_custom_call.1} parent=91 // pred_region
          %s5003 = sand.u32 %s211, 1
          %s5004 = scalar_lea.sflag [#allocation5], %s5003
          %s5005 = sand.u32 %s211, 1
          %s5006 = smul.addr %s5005, 64
          %s5007 = scalar_lea.vmem [#allocation17], %s5006
          %5008 = dma.done %s5004, 1024
        $region96: #{tpu_custom_call.1} parent=91 // pred_fallthru
          _
      $region92: #{tpu_custom_call.1} parent=5 // pred_fallthru
        _
    $region6: #{tpu_custom_call.1} parent=1 // loop_footer
      %s28 = sadd.s32 1, %s24
    $region7: #{tpu_custom_call.1} parent=1 // loop_footer_branch
      %23 = sbr.rel target = $region3
    $region8: #{tpu_custom_call.1} parent=1 // loop_exit
      _
    %5009 = vsyncpa [#allocation4], 1
    %s5010 = scalar_lea.sflag [#allocation4], 1
    %5011 = vsyncpa %s5010, 1
    %5012 = vsyncpa [#allocation7], 1
    %5013 = vsyncpa [#allocation10], 1
    %5014 = vsyncpa [#allocation13], 1
    %5015 = vsyncpa [#allocation16], 1
    %5016 = vsyncpa [#allocation5], 1
    %s5017 = scalar_lea.sflag [#allocation5], 1
    %5018 = vsyncpa %s5017, 1

</llo_original>
